<compile_context>
chip_gen: v5e
topology: v5e:2x2
jax: 0.10.0
libtpu: 0.0.40
codegen_flags: <defaults>
</compile_context>

<pallas_src>
import functools

import jax
import jax.numpy as jnp
from jax import lax
from jax.experimental import pallas as pl
from jax.experimental.pallas import tpu as pltpu

_EPS = 1e-5


# --------------------------------------------------------------------------- #
# In-kernel helpers
# --------------------------------------------------------------------------- #
def _conv3x3_valid(xpad, w2d, out_h, out_w):
    """VALID 3x3 conv as one im2col GEMM with a lane-dense (zero-padded) K.

    xpad: (n, out_h+2, out_w+2, cin) f32 value
    w2d : (k_pad, co) matmul-dtype weight slab, rows ordered (kh, kw, ci),
          zero-padded from 9*cin up to k_pad (multiple of 128).
    returns (n, out_h, out_w, co) f32
    """
    n, _, _, cin = xpad.shape
    k_pad, co = w2d.shape
    k = 9 * cin
    taps = [xpad[:, kh:kh + out_h, kw:kw + out_w, :]
            for kh in range(3) for kw in range(3)]
    if k_pad > k:  # keep the im2col slab lane-dense (last dim multiple of 128)
        taps.append(jnp.zeros((n, out_h, out_w, k_pad - k), xpad.dtype))
    patches = jnp.concatenate(taps, axis=-1)                 # (n, oh, ow, k_pad)
    lhs = patches.reshape(n * out_h * out_w, k_pad).astype(w2d.dtype)
    acc = jnp.dot(lhs, w2d, preferred_element_type=jnp.float32)
    return acc.reshape(n, out_h, out_w, co)


def _conv1_stats_kernel(xp_ref, w1_ref, acc1_ref, s_ref, q_ref):
    """Pass 1: conv1 over the (H+2, W+2) extended region + BN1 partial sums."""
    _, hp4, wp4, _ = xp_ref.shape
    h, w = hp4 - 4, wp4 - 4
    c = w1_ref.shape[1]
    acc1 = _conv3x3_valid(xp_ref[...], w1_ref[...], h + 2, w + 2)
    acc1_ref[...] = acc1
    # BN1 stats from the interior only (halo ring is not a valid conv output).
    interior = acc1[:, 1:h + 1, 1:w + 1, :]
    s = jnp.sum(interior, axis=(0, 1, 2), keepdims=True)
    q = jnp.sum(interior * interior, axis=(0, 1, 2), keepdims=True)
    s_ref[...] = s.reshape(1, 1, c)
    q_ref[...] = q.reshape(1, 1, c)


def _bn1_conv2_stats_kernel(acc1_ref, w2_ref, sc1_ref, sh1_ref,
                            acc2_ref, s_ref, q_ref):
    """Pass 2: bn1 + relu, re-zero halo ring, conv2, BN2 partial sums."""
    _, hp2, wp2, c = acc1_ref.shape
    h, w = hp2 - 2, wp2 - 2
    out1 = jnp.maximum(acc1_ref[...] * sc1_ref[...] + sh1_ref[...], 0.0)
    # In-kernel halo mask: iota compares (pure VPU), no extra mask input.
    hi = lax.broadcasted_iota(jnp.int32, out1.shape, 1)
    wi = lax.broadcasted_iota(jnp.int32, out1.shape, 2)
    interior = (hi >= 1) & (hi <= h) & (wi >= 1) & (wi <= w)
    out1 = jnp.where(interior, out1, 0.0)  # conv2 sees its zero padding in place
    acc2 = _conv3x3_valid(out1, w2_ref[...], h, w)
    acc2_ref[...] = acc2
    s = jnp.sum(acc2, axis=(0, 1, 2), keepdims=True)
    q = jnp.sum(acc2 * acc2, axis=(0, 1, 2), keepdims=True)
    s_ref[...] = s.reshape(1, 1, c)
    q_ref[...] = q.reshape(1, 1, c)


def _bn2_residual_kernel(acc2_ref, x_ref, sc2_ref, sh2_ref, o_ref, *,
                         fold_lanes):
    """Pass 3: bn2 + residual add + relu (+ optional lane-dense output fold)."""
    n, h, w, c = acc2_ref.shape
    y = jnp.maximum(acc2_ref[...] * sc2_ref[...] + sh2_ref[...] + x_ref[...],
                    0.0)
    if fold_lanes:
        o_ref[...] = y.reshape(n, h, w * c).astype(o_ref.dtype)
    else:
        o_ref[...] = y.astype(o_ref.dtype)


# --------------------------------------------------------------------------- #
# Wrapper
# --------------------------------------------------------------------------- #
def _fold_bn(s_part, q_part, count, gamma, beta):
    """Reduce per-tile partial sums and fold training-mode BN to scale/shift."""
    c = s_part.shape[-1]
    s = jnp.sum(s_part, axis=(0, 1))
    q = jnp.sum(q_part, axis=(0, 1))
    mean = s / count
    var = jnp.maximum(q / count - mean * mean, 0.0)
    scale = gamma.astype(jnp.float32).reshape(-1) * lax.rsqrt(var + _EPS)
    shift = beta.astype(jnp.float32).reshape(-1) - mean * scale
    return scale.reshape(1, 1, 1, c), shift.reshape(1, 1, 1, c)


def _cparams(est_bytes):
    """Parallel batch axis (v7x: 2 TCs) + explicit scoped-VMEM limit."""
    # 64 MiB cap keeps the request v7x-safe; raise on v5e/v6e (128 MiB) if
    # tiles grow.
    limit = int(min(max(3 * est_bytes + (8 << 20), 16 << 20), 64 << 20))
    return pltpu.CompilerParams(dimension_semantics=("parallel",),
                                vmem_limit_bytes=limit)


def basic_block(x_nchw, w1_oihw, w2_oihw, g1, b1, g2, b2,
                matmul_dtype=jnp.bfloat16):
    """x_nchw: (N, C, H, W) float32 (PyTorch layout). Returns (N, C, H, W)."""
    x = jnp.transpose(x_nchw, (0, 2, 3, 1)).astype(jnp.float32)      # NHWC
    N, H, W, Cin = x.shape
    C = w1_oihw.shape[0]
    assert Cin == C, "stride=1 / downsample=None BasicBlock needs inplanes == planes"

    # Pad by 2: conv1 is evaluated over an (H+2, W+2) extended region so its
    # output already carries conv2's halo (no padded intermediate rebuild).
    xp2 = jnp.pad(x, ((0, 0), (2, 2), (2, 2), (0, 0)))

    # OIHW -> HWIO -> im2col weight slab (k_pad, C), K zero-padded to 128-mult.
    k_raw = 9 * Cin
    k_pad = max(128, ((k_raw + 127) // 128) * 128)

    def slab(w_oihw):
        w2d = jnp.transpose(w_oihw, (2, 3, 1, 0)).reshape(k_raw, C)
        return jnp.pad(w2d, ((0, k_pad - k_raw), (0, 0))).astype(matmul_dtype)

    w1_2d, w2_2d = slab(w1_oihw), slab(w2_oihw)

    f32b = 4
    mmb = jnp.dtype(matmul_dtype).itemsize
    grid = (N,)                              # one batch element per grid step
    cnt = float(N * H * W)

    # ------------------- pass 1: conv1 + BN1 partial sums ------------------ #
    est1 = (2 * (H + 4) * (W + 4) * Cin * f32b
            + 2 * (H + 2) * (W + 2) * C * f32b
            + (H + 2) * (W + 2) * k_pad * (f32b + mmb)
            + k_pad * C * mmb)
    acc1, s1, q1 = pl.pallas_call(
        _conv1_stats_kernel,
        grid=grid,
        in_specs=[
            pl.BlockSpec((1, H + 4, W + 4, Cin), lambda n: (n, 0, 0, 0)),
            pl.BlockSpec((k_pad, C), lambda n: (0, 0)),
        ],
        out_specs=(
            pl.BlockSpec((1, H + 2, W + 2, C), lambda n: (n, 0, 0, 0)),
            pl.BlockSpec((1, 1, C), lambda n: (n, 0, 0)),
            pl.BlockSpec((1, 1, C), lambda n: (n, 0, 0)),
        ),
        out_shape=(
            jax.ShapeDtypeStruct((N, H + 2, W + 2, C), jnp.float32),
            jax.ShapeDtypeStruct((N, 1, C), jnp.float32),
            jax.ShapeDtypeStruct((N, 1, C), jnp.float32),
        ),
        compiler_params=_cparams(est1),
    )(xp2, w1_2d)
    sc1, sh1 = _fold_bn(s1, q1, cnt, g1, b1)

    # --------- pass 2: bn1 + relu + conv2 + BN2 partial sums --------------- #
    est2 = (2 * (H + 2) * (W + 2) * C * f32b
            + 2 * H * W * C * f32b
            + H * W * k_pad * (f32b + mmb)
            + k_pad * C * mmb)
    acc2, s2, q2 = pl.pallas_call(
        _bn1_conv2_stats_kernel,
        grid=grid,
        in_specs=[
            pl.BlockSpec((1, H + 2, W + 2, C), lambda n: (n, 0, 0, 0)),
            pl.BlockSpec((k_pad, C), lambda n: (0, 0)),
            pl.BlockSpec((1, 1, 1, C), lambda n: (0, 0, 0, 0)),
            pl.BlockSpec((1, 1, 1, C), lambda n: (0, 0, 0, 0)),
        ],
        out_specs=(
            pl.BlockSpec((1, H, W, C), lambda n: (n, 0, 0, 0)),
            pl.BlockSpec((1, 1, C), lambda n: (n, 0, 0)),
            pl.BlockSpec((1, 1, C), lambda n: (n, 0, 0)),
        ),
        out_shape=(
            jax.ShapeDtypeStruct((N, H, W, C), jnp.float32),
            jax.ShapeDtypeStruct((N, 1, C), jnp.float32),
            jax.ShapeDtypeStruct((N, 1, C), jnp.float32),
        ),
        compiler_params=_cparams(est2),
    )(acc1, w2_2d, sc1, sh1)
    sc2, sh2 = _fold_bn(s2, q2, cnt, g2, b2)

    # ------------------- pass 3: bn2 + residual + relu --------------------- #
    # Lane-dense output fold only when it helps (C < 128 and W*C lane-aligned).
    fold = (C < 128) and ((W * C) % 128 == 0)
    out_shape = (N, H, W * C) if fold else (N, H, W, C)
    out_block = (1, H, W * C) if fold else (1, H, W, C)
    out_idx = (lambda n: (n, 0, 0)) if fold else (lambda n: (n, 0, 0, 0))
    est3 = 6 * H * W * C * f32b
    out = pl.pallas_call(
        functools.partial(_bn2_residual_kernel, fold_lanes=fold),
        grid=grid,
        in_specs=[
            pl.BlockSpec((1, H, W, C), lambda n: (n, 0, 0, 0)),
            pl.BlockSpec((1, H, W, C), lambda n: (n, 0, 0, 0)),
            pl.BlockSpec((1, 1, 1, C), lambda n: (0, 0, 0, 0)),
            pl.BlockSpec((1, 1, 1, C), lambda n: (0, 0, 0, 0)),
        ],
        out_specs=pl.BlockSpec(out_block, out_idx),
        out_shape=jax.ShapeDtypeStruct(out_shape, x.dtype),
        compiler_params=_cparams(est3),
    )(acc2, x, sc2, sh2)

    out = out.reshape(N, H, W, C)
    return jnp.transpose(out, (0, 3, 1, 2))                      # back to NCHW


# --------------------------------------------------------------------------- #
# Pure-JAX reference (for correctness checking)
# --------------------------------------------------------------------------- #
def _reference(x_nchw, w1, w2, g1, b1, g2, b2):
    def conv3x3(x, w):  # x NCHW, w OIHW
        return lax.conv_general_dilated(
            x, w, window_strides=(1, 1), padding=((1, 1), (1, 1)),
            dimension_numbers=('NCHW', 'OIHW', 'NCHW'))

    def bn(x, g, b):
        m = jnp.mean(x, axis=(0, 2, 3), keepdims=True)
        v = jnp.mean((x - m) ** 2, axis=(0, 2, 3), keepdims=True)
        return ((x - m) * lax.rsqrt(v + _EPS) * g.reshape(1, -1, 1, 1)
                + b.reshape(1, -1, 1, 1))

    out = jax.nn.relu(bn(conv3x3(x_nchw, w1), g1, b1))
    out = bn(conv3x3(out, w2), g2, b2)
    return jax.nn.relu(out + x_nchw)


if __name__ == "__main__":
    key = jax.random.PRNGKey(0)
    N, C, H, W = 2, 8, 16, 16          # inplanes == planes == 8

    k_x, k_w1, k_w2, k_g1, k_b1, k_g2, k_b2 = jax.random.split(key, 7)
    x = jax.random.normal(k_x, (N, C, H, W), jnp.float32)
    fan_in = C * 3 * 3
    w1 = jax.random.normal(k_w1, (C, C, 3, 3), jnp.float32) * (2.0 / fan_in) ** 0.5
    w2 = jax.random.normal(k_w2, (C, C, 3, 3), jnp.float32) * (2.0 / fan_in) ** 0.5
    g1 = 1.0 + 0.1 * jax.random.normal(k_g1, (C,), jnp.float32)
    b1 = 0.1 * jax.random.normal(k_b1, (C,), jnp.float32)
    g2 = 1.0 + 0.1 * jax.random.normal(k_g2, (C,), jnp.float32)
    b2 = 0.1 * jax.random.normal(k_b2, (C,), jnp.float32)

    ref = _reference(x, w1, w2, g1, b1, g2, b2)

    # default path: bf16 MXU operands with f32 accumulation
    out_bf16 = jax.block_until_ready(basic_block(x, w1, w2, g1, b1, g2, b2))
    assert out_bf16.shape == ref.shape == (N, C, H, W)
    err_bf16 = float(jnp.max(jnp.abs(out_bf16 - ref)))
    assert err_bf16 < 5e-2, f"bf16 path max abs err {err_bf16}"

    # f32-operand path (same kernels, different matmul dtype)
    out_f32 = jax.block_until_ready(
        basic_block(x, w1, w2, g1, b1, g2, b2, matmul_dtype=jnp.float32))
    err_f32 = float(jnp.max(jnp.abs(out_f32 - ref)))
    assert err_f32 < 5e-2, f"f32 path max abs err {err_f32}"

    print("KERNEL_OK")
</pallas_src>

<mosaic_0001>
module attributes {stable_mosaic.version = 11 : i64} {
  func.func @_conv1_stats_kernel(%arg0: i32, %arg1: memref<1x20x20x8xf32, #tpu.memory_space<vmem>>, %arg2: memref<128x8xbf16, #tpu.memory_space<vmem>>, %arg3: memref<1x18x18x8xf32, #tpu.memory_space<vmem>>, %arg4: memref<1x1x8xf32, #tpu.memory_space<vmem>>, %arg5: memref<1x1x8xf32, #tpu.memory_space<vmem>>) attributes {dimension_semantics = [#tpu.dimension_semantics<parallel>], iteration_bounds = array<i64: 2>, scalar_prefetch = 0 : i64, scratch_operands = 0 : i64, tpu.core_type = #tpu.core_type<tc>, window_params = [{transform_indices = @transform_0, window_bounds = array<i64: 1, 20, 20, 8>}, {pipeline_mode = #tpu.pipeline_mode<synchronous>, transform_indices = @transform_1, window_bounds = array<i64: 128, 8>}, {transform_indices = @transform_2, window_bounds = array<i64: 1, 18, 18, 8>}, {transform_indices = @transform_3, window_bounds = array<i64: 1, 1, 8>}, {transform_indices = @transform_4, window_bounds = array<i64: 1, 1, 8>}]} {
    %c0 = arith.constant 0 : index
    %c0_0 = arith.constant 0 : index
    %c0_1 = arith.constant 0 : index
    %c0_2 = arith.constant 0 : index
    %0 = vector.load %arg1[%c0, %c0_0, %c0_1, %c0_2] : memref<1x20x20x8xf32, #tpu.memory_space<vmem>>, vector<1x20x20x8xf32>
    %c0_3 = arith.constant 0 : index
    %c0_4 = arith.constant 0 : index
    %1 = vector.load %arg2[%c0_3, %c0_4] : memref<128x8xbf16, #tpu.memory_space<vmem>>, vector<128x8xbf16>
    %2 = vector.extract_strided_slice %0 {offsets = [0, 0, 0, 0], sizes = [1, 18, 18, 8], strides = [1, 1, 1, 1]} : vector<1x20x20x8xf32> to vector<1x18x18x8xf32>
    %3 = vector.extract_strided_slice %0 {offsets = [0, 0, 1, 0], sizes = [1, 18, 18, 8], strides = [1, 1, 1, 1]} : vector<1x20x20x8xf32> to vector<1x18x18x8xf32>
    %4 = vector.extract_strided_slice %0 {offsets = [0, 0, 2, 0], sizes = [1, 18, 18, 8], strides = [1, 1, 1, 1]} : vector<1x20x20x8xf32> to vector<1x18x18x8xf32>
    %5 = vector.extract_strided_slice %0 {offsets = [0, 1, 0, 0], sizes = [1, 18, 18, 8], strides = [1, 1, 1, 1]} : vector<1x20x20x8xf32> to vector<1x18x18x8xf32>
    %6 = vector.extract_strided_slice %0 {offsets = [0, 1, 1, 0], sizes = [1, 18, 18, 8], strides = [1, 1, 1, 1]} : vector<1x20x20x8xf32> to vector<1x18x18x8xf32>
    %7 = vector.extract_strided_slice %0 {offsets = [0, 1, 2, 0], sizes = [1, 18, 18, 8], strides = [1, 1, 1, 1]} : vector<1x20x20x8xf32> to vector<1x18x18x8xf32>
    %8 = vector.extract_strided_slice %0 {offsets = [0, 2, 0, 0], sizes = [1, 18, 18, 8], strides = [1, 1, 1, 1]} : vector<1x20x20x8xf32> to vector<1x18x18x8xf32>
    %9 = vector.extract_strided_slice %0 {offsets = [0, 2, 1, 0], sizes = [1, 18, 18, 8], strides = [1, 1, 1, 1]} : vector<1x20x20x8xf32> to vector<1x18x18x8xf32>
    %10 = vector.extract_strided_slice %0 {offsets = [0, 2, 2, 0], sizes = [1, 18, 18, 8], strides = [1, 1, 1, 1]} : vector<1x20x20x8xf32> to vector<1x18x18x8xf32>
    %cst = arith.constant 0.000000e+00 : f32
    %11 = vector.broadcast %cst : f32 to vector<1x18x18x56xf32>
    %12 = tpu.concatenate %2, %3, %4, %5, %6, %7, %8, %9, %10, %11 in 3 : vector<1x18x18x8xf32>, vector<1x18x18x8xf32>, vector<1x18x18x8xf32>, vector<1x18x18x8xf32>, vector<1x18x18x8xf32>, vector<1x18x18x8xf32>, vector<1x18x18x8xf32>, vector<1x18x18x8xf32>, vector<1x18x18x8xf32>, vector<1x18x18x56xf32> -> vector<1x18x18x128xf32>
    %13 = vector.shape_cast %12 : vector<1x18x18x128xf32> to vector<324x128xf32>
    %14 = arith.truncf %13 : vector<324x128xf32> to vector<324x128xbf16>
    %cst_5 = arith.constant dense<0.000000e+00> : vector<324x8xf32>
    %15 = tpu.matmul %14, %1, %cst_5 {dimension_numbers = #tpu.dot_dimension_numbers<[1], [0], [0], [1], [0, 0, 1, 1], [], []>} : vector<324x128xbf16>, vector<128x8xbf16>, vector<324x8xf32> -> vector<324x8xf32>
    %16 = vector.shape_cast %15 : vector<324x8xf32> to vector<1x18x18x8xf32>
    %c0_6 = arith.constant 0 : index
    %c0_7 = arith.constant 0 : index
    %c0_8 = arith.constant 0 : index
    %c0_9 = arith.constant 0 : index
    %17 = vector.load %arg3[%c0_6, %c0_7, %c0_8, %c0_9] : memref<1x18x18x8xf32, #tpu.memory_space<vmem>>, vector<1x18x18x8xf32>
    tpu.vector_store %arg3[%c0_6, %c0_7, %c0_8, %c0_9], %16 {strides = array<i32>} : memref<1x18x18x8xf32, #tpu.memory_space<vmem>>, vector<1x18x18x8xf32>,
    %18 = vector.extract_strided_slice %16 {offsets = [0, 1, 1, 0], sizes = [1, 16, 16, 8], strides = [1, 1, 1, 1]} : vector<1x18x18x8xf32> to vector<1x16x16x8xf32>
    %cst_10 = arith.constant dense<0.000000e+00> : vector<8xf32>
    %19 = vector.multi_reduction <add>, %18, %cst_10 [0, 1, 2] : vector<1x16x16x8xf32> to vector<8xf32>
    %20 = vector.shape_cast %19 : vector<8xf32> to vector<1x1x1x8xf32>
    %21 = arith.mulf %18, %18 : vector<1x16x16x8xf32>
    %cst_11 = arith.constant dense<0.000000e+00> : vector<8xf32>
    %22 = vector.multi_reduction <add>, %21, %cst_11 [0, 1, 2] : vector<1x16x16x8xf32> to vector<8xf32>
    %23 = vector.shape_cast %22 : vector<8xf32> to vector<1x1x1x8xf32>
    %24 = vector.shape_cast %20 : vector<1x1x1x8xf32> to vector<1x1x8xf32>
    %c0_12 = arith.constant 0 : index
    %c0_13 = arith.constant 0 : index
    %c0_14 = arith.constant 0 : index
    %25 = vector.load %arg4[%c0_12, %c0_13, %c0_14] : memref<1x1x8xf32, #tpu.memory_space<vmem>>, vector<1x1x8xf32>
    tpu.vector_store %arg4[%c0_12, %c0_13, %c0_14], %24 {strides = array<i32>} : memref<1x1x8xf32, #tpu.memory_space<vmem>>, vector<1x1x8xf32>,
    %26 = vector.shape_cast %23 : vector<1x1x1x8xf32> to vector<1x1x8xf32>
    %c0_15 = arith.constant 0 : index
    %c0_16 = arith.constant 0 : index
    %c0_17 = arith.constant 0 : index
    %27 = vector.load %arg5[%c0_15, %c0_16, %c0_17] : memref<1x1x8xf32, #tpu.memory_space<vmem>>, vector<1x1x8xf32>
    tpu.vector_store %arg5[%c0_15, %c0_16, %c0_17], %26 {strides = array<i32>} : memref<1x1x8xf32, #tpu.memory_space<vmem>>, vector<1x1x8xf32>,
    return
  }
  func.func @transform_0(%arg0: i32) -> (i32, i32, i32, i32) {
    %c0_i32 = arith.constant 0 : i32
    %c0_i32_0 = arith.constant 0 : i32
    %c0_i32_1 = arith.constant 0 : i32
    %c0_i32_2 = arith.constant 0 : i32
    return %arg0, %c0_i32, %c0_i32_0, %c0_i32_1 : i32, i32, i32, i32
  }
  func.func @transform_1(%arg0: i32) -> (i32, i32) {
    %c0_i32 = arith.constant 0 : i32
    %c0_i32_0 = arith.constant 0 : i32
    %c0_i32_1 = arith.constant 0 : i32
    return %c0_i32, %c0_i32_0 : i32, i32
  }
  func.func @transform_2(%arg0: i32) -> (i32, i32, i32, i32) {
    %c0_i32 = arith.constant 0 : i32
    %c0_i32_0 = arith.constant 0 : i32
    %c0_i32_1 = arith.constant 0 : i32
    %c0_i32_2 = arith.constant 0 : i32
    return %arg0, %c0_i32, %c0_i32_0, %c0_i32_1 : i32, i32, i32, i32
  }
  func.func @transform_3(%arg0: i32) -> (i32, i32, i32) {
    %c0_i32 = arith.constant 0 : i32
    %c0_i32_0 = arith.constant 0 : i32
    %c0_i32_1 = arith.constant 0 : i32
    return %arg0, %c0_i32, %c0_i32_0 : i32, i32, i32
  }
  func.func @transform_4(%arg0: i32) -> (i32, i32, i32) {
    %c0_i32 = arith.constant 0 : i32
    %c0_i32_0 = arith.constant 0 : i32
    %c0_i32_1 = arith.constant 0 : i32
    return %arg0, %c0_i32, %c0_i32_0 : i32, i32, i32
  }
}

</mosaic_0001>

<llo_original>
// kernel: tpu_custom_call.1
$region0: #{tpu_custom_call.1}
  #allocation0 [shape = 'u32[]', space=smem, size = 0x4, offset = 0x4, fixed_abs, tag = 'smem constant byte address 0x4 - core index']
  #allocation1 [shape = 'u32[72,128]{1,0:T(1,128)}', space=vmem, size = 0x9000, scoped, tag = 'internal scratch']
  %s0 = inlined_call_operand.vmem [shape: f32[2,20,20,8], index: 0, kind: input, shape index: {}]
  %s1 = inlined_call_operand.vmem [shape: bf16[128,8], index: 1, kind: input, shape index: {}]
  %s2 = inlined_call_operand.vmem [shape: f32[2,18,18,8], index: 2, kind: output, shape index: {0}]
  %s3 = inlined_call_operand.hbm [shape: f32[2,1,8], index: 3, kind: output, shape index: {1}]
  %s4 = inlined_call_operand.hbm [shape: f32[2,1,8], index: 4, kind: output, shape index: {2}]
  %5 = xla_tuple %s2, %s3, %s4
  %s6 = sld [smem:[#allocation0]]
  $region57: #{tpu_custom_call.1} parent=0
    _
  %s8 = ssub.s32 1, %s6
  %s9 = scalar_select 0, %s8, %s6
  $region1: #{tpu_custom_call.1} parent=0
    #allocation2 [shape = 'u8[1024]{0}', space=vmem, size = 0x400, scoped, tag = 'output window, operand 1']
    #allocation3 [shape = 's32[2]{0}', space=sflag, size = 0x8, scoped, tag = 'scoped memory for tpu_custom_call.1']
    #allocation4 [shape = 'u8[1024]{0}', space=vmem, size = 0x400, scoped, tag = 'output window, operand 2']
    #allocation5 [shape = 's32[2]{0}', space=sflag, size = 0x8, scoped, tag = 'scoped memory for tpu_custom_call.1']
    %10 = vsyncpa [#allocation3], 0
    %s11 = scalar_lea.sflag [#allocation3], 1
    %12 = vsyncpa %s11, 0
    %13 = vsyncpa [#allocation5], 0
    %s14 = scalar_lea.sflag [#allocation5], 1
    %15 = vsyncpa %s14, 0
    loop: start=0, step=1, limit=4
    $region2: #{tpu_custom_call.1} parent=1 // loop_pre_header
      _
    $region3: #{tpu_custom_call.1} parent=1 // loop_header
      %s17 = sphi 0, %s21
      %p18 = scmp.ge.s32.totalorder %s17, 4
      %s27 = sphi 0, %s29
      %s30 = sphi 0, %s27
      %s31 = sphi 0, %s30
      %s47 = sphi 0, %s31
      %s51 = sphi 0, %s51
      %s53 = sphi 0, %s51
      %s54 = sphi 0, %s53
      %s68 = sphi 0, %s54
      %s74 = sphi 0, %s76
      %s77 = sphi 0, %s74
      %s78 = sphi 0, %s77
      %s94 = sphi 0, %s78
      %s100 = sphi 0, %s102
      %s103 = sphi 0, %s100
      %s104 = sphi 0, %s103
      %s120 = sphi 0, %s104
      %s126 = sphi 0, %s128
      %s129 = sphi 0, %s126
      %s130 = sphi 0, %s129
      %s146 = sphi 0, %s130
    $region4: #{tpu_custom_call.1} parent=1 // loop_header_branch
      %20 = sbr.rel (%p18) target = $region8
    $region5: #{tpu_custom_call.1} parent=1 // loop_body
      %s22 = ssub.s32 %s17, 1
      %s23 = ssub.s32 %s17, 2
      %s24 = sadd.s32 %s17, 1
      %s25 = ssub.s32 %s17, %s24
      %p26 = scmp.eq.s32.totalorder %s25, 0
      %s28 = sadd.s32 %s27, 1
      %s29 = scalar_select %p26, %s27, %s28
      %p32 = pneg %p26
      %p33 = scmp.eq.s32.totalorder %s17, 1
      %p34 = por %p32, %p33
      %p35 = scmp.ne.s32.totalorder %s27, %s30
      %p36 = scmp.eq.s32.totalorder %s17, 0
      %p37 = por %p35, %p36
      %p38 = scmp.ne.s32.totalorder %s27, %s30
      %p39 = scmp.eq.s32.totalorder %s22, 1
      %p40 = por %p38, %p39
      %p41 = scmp.ne.s32.totalorder %s30, %s31
      %p42 = scmp.eq.s32.totalorder %s22, 0
      %p43 = por %p41, %p42
      %p44 = scmp.ne.s32.totalorder %s30, %s31
      %p45 = scmp.eq.s32.totalorder %s23, 1
      %p46 = por %p44, %p45
      %p48 = scmp.ne.s32.totalorder %s31, %s47
      %p49 = scmp.eq.s32.totalorder %s23, 0
      %p50 = por %p48, %p49
      %s52 = sadd.s32 %s51, 1
      %p55 = scmp.eq.s32.totalorder %s17, 1
      %p56 = scmp.ne.s32.totalorder %s51, %s53
      %p57 = scmp.eq.s32.totalorder %s17, 0
      %p58 = por %p56, %p57
      %p59 = scmp.ne.s32.totalorder %s51, %s53
      %p60 = scmp.eq.s32.totalorder %s22, 1
      %p61 = por %p59, %p60
      %p62 = scmp.ne.s32.totalorder %s53, %s54
      %p63 = scmp.eq.s32.totalorder %s22, 0
      %p64 = por %p62, %p63
      %p65 = scmp.ne.s32.totalorder %s53, %s54
      %p66 = scmp.eq.s32.totalorder %s23, 1
      %p67 = por %p65, %p66
      %p69 = scmp.ne.s32.totalorder %s54, %s68
      %p70 = scmp.eq.s32.totalorder %s23, 0
      %p71 = por %p69, %p70
      %s72 = ssub.s32 %s17, %s24
      %p73 = scmp.eq.s32.totalorder %s72, 0
      %s75 = sadd.s32 %s74, 1
      %s76 = scalar_select %p73, %s74, %s75
      %p79 = pneg %p73
      %p80 = scmp.eq.s32.totalorder %s17, 1
      %p81 = por %p79, %p80
      %p82 = scmp.ne.s32.totalorder %s74, %s77
      %p83 = scmp.eq.s32.totalorder %s17, 0
      %p84 = por %p82, %p83
      %p85 = scmp.ne.s32.totalorder %s74, %s77
      %p86 = scmp.eq.s32.totalorder %s22, 1
      %p87 = por %p85, %p86
      %p88 = scmp.ne.s32.totalorder %s77, %s78
      %p89 = scmp.eq.s32.totalorder %s22, 0
      %p90 = por %p88, %p89
      %p91 = scmp.ne.s32.totalorder %s77, %s78
      %p92 = scmp.eq.s32.totalorder %s23, 1
      %p93 = por %p91, %p92
      %p95 = scmp.ne.s32.totalorder %s78, %s94
      %p96 = scmp.eq.s32.totalorder %s23, 0
      %p97 = por %p95, %p96
      %s98 = ssub.s32 %s17, %s24
      %p99 = scmp.eq.s32.totalorder %s98, 0
      %s101 = sadd.s32 %s100, 1
      %s102 = scalar_select %p99, %s100, %s101
      %p105 = pneg %p99
      %p106 = scmp.eq.s32.totalorder %s17, 1
      %p107 = por %p105, %p106
      %p108 = scmp.ne.s32.totalorder %s100, %s103
      %p109 = scmp.eq.s32.totalorder %s17, 0
      %p110 = por %p108, %p109
      %p111 = scmp.ne.s32.totalorder %s100, %s103
      %p112 = scmp.eq.s32.totalorder %s22, 1
      %p113 = por %p111, %p112
      %p114 = scmp.ne.s32.totalorder %s103, %s104
      %p115 = scmp.eq.s32.totalorder %s22, 0
      %p116 = por %p114, %p115
      %p117 = scmp.ne.s32.totalorder %s103, %s104
      %p118 = scmp.eq.s32.totalorder %s23, 1
      %p119 = por %p117, %p118
      %p121 = scmp.ne.s32.totalorder %s104, %s120
      %p122 = scmp.eq.s32.totalorder %s23, 0
      %p123 = por %p121, %p122
      %s124 = ssub.s32 %s17, %s24
      %p125 = scmp.eq.s32.totalorder %s124, 0
      %s127 = sadd.s32 %s126, 1
      %s128 = scalar_select %p125, %s126, %s127
      %p131 = pneg %p125
      %p132 = scmp.eq.s32.totalorder %s17, 1
      %p133 = por %p131, %p132
      %p134 = scmp.ne.s32.totalorder %s126, %s129
      %p135 = scmp.eq.s32.totalorder %s17, 0
      %p136 = por %p134, %p135
      %p137 = scmp.ne.s32.totalorder %s126, %s129
      %p138 = scmp.eq.s32.totalorder %s22, 1
      %p139 = por %p137, %p138
      %p140 = scmp.ne.s32.totalorder %s129, %s130
      %p141 = scmp.eq.s32.totalorder %s22, 0
      %p142 = por %p140, %p141
      %p143 = scmp.ne.s32.totalorder %s129, %s130
      %p144 = scmp.eq.s32.totalorder %s23, 1
      %p145 = por %p143, %p144
      %p147 = scmp.ne.s32.totalorder %s130, %s146
      %p148 = scmp.eq.s32.totalorder %s23, 0
      %p149 = por %p147, %p148
      %p150 = scmp.le.s32.totalorder 1, %s17
      %p151 = scmp.lt.s32.totalorder %s17, 3
      %p152 = pnand %p150, %p151
      %p153 = pneg %p152
      // Predicated region
      $region9: #{tpu_custom_call.1} parent=5 // pred_check
        _
      $region10: #{tpu_custom_call.1} parent=5 // pred_check_branch
        %155 = sbr.rel (%p152) target = $region12
      $region11: #{tpu_custom_call.1} parent=5 // pred_region
        %s156 = ssub.s32 %s17, 1
        // Predicated region
        $region13: #{tpu_custom_call.1} parent=11 // pred_check
          %p157 = pneg %p64
        $region14: #{tpu_custom_call.1} parent=11 // pred_check_branch
          %159 = sbr.rel (%p157) target = $region16
        $region15: #{tpu_custom_call.1} parent=11 // pred_region
          _
        $region16: #{tpu_custom_call.1} parent=11 // pred_fallthru
          _
      $region12: #{tpu_custom_call.1} parent=5 // pred_fallthru
        _
      %p160 = scmp.lt.s32.totalorder %s17, 2
      // Predicated region
      $region17: #{tpu_custom_call.1} parent=5 // pred_check
        %p161 = pneg %p160
      $region18: #{tpu_custom_call.1} parent=5 // pred_check_branch
        %163 = sbr.rel (%p161) target = $region20
      $region19: #{tpu_custom_call.1} parent=5 // pred_region
        // Predicated region
        $region21: #{tpu_custom_call.1} parent=19 // pred_check
          %p164 = pneg %p37
        $region22: #{tpu_custom_call.1} parent=19 // pred_check_branch
          %166 = sbr.rel (%p164) target = $region24
        $region23: #{tpu_custom_call.1} parent=19 // pred_region
          %p167 = scmp.lt.s32.totalorder %s17, 1
          %s168 = scalar_select %p167, %s17, 1
          %s169 = smul.addr %s168, 60
          %s170 = smul.addr %s169, 8
          %s171 = scalar_lea.vmem %s0, %s170
        $region24: #{tpu_custom_call.1} parent=19 // pred_fallthru
          _
      $region20: #{tpu_custom_call.1} parent=5 // pred_fallthru
        _
      %p172 = scmp.le.s32.totalorder 1, %s17
      %p173 = scmp.lt.s32.totalorder %s17, 3
      %p174 = pnand %p172, %p173
      %p175 = pneg %p174
      // Predicated region
      $region25: #{tpu_custom_call.1} parent=5 // pred_check
        _
      $region26: #{tpu_custom_call.1} parent=5 // pred_check_branch
        %177 = sbr.rel (%p174) target = $region28
      $region27: #{tpu_custom_call.1} parent=5 // pred_region
        %s178 = ssub.s32 %s17, 1
        %p179 = scmp.lt.s32.totalorder %s22, 1
        %s180 = scalar_select %p179, %s22, 1
        %s181 = smul.addr %s180, 60
        %s182 = smul.addr %s181, 8
        %s183 = scalar_lea.vmem %s0, %s182
        %p184 = pneg %p43
        %p185 = pneg %p40
        %p186 = pneg %p64
        %p187 = pneg %p61
        %p188 = pneg %p90
        %p189 = pneg %p87
        %p190 = scmp.lt.s32.totalorder %s22, 1
        %s191 = scalar_select %p190, %s22, 1
        %s192 = smul.addr %s191, 54
        %s193 = smul.addr %s192, 8
        %s194 = scalar_lea.vmem %s2, %s193
        %p195 = pneg %p116
        %p196 = pneg %p113
        %s197 = sand.u32 %s103, 1
        %s198 = scalar_lea.sflag [#allocation3], %s197
        %s199 = sand.u32 %s103, 1
        %s200 = scalar_lea.vmem [#allocation2], %s199
        %p201 = pneg %p142
        %p202 = pneg %p139
        %s203 = sand.u32 %s129, 1
        %s204 = scalar_lea.sflag [#allocation5], %s203
        %s205 = sand.u32 %s129, 1
        %s206 = scalar_lea.vmem [#allocation4], %s205
        %p207 = scmp.lt.s32.totalorder %s22, 1
        %s208 = scalar_select %p207, %s22, 1
        %s209 = smul.addr %s208, 60
        %s210 = smul.addr %s209, 8
        %s211 = scalar_lea.vmem %s0, %s210
        %p212 = scmp.lt.s32.totalorder %s22, 1
        %s213 = scalar_select %p212, %s22, 1
        %s214 = smul.addr %s213, 54
        %s215 = smul.addr %s214, 8
        %s216 = scalar_lea.vmem %s2, %s215
        %v217 = vld [vmem:[%s211] sm:$0xff]
        %v218 = vld [vmem:[%s211 + $0x8] sm:$0xff]
        %v219 = vld [vmem:[%s211 + $0x10] sm:$0xf]
        %v220 = vld [vmem:[%s211 + $0x18] sm:$0xff]
        %v221 = vld [vmem:[%s211 + $0x20] sm:$0xff]
        %v222 = vld [vmem:[%s211 + $0x28] sm:$0xf]
        %v223 = vld [vmem:[%s211 + $0x30] sm:$0xff]
        %v224 = vld [vmem:[%s211 + $0x38] sm:$0xff]
        %v225 = vld [vmem:[%s211 + $0x40] sm:$0xf]
        %v226 = vld [vmem:[%s211 + $0x48] sm:$0xff]
        %v227 = vld [vmem:[%s211 + $0x50] sm:$0xff]
        %v228 = vld [vmem:[%s211 + $0x58] sm:$0xf]
        %v229 = vld [vmem:[%s211 + $0x60] sm:$0xff]
        %v230 = vld [vmem:[%s211 + $0x68] sm:$0xff]
        %v231 = vld [vmem:[%s211 + $0x70] sm:$0xf]
        %v232 = vld [vmem:[%s211 + $0x78] sm:$0xff]
        %v233 = vld [vmem:[%s211 + $0x80] sm:$0xff]
        %v234 = vld [vmem:[%s211 + $0x88] sm:$0xf]
        %v235 = vld [vmem:[%s211 + $0x90] sm:$0xff]
        %v236 = vld [vmem:[%s211 + $0x98] sm:$0xff]
        %v237 = vld [vmem:[%s211 + $0xa0] sm:$0xf]
        %v238 = vld [vmem:[%s211 + $0xa8] sm:$0xff]
        %v239 = vld [vmem:[%s211 + $0xb0] sm:$0xff]
        %v240 = vld [vmem:[%s211 + $0xb8] sm:$0xf]
        %v241 = vld [vmem:[%s211 + $0xc0] sm:$0xff]
        %v242 = vld [vmem:[%s211 + $0xc8] sm:$0xff]
        %v243 = vld [vmem:[%s211 + $0xd0] sm:$0xf]
        %v244 = vld [vmem:[%s211 + $0xd8] sm:$0xff]
        %v245 = vld [vmem:[%s211 + $0xe0] sm:$0xff]
        %v246 = vld [vmem:[%s211 + $0xe8] sm:$0xf]
        %v247 = vld [vmem:[%s211 + $0xf0] sm:$0xff]
        %v248 = vld [vmem:[%s211 + $0xf8] sm:$0xff]
        %v249 = vld [vmem:[%s211 + $0x100] sm:$0xf]
        %v250 = vld [vmem:[%s211 + $0x108] sm:$0xff]
        %v251 = vld [vmem:[%s211 + $0x110] sm:$0xff]
        %v252 = vld [vmem:[%s211 + $0x118] sm:$0xf]
        %v253 = vld [vmem:[%s211 + $0x120] sm:$0xff]
        %v254 = vld [vmem:[%s211 + $0x128] sm:$0xff]
        %v255 = vld [vmem:[%s211 + $0x130] sm:$0xf]
        %v256 = vld [vmem:[%s211 + $0x138] sm:$0xff]
        %v257 = vld [vmem:[%s211 + $0x140] sm:$0xff]
        %v258 = vld [vmem:[%s211 + $0x148] sm:$0xf]
        %v259 = vld [vmem:[%s211 + $0x150] sm:$0xff]
        %v260 = vld [vmem:[%s211 + $0x158] sm:$0xff]
        %v261 = vld [vmem:[%s211 + $0x160] sm:$0xf]
        %v262 = vld [vmem:[%s211 + $0x168] sm:$0xff]
        %v263 = vld [vmem:[%s211 + $0x170] sm:$0xff]
        %v264 = vld [vmem:[%s211 + $0x178] sm:$0xf]
        %v265 = vld [vmem:[%s211 + $0x180] sm:$0xff]
        %v266 = vld [vmem:[%s211 + $0x188] sm:$0xff]
        %v267 = vld [vmem:[%s211 + $0x190] sm:$0xf]
        %v268 = vld [vmem:[%s211 + $0x198] sm:$0xff]
        %v269 = vld [vmem:[%s211 + $0x1a0] sm:$0xff]
        %v270 = vld [vmem:[%s211 + $0x1a8] sm:$0xf]
        %v271 = vld [vmem:[%s211 + $0x1b0] sm:$0xff]
        %v272 = vld [vmem:[%s211 + $0x1b8] sm:$0xff]
        %v273 = vld [vmem:[%s211 + $0x1c0] sm:$0xf]
        %v274 = vld [vmem:[%s211 + $0x1c8] sm:$0xff]
        %v275 = vld [vmem:[%s211 + $0x1d0] sm:$0xff]
        %v276 = vld [vmem:[%s211 + $0x1d8] sm:$0xf]
        %v277 = vld [vmem:[%s1] sm:$0xf]
        %v278 = vld [vmem:[%s1 + $0x4] sm:$0xf]
        %v279 = vld [vmem:[%s1 + $0x8] sm:$0xf]
        %v280 = vld [vmem:[%s1 + $0xc] sm:$0xf]
        %v281 = vld [vmem:[%s1 + $0x10] sm:$0xf]
        %v282 = vld [vmem:[%s1 + $0x14] sm:$0xf]
        %v283 = vld [vmem:[%s1 + $0x18] sm:$0xf]
        %v284 = vld [vmem:[%s1 + $0x1c] sm:$0xf]
        %v285 = vld [vmem:[%s1 + $0x20] sm:$0xf]
        %v286 = vld [vmem:[%s1 + $0x24] sm:$0xf]
        %v287 = vld [vmem:[%s1 + $0x28] sm:$0xf]
        %v288 = vld [vmem:[%s1 + $0x2c] sm:$0xf]
        %v289 = vld [vmem:[%s1 + $0x30] sm:$0xf]
        %v290 = vld [vmem:[%s1 + $0x34] sm:$0xf]
        %v291 = vld [vmem:[%s1 + $0x38] sm:$0xf]
        %v292 = vld [vmem:[%s1 + $0x3c] sm:$0xf]
        %vm347 = vcmask 1046528
        %v348 = vrot.slane %v217, 1
        %v349 = vrot.slane %v218, 1
        %v350 = vsel %vm347, %v348, %v349
        %v351 = vrot.slane %v219, 1
        %v352 = vsel %vm347, %v349, %v351
        %v353 = vrot.slane %v220, 1
        %v354 = vrot.slane %v221, 1
        %v355 = vsel %vm347, %v353, %v354
        %v356 = vrot.slane %v222, 1
        %v357 = vsel %vm347, %v354, %v356
        %v358 = vrot.slane %v223, 1
        %v359 = vrot.slane %v224, 1
        %v360 = vsel %vm347, %v358, %v359
        %v361 = vrot.slane %v225, 1
        %v362 = vsel %vm347, %v359, %v361
        %v363 = vrot.slane %v226, 1
        %v364 = vrot.slane %v227, 1
        %v365 = vsel %vm347, %v363, %v364
        %v366 = vrot.slane %v228, 1
        %v367 = vsel %vm347, %v364, %v366
        %v368 = vrot.slane %v229, 1
        %v369 = vrot.slane %v230, 1
        %v370 = vsel %vm347, %v368, %v369
        %v371 = vrot.slane %v231, 1
        %v372 = vsel %vm347, %v369, %v371
        %v373 = vrot.slane %v232, 1
        %v374 = vrot.slane %v233, 1
        %v375 = vsel %vm347, %v373, %v374
        %v376 = vrot.slane %v234, 1
        %v377 = vsel %vm347, %v374, %v376
        %v378 = vrot.slane %v235, 1
        %v379 = vrot.slane %v236, 1
        %v380 = vsel %vm347, %v378, %v379
        %v381 = vrot.slane %v237, 1
        %v382 = vsel %vm347, %v379, %v381
        %v383 = vrot.slane %v238, 1
        %v384 = vrot.slane %v239, 1
        %v385 = vsel %vm347, %v383, %v384
        %v386 = vrot.slane %v240, 1
        %v387 = vsel %vm347, %v384, %v386
        %v388 = vrot.slane %v241, 1
        %v389 = vrot.slane %v242, 1
        %v390 = vsel %vm347, %v388, %v389
        %v391 = vrot.slane %v243, 1
        %v392 = vsel %vm347, %v389, %v391
        %v393 = vrot.slane %v244, 1
        %v394 = vrot.slane %v245, 1
        %v395 = vsel %vm347, %v393, %v394
        %v396 = vrot.slane %v246, 1
        %v397 = vsel %vm347, %v394, %v396
        %v398 = vrot.slane %v247, 1
        %v399 = vrot.slane %v248, 1
        %v400 = vsel %vm347, %v398, %v399
        %v401 = vrot.slane %v249, 1
        %v402 = vsel %vm347, %v399, %v401
        %v403 = vrot.slane %v250, 1
        %v404 = vrot.slane %v251, 1
        %v405 = vsel %vm347, %v403, %v404
        %v406 = vrot.slane %v252, 1
        %v407 = vsel %vm347, %v404, %v406
        %v408 = vrot.slane %v253, 1
        %v409 = vrot.slane %v254, 1
        %v410 = vsel %vm347, %v408, %v409
        %v411 = vrot.slane %v255, 1
        %v412 = vsel %vm347, %v409, %v411
        %v413 = vrot.slane %v256, 1
        %v414 = vrot.slane %v257, 1
        %v415 = vsel %vm347, %v413, %v414
        %v416 = vrot.slane %v258, 1
        %v417 = vsel %vm347, %v414, %v416
        %v418 = vrot.slane %v259, 1
        %v419 = vrot.slane %v260, 1
        %v420 = vsel %vm347, %v418, %v419
        %v421 = vrot.slane %v261, 1
        %v422 = vsel %vm347, %v419, %v421
        %v423 = vrot.slane %v262, 1
        %v424 = vrot.slane %v263, 1
        %v425 = vsel %vm347, %v423, %v424
        %v426 = vrot.slane %v264, 1
        %v427 = vsel %vm347, %v424, %v426
        %v428 = vrot.slane %v265, 1
        %v429 = vrot.slane %v266, 1
        %v430 = vsel %vm347, %v428, %v429
        %v431 = vrot.slane %v267, 1
        %v432 = vsel %vm347, %v429, %v431
        %v433 = vrot.slane %v268, 1
        %v434 = vrot.slane %v269, 1
        %v435 = vsel %vm347, %v433, %v434
        %v436 = vrot.slane %v270, 1
        %v437 = vsel %vm347, %v434, %v436
        %438 = vrot.lane.b32.xlu0 %v350, 8
        %v439 = vpop.permute.xlu0 %438
        %440 = vrot.lane.b32.xlu0 %v352, 8
        %v441 = vpop.permute.xlu0 %440
        %442 = vrot.lane.b32.xlu0 %v351, 8
        %v443 = vpop.permute.xlu0 %442
        %444 = vrot.lane.b32.xlu0 %v355, 8
        %v445 = vpop.permute.xlu0 %444
        %446 = vrot.lane.b32.xlu0 %v357, 8
        %v447 = vpop.permute.xlu0 %446
        %448 = vrot.lane.b32.xlu0 %v356, 8
        %v449 = vpop.permute.xlu0 %448
        %450 = vrot.lane.b32.xlu0 %v360, 8
        %v451 = vpop.permute.xlu0 %450
        %452 = vrot.lane.b32.xlu0 %v362, 8
        %v453 = vpop.permute.xlu0 %452
        %454 = vrot.lane.b32.xlu0 %v361, 8
        %v455 = vpop.permute.xlu0 %454
        %456 = vrot.lane.b32.xlu0 %v365, 8
        %v457 = vpop.permute.xlu0 %456
        %458 = vrot.lane.b32.xlu0 %v367, 8
        %v459 = vpop.permute.xlu0 %458
        %460 = vrot.lane.b32.xlu0 %v366, 8
        %v461 = vpop.permute.xlu0 %460
        %462 = vrot.lane.b32.xlu0 %v370, 8
        %v463 = vpop.permute.xlu0 %462
        %464 = vrot.lane.b32.xlu0 %v372, 8
        %v465 = vpop.permute.xlu0 %464
        %466 = vrot.lane.b32.xlu0 %v371, 8
        %v467 = vpop.permute.xlu0 %466
        %468 = vrot.lane.b32.xlu0 %v375, 8
        %v469 = vpop.permute.xlu0 %468
        %470 = vrot.lane.b32.xlu0 %v377, 8
        %v471 = vpop.permute.xlu0 %470
        %472 = vrot.lane.b32.xlu0 %v376, 8
        %v473 = vpop.permute.xlu0 %472
        %474 = vrot.lane.b32.xlu0 %v380, 8
        %v475 = vpop.permute.xlu0 %474
        %476 = vrot.lane.b32.xlu0 %v382, 8
        %v477 = vpop.permute.xlu0 %476
        %478 = vrot.lane.b32.xlu0 %v381, 8
        %v479 = vpop.permute.xlu0 %478
        %480 = vrot.lane.b32.xlu0 %v385, 8
        %v481 = vpop.permute.xlu0 %480
        %482 = vrot.lane.b32.xlu0 %v387, 8
        %v483 = vpop.permute.xlu0 %482
        %484 = vrot.lane.b32.xlu0 %v386, 8
        %v485 = vpop.permute.xlu0 %484
        %486 = vrot.lane.b32.xlu0 %v390, 8
        %v487 = vpop.permute.xlu0 %486
        %488 = vrot.lane.b32.xlu0 %v392, 8
        %v489 = vpop.permute.xlu0 %488
        %490 = vrot.lane.b32.xlu0 %v391, 8
        %v491 = vpop.permute.xlu0 %490
        %492 = vrot.lane.b32.xlu0 %v395, 8
        %v493 = vpop.permute.xlu0 %492
        %494 = vrot.lane.b32.xlu0 %v397, 8
        %v495 = vpop.permute.xlu0 %494
        %496 = vrot.lane.b32.xlu0 %v396, 8
        %v497 = vpop.permute.xlu0 %496
        %498 = vrot.lane.b32.xlu0 %v400, 8
        %v499 = vpop.permute.xlu0 %498
        %500 = vrot.lane.b32.xlu0 %v402, 8
        %v501 = vpop.permute.xlu0 %500
        %502 = vrot.lane.b32.xlu0 %v401, 8
        %v503 = vpop.permute.xlu0 %502
        %504 = vrot.lane.b32.xlu0 %v405, 8
        %v505 = vpop.permute.xlu0 %504
        %506 = vrot.lane.b32.xlu0 %v407, 8
        %v507 = vpop.permute.xlu0 %506
        %508 = vrot.lane.b32.xlu0 %v406, 8
        %v509 = vpop.permute.xlu0 %508
        %510 = vrot.lane.b32.xlu0 %v410, 8
        %v511 = vpop.permute.xlu0 %510
        %512 = vrot.lane.b32.xlu0 %v412, 8
        %v513 = vpop.permute.xlu0 %512
        %514 = vrot.lane.b32.xlu0 %v411, 8
        %v515 = vpop.permute.xlu0 %514
        %516 = vrot.lane.b32.xlu0 %v415, 8
        %v517 = vpop.permute.xlu0 %516
        %518 = vrot.lane.b32.xlu0 %v417, 8
        %v519 = vpop.permute.xlu0 %518
        %520 = vrot.lane.b32.xlu0 %v416, 8
        %v521 = vpop.permute.xlu0 %520
        %522 = vrot.lane.b32.xlu0 %v420, 8
        %v523 = vpop.permute.xlu0 %522
        %524 = vrot.lane.b32.xlu0 %v422, 8
        %v525 = vpop.permute.xlu0 %524
        %526 = vrot.lane.b32.xlu0 %v421, 8
        %v527 = vpop.permute.xlu0 %526
        %528 = vrot.lane.b32.xlu0 %v425, 8
        %v529 = vpop.permute.xlu0 %528
        %530 = vrot.lane.b32.xlu0 %v427, 8
        %v531 = vpop.permute.xlu0 %530
        %532 = vrot.lane.b32.xlu0 %v426, 8
        %v533 = vpop.permute.xlu0 %532
        %534 = vrot.lane.b32.xlu0 %v430, 8
        %v535 = vpop.permute.xlu0 %534
        %536 = vrot.lane.b32.xlu0 %v432, 8
        %v537 = vpop.permute.xlu0 %536
        %538 = vrot.lane.b32.xlu0 %v431, 8
        %v539 = vpop.permute.xlu0 %538
        %540 = vrot.lane.b32.xlu0 %v435, 8
        %v541 = vpop.permute.xlu0 %540
        %542 = vrot.lane.b32.xlu0 %v437, 8
        %v543 = vpop.permute.xlu0 %542
        %544 = vrot.lane.b32.xlu0 %v436, 8
        %v545 = vpop.permute.xlu0 %544
        %vm600 = vcmask 1045504
        %v601 = vrot.slane %v217, 2
        %v602 = vrot.slane %v218, 2
        %v603 = vsel %vm600, %v601, %v602
        %v604 = vrot.slane %v219, 2
        %v605 = vsel %vm600, %v602, %v604
        %v606 = vrot.slane %v220, 2
        %v607 = vrot.slane %v221, 2
        %v608 = vsel %vm600, %v606, %v607
        %v609 = vrot.slane %v222, 2
        %v610 = vsel %vm600, %v607, %v609
        %v611 = vrot.slane %v223, 2
        %v612 = vrot.slane %v224, 2
        %v613 = vsel %vm600, %v611, %v612
        %v614 = vrot.slane %v225, 2
        %v615 = vsel %vm600, %v612, %v614
        %v616 = vrot.slane %v226, 2
        %v617 = vrot.slane %v227, 2
        %v618 = vsel %vm600, %v616, %v617
        %v619 = vrot.slane %v228, 2
        %v620 = vsel %vm600, %v617, %v619
        %v621 = vrot.slane %v229, 2
        %v622 = vrot.slane %v230, 2
        %v623 = vsel %vm600, %v621, %v622
        %v624 = vrot.slane %v231, 2
        %v625 = vsel %vm600, %v622, %v624
        %v626 = vrot.slane %v232, 2
        %v627 = vrot.slane %v233, 2
        %v628 = vsel %vm600, %v626, %v627
        %v629 = vrot.slane %v234, 2
        %v630 = vsel %vm600, %v627, %v629
        %v631 = vrot.slane %v235, 2
        %v632 = vrot.slane %v236, 2
        %v633 = vsel %vm600, %v631, %v632
        %v634 = vrot.slane %v237, 2
        %v635 = vsel %vm600, %v632, %v634
        %v636 = vrot.slane %v238, 2
        %v637 = vrot.slane %v239, 2
        %v638 = vsel %vm600, %v636, %v637
        %v639 = vrot.slane %v240, 2
        %v640 = vsel %vm600, %v637, %v639
        %v641 = vrot.slane %v241, 2
        %v642 = vrot.slane %v242, 2
        %v643 = vsel %vm600, %v641, %v642
        %v644 = vrot.slane %v243, 2
        %v645 = vsel %vm600, %v642, %v644
        %v646 = vrot.slane %v244, 2
        %v647 = vrot.slane %v245, 2
        %v648 = vsel %vm600, %v646, %v647
        %v649 = vrot.slane %v246, 2
        %v650 = vsel %vm600, %v647, %v649
        %v651 = vrot.slane %v247, 2
        %v652 = vrot.slane %v248, 2
        %v653 = vsel %vm600, %v651, %v652
        %v654 = vrot.slane %v249, 2
        %v655 = vsel %vm600, %v652, %v654
        %v656 = vrot.slane %v250, 2
        %v657 = vrot.slane %v251, 2
        %v658 = vsel %vm600, %v656, %v657
        %v659 = vrot.slane %v252, 2
        %v660 = vsel %vm600, %v657, %v659
        %v661 = vrot.slane %v253, 2
        %v662 = vrot.slane %v254, 2
        %v663 = vsel %vm600, %v661, %v662
        %v664 = vrot.slane %v255, 2
        %v665 = vsel %vm600, %v662, %v664
        %v666 = vrot.slane %v256, 2
        %v667 = vrot.slane %v257, 2
        %v668 = vsel %vm600, %v666, %v667
        %v669 = vrot.slane %v258, 2
        %v670 = vsel %vm600, %v667, %v669
        %v671 = vrot.slane %v259, 2
        %v672 = vrot.slane %v260, 2
        %v673 = vsel %vm600, %v671, %v672
        %v674 = vrot.slane %v261, 2
        %v675 = vsel %vm600, %v672, %v674
        %v676 = vrot.slane %v262, 2
        %v677 = vrot.slane %v263, 2
        %v678 = vsel %vm600, %v676, %v677
        %v679 = vrot.slane %v264, 2
        %v680 = vsel %vm600, %v677, %v679
        %v681 = vrot.slane %v265, 2
        %v682 = vrot.slane %v266, 2
        %v683 = vsel %vm600, %v681, %v682
        %v684 = vrot.slane %v267, 2
        %v685 = vsel %vm600, %v682, %v684
        %v686 = vrot.slane %v268, 2
        %v687 = vrot.slane %v269, 2
        %v688 = vsel %vm600, %v686, %v687
        %v689 = vrot.slane %v270, 2
        %v690 = vsel %vm600, %v687, %v689
        %691 = vrot.lane.b32.xlu0 %v603, 16
        %v692 = vpop.permute.xlu0 %691
        %693 = vrot.lane.b32.xlu0 %v605, 16
        %v694 = vpop.permute.xlu0 %693
        %695 = vrot.lane.b32.xlu0 %v604, 16
        %v696 = vpop.permute.xlu0 %695
        %697 = vrot.lane.b32.xlu0 %v608, 16
        %v698 = vpop.permute.xlu0 %697
        %699 = vrot.lane.b32.xlu0 %v610, 16
        %v700 = vpop.permute.xlu0 %699
        %701 = vrot.lane.b32.xlu0 %v609, 16
        %v702 = vpop.permute.xlu0 %701
        %703 = vrot.lane.b32.xlu0 %v613, 16
        %v704 = vpop.permute.xlu0 %703
        %705 = vrot.lane.b32.xlu0 %v615, 16
        %v706 = vpop.permute.xlu0 %705
        %707 = vrot.lane.b32.xlu0 %v614, 16
        %v708 = vpop.permute.xlu0 %707
        %709 = vrot.lane.b32.xlu0 %v618, 16
        %v710 = vpop.permute.xlu0 %709
        %711 = vrot.lane.b32.xlu0 %v620, 16
        %v712 = vpop.permute.xlu0 %711
        %713 = vrot.lane.b32.xlu0 %v619, 16
        %v714 = vpop.permute.xlu0 %713
        %715 = vrot.lane.b32.xlu0 %v623, 16
        %v716 = vpop.permute.xlu0 %715
        %717 = vrot.lane.b32.xlu0 %v625, 16
        %v718 = vpop.permute.xlu0 %717
        %719 = vrot.lane.b32.xlu0 %v624, 16
        %v720 = vpop.permute.xlu0 %719
        %721 = vrot.lane.b32.xlu0 %v628, 16
        %v722 = vpop.permute.xlu0 %721
        %723 = vrot.lane.b32.xlu0 %v630, 16
        %v724 = vpop.permute.xlu0 %723
        %725 = vrot.lane.b32.xlu0 %v629, 16
        %v726 = vpop.permute.xlu0 %725
        %727 = vrot.lane.b32.xlu0 %v633, 16
        %v728 = vpop.permute.xlu0 %727
        %729 = vrot.lane.b32.xlu0 %v635, 16
        %v730 = vpop.permute.xlu0 %729
        %731 = vrot.lane.b32.xlu0 %v634, 16
        %v732 = vpop.permute.xlu0 %731
        %733 = vrot.lane.b32.xlu0 %v638, 16
        %v734 = vpop.permute.xlu0 %733
        %735 = vrot.lane.b32.xlu0 %v640, 16
        %v736 = vpop.permute.xlu0 %735
        %737 = vrot.lane.b32.xlu0 %v639, 16
        %v738 = vpop.permute.xlu0 %737
        %739 = vrot.lane.b32.xlu0 %v643, 16
        %v740 = vpop.permute.xlu0 %739
        %741 = vrot.lane.b32.xlu0 %v645, 16
        %v742 = vpop.permute.xlu0 %741
        %743 = vrot.lane.b32.xlu0 %v644, 16
        %v744 = vpop.permute.xlu0 %743
        %745 = vrot.lane.b32.xlu0 %v648, 16
        %v746 = vpop.permute.xlu0 %745
        %747 = vrot.lane.b32.xlu0 %v650, 16
        %v748 = vpop.permute.xlu0 %747
        %749 = vrot.lane.b32.xlu0 %v649, 16
        %v750 = vpop.permute.xlu0 %749
        %751 = vrot.lane.b32.xlu0 %v653, 16
        %v752 = vpop.permute.xlu0 %751
        %753 = vrot.lane.b32.xlu0 %v655, 16
        %v754 = vpop.permute.xlu0 %753
        %755 = vrot.lane.b32.xlu0 %v654, 16
        %v756 = vpop.permute.xlu0 %755
        %757 = vrot.lane.b32.xlu0 %v658, 16
        %v758 = vpop.permute.xlu0 %757
        %759 = vrot.lane.b32.xlu0 %v660, 16
        %v760 = vpop.permute.xlu0 %759
        %761 = vrot.lane.b32.xlu0 %v659, 16
        %v762 = vpop.permute.xlu0 %761
        %763 = vrot.lane.b32.xlu0 %v663, 16
        %v764 = vpop.permute.xlu0 %763
        %765 = vrot.lane.b32.xlu0 %v665, 16
        %v766 = vpop.permute.xlu0 %765
        %767 = vrot.lane.b32.xlu0 %v664, 16
        %v768 = vpop.permute.xlu0 %767
        %769 = vrot.lane.b32.xlu0 %v668, 16
        %v770 = vpop.permute.xlu0 %769
        %771 = vrot.lane.b32.xlu0 %v670, 16
        %v772 = vpop.permute.xlu0 %771
        %773 = vrot.lane.b32.xlu0 %v669, 16
        %v774 = vpop.permute.xlu0 %773
        %775 = vrot.lane.b32.xlu0 %v673, 16
        %v776 = vpop.permute.xlu0 %775
        %777 = vrot.lane.b32.xlu0 %v675, 16
        %v778 = vpop.permute.xlu0 %777
        %779 = vrot.lane.b32.xlu0 %v674, 16
        %v780 = vpop.permute.xlu0 %779
        %781 = vrot.lane.b32.xlu0 %v678, 16
        %v782 = vpop.permute.xlu0 %781
        %783 = vrot.lane.b32.xlu0 %v680, 16
        %v784 = vpop.permute.xlu0 %783
        %785 = vrot.lane.b32.xlu0 %v679, 16
        %v786 = vpop.permute.xlu0 %785
        %787 = vrot.lane.b32.xlu0 %v683, 16
        %v788 = vpop.permute.xlu0 %787
        %789 = vrot.lane.b32.xlu0 %v685, 16
        %v790 = vpop.permute.xlu0 %789
        %791 = vrot.lane.b32.xlu0 %v684, 16
        %v792 = vpop.permute.xlu0 %791
        %793 = vrot.lane.b32.xlu0 %v688, 16
        %v794 = vpop.permute.xlu0 %793
        %795 = vrot.lane.b32.xlu0 %v690, 16
        %v796 = vpop.permute.xlu0 %795
        %797 = vrot.lane.b32.xlu0 %v689, 16
        %v798 = vpop.permute.xlu0 %797
        %856 = vrot.lane.b32.xlu0 %v220, 24
        %v857 = vpop.permute.xlu0 %856
        %858 = vrot.lane.b32.xlu0 %v221, 24
        %v859 = vpop.permute.xlu0 %858
        %860 = vrot.lane.b32.xlu0 %v222, 24
        %v861 = vpop.permute.xlu0 %860
        %862 = vrot.lane.b32.xlu0 %v223, 24
        %v863 = vpop.permute.xlu0 %862
        %864 = vrot.lane.b32.xlu0 %v224, 24
        %v865 = vpop.permute.xlu0 %864
        %866 = vrot.lane.b32.xlu0 %v225, 24
        %v867 = vpop.permute.xlu0 %866
        %868 = vrot.lane.b32.xlu0 %v226, 24
        %v869 = vpop.permute.xlu0 %868
        %870 = vrot.lane.b32.xlu0 %v227, 24
        %v871 = vpop.permute.xlu0 %870
        %872 = vrot.lane.b32.xlu0 %v228, 24
        %v873 = vpop.permute.xlu0 %872
        %874 = vrot.lane.b32.xlu0 %v229, 24
        %v875 = vpop.permute.xlu0 %874
        %876 = vrot.lane.b32.xlu0 %v230, 24
        %v877 = vpop.permute.xlu0 %876
        %878 = vrot.lane.b32.xlu0 %v231, 24
        %v879 = vpop.permute.xlu0 %878
        %880 = vrot.lane.b32.xlu0 %v232, 24
        %v881 = vpop.permute.xlu0 %880
        %882 = vrot.lane.b32.xlu0 %v233, 24
        %v883 = vpop.permute.xlu0 %882
        %884 = vrot.lane.b32.xlu0 %v234, 24
        %v885 = vpop.permute.xlu0 %884
        %886 = vrot.lane.b32.xlu0 %v235, 24
        %v887 = vpop.permute.xlu0 %886
        %888 = vrot.lane.b32.xlu0 %v236, 24
        %v889 = vpop.permute.xlu0 %888
        %890 = vrot.lane.b32.xlu0 %v237, 24
        %v891 = vpop.permute.xlu0 %890
        %892 = vrot.lane.b32.xlu0 %v238, 24
        %v893 = vpop.permute.xlu0 %892
        %894 = vrot.lane.b32.xlu0 %v239, 24
        %v895 = vpop.permute.xlu0 %894
        %896 = vrot.lane.b32.xlu0 %v240, 24
        %v897 = vpop.permute.xlu0 %896
        %898 = vrot.lane.b32.xlu0 %v241, 24
        %v899 = vpop.permute.xlu0 %898
        %900 = vrot.lane.b32.xlu0 %v242, 24
        %v901 = vpop.permute.xlu0 %900
        %902 = vrot.lane.b32.xlu0 %v243, 24
        %v903 = vpop.permute.xlu0 %902
        %904 = vrot.lane.b32.xlu0 %v244, 24
        %v905 = vpop.permute.xlu0 %904
        %906 = vrot.lane.b32.xlu0 %v245, 24
        %v907 = vpop.permute.xlu0 %906
        %908 = vrot.lane.b32.xlu0 %v246, 24
        %v909 = vpop.permute.xlu0 %908
        %910 = vrot.lane.b32.xlu0 %v247, 24
        %v911 = vpop.permute.xlu0 %910
        %912 = vrot.lane.b32.xlu0 %v248, 24
        %v913 = vpop.permute.xlu0 %912
        %914 = vrot.lane.b32.xlu0 %v249, 24
        %v915 = vpop.permute.xlu0 %914
        %916 = vrot.lane.b32.xlu0 %v250, 24
        %v917 = vpop.permute.xlu0 %916
        %918 = vrot.lane.b32.xlu0 %v251, 24
        %v919 = vpop.permute.xlu0 %918
        %920 = vrot.lane.b32.xlu0 %v252, 24
        %v921 = vpop.permute.xlu0 %920
        %922 = vrot.lane.b32.xlu0 %v253, 24
        %v923 = vpop.permute.xlu0 %922
        %924 = vrot.lane.b32.xlu0 %v254, 24
        %v925 = vpop.permute.xlu0 %924
        %926 = vrot.lane.b32.xlu0 %v255, 24
        %v927 = vpop.permute.xlu0 %926
        %928 = vrot.lane.b32.xlu0 %v256, 24
        %v929 = vpop.permute.xlu0 %928
        %930 = vrot.lane.b32.xlu0 %v257, 24
        %v931 = vpop.permute.xlu0 %930
        %932 = vrot.lane.b32.xlu0 %v258, 24
        %v933 = vpop.permute.xlu0 %932
        %934 = vrot.lane.b32.xlu0 %v259, 24
        %v935 = vpop.permute.xlu0 %934
        %936 = vrot.lane.b32.xlu0 %v260, 24
        %v937 = vpop.permute.xlu0 %936
        %938 = vrot.lane.b32.xlu0 %v261, 24
        %v939 = vpop.permute.xlu0 %938
        %940 = vrot.lane.b32.xlu0 %v262, 24
        %v941 = vpop.permute.xlu0 %940
        %942 = vrot.lane.b32.xlu0 %v263, 24
        %v943 = vpop.permute.xlu0 %942
        %944 = vrot.lane.b32.xlu0 %v264, 24
        %v945 = vpop.permute.xlu0 %944
        %946 = vrot.lane.b32.xlu0 %v265, 24
        %v947 = vpop.permute.xlu0 %946
        %948 = vrot.lane.b32.xlu0 %v266, 24
        %v949 = vpop.permute.xlu0 %948
        %950 = vrot.lane.b32.xlu0 %v267, 24
        %v951 = vpop.permute.xlu0 %950
        %952 = vrot.lane.b32.xlu0 %v268, 24
        %v953 = vpop.permute.xlu0 %952
        %954 = vrot.lane.b32.xlu0 %v269, 24
        %v955 = vpop.permute.xlu0 %954
        %956 = vrot.lane.b32.xlu0 %v270, 24
        %v957 = vpop.permute.xlu0 %956
        %958 = vrot.lane.b32.xlu0 %v271, 24
        %v959 = vpop.permute.xlu0 %958
        %960 = vrot.lane.b32.xlu0 %v272, 24
        %v961 = vpop.permute.xlu0 %960
        %962 = vrot.lane.b32.xlu0 %v273, 24
        %v963 = vpop.permute.xlu0 %962
        %v1018 = vrot.slane %v271, 1
        %v1019 = vrot.slane %v272, 1
        %v1020 = vsel %vm347, %v1018, %v1019
        %v1021 = vrot.slane %v273, 1
        %v1022 = vsel %vm347, %v1019, %v1021
        %1023 = vrot.lane.b32.xlu0 %v355, 32
        %v1024 = vpop.permute.xlu0 %1023
        %1025 = vrot.lane.b32.xlu0 %v357, 32
        %v1026 = vpop.permute.xlu0 %1025
        %1027 = vrot.lane.b32.xlu0 %v356, 32
        %v1028 = vpop.permute.xlu0 %1027
        %1029 = vrot.lane.b32.xlu0 %v360, 32
        %v1030 = vpop.permute.xlu0 %1029
        %1031 = vrot.lane.b32.xlu0 %v362, 32
        %v1032 = vpop.permute.xlu0 %1031
        %1033 = vrot.lane.b32.xlu0 %v361, 32
        %v1034 = vpop.permute.xlu0 %1033
        %1035 = vrot.lane.b32.xlu0 %v365, 32
        %v1036 = vpop.permute.xlu0 %1035
        %1037 = vrot.lane.b32.xlu0 %v367, 32
        %v1038 = vpop.permute.xlu0 %1037
        %1039 = vrot.lane.b32.xlu0 %v366, 32
        %v1040 = vpop.permute.xlu0 %1039
        %1041 = vrot.lane.b32.xlu0 %v370, 32
        %v1042 = vpop.permute.xlu0 %1041
        %1043 = vrot.lane.b32.xlu0 %v372, 32
        %v1044 = vpop.permute.xlu0 %1043
        %1045 = vrot.lane.b32.xlu0 %v371, 32
        %v1046 = vpop.permute.xlu0 %1045
        %1047 = vrot.lane.b32.xlu0 %v375, 32
        %v1048 = vpop.permute.xlu0 %1047
        %1049 = vrot.lane.b32.xlu0 %v377, 32
        %v1050 = vpop.permute.xlu0 %1049
        %1051 = vrot.lane.b32.xlu0 %v376, 32
        %v1052 = vpop.permute.xlu0 %1051
        %1053 = vrot.lane.b32.xlu0 %v380, 32
        %v1054 = vpop.permute.xlu0 %1053
        %1055 = vrot.lane.b32.xlu0 %v382, 32
        %v1056 = vpop.permute.xlu0 %1055
        %1057 = vrot.lane.b32.xlu0 %v381, 32
        %v1058 = vpop.permute.xlu0 %1057
        %1059 = vrot.lane.b32.xlu0 %v385, 32
        %v1060 = vpop.permute.xlu0 %1059
        %1061 = vrot.lane.b32.xlu0 %v387, 32
        %v1062 = vpop.permute.xlu0 %1061
        %1063 = vrot.lane.b32.xlu0 %v386, 32
        %v1064 = vpop.permute.xlu0 %1063
        %1065 = vrot.lane.b32.xlu0 %v390, 32
        %v1066 = vpop.permute.xlu0 %1065
        %1067 = vrot.lane.b32.xlu0 %v392, 32
        %v1068 = vpop.permute.xlu0 %1067
        %1069 = vrot.lane.b32.xlu0 %v391, 32
        %v1070 = vpop.permute.xlu0 %1069
        %1071 = vrot.lane.b32.xlu0 %v395, 32
        %v1072 = vpop.permute.xlu0 %1071
        %1073 = vrot.lane.b32.xlu0 %v397, 32
        %v1074 = vpop.permute.xlu0 %1073
        %1075 = vrot.lane.b32.xlu0 %v396, 32
        %v1076 = vpop.permute.xlu0 %1075
        %1077 = vrot.lane.b32.xlu0 %v400, 32
        %v1078 = vpop.permute.xlu0 %1077
        %1079 = vrot.lane.b32.xlu0 %v402, 32
        %v1080 = vpop.permute.xlu0 %1079
        %1081 = vrot.lane.b32.xlu0 %v401, 32
        %v1082 = vpop.permute.xlu0 %1081
        %1083 = vrot.lane.b32.xlu0 %v405, 32
        %v1084 = vpop.permute.xlu0 %1083
        %1085 = vrot.lane.b32.xlu0 %v407, 32
        %v1086 = vpop.permute.xlu0 %1085
        %1087 = vrot.lane.b32.xlu0 %v406, 32
        %v1088 = vpop.permute.xlu0 %1087
        %1089 = vrot.lane.b32.xlu0 %v410, 32
        %v1090 = vpop.permute.xlu0 %1089
        %1091 = vrot.lane.b32.xlu0 %v412, 32
        %v1092 = vpop.permute.xlu0 %1091
        %1093 = vrot.lane.b32.xlu0 %v411, 32
        %v1094 = vpop.permute.xlu0 %1093
        %1095 = vrot.lane.b32.xlu0 %v415, 32
        %v1096 = vpop.permute.xlu0 %1095
        %1097 = vrot.lane.b32.xlu0 %v417, 32
        %v1098 = vpop.permute.xlu0 %1097
        %1099 = vrot.lane.b32.xlu0 %v416, 32
        %v1100 = vpop.permute.xlu0 %1099
        %1101 = vrot.lane.b32.xlu0 %v420, 32
        %v1102 = vpop.permute.xlu0 %1101
        %1103 = vrot.lane.b32.xlu0 %v422, 32
        %v1104 = vpop.permute.xlu0 %1103
        %1105 = vrot.lane.b32.xlu0 %v421, 32
        %v1106 = vpop.permute.xlu0 %1105
        %1107 = vrot.lane.b32.xlu0 %v425, 32
        %v1108 = vpop.permute.xlu0 %1107
        %1109 = vrot.lane.b32.xlu0 %v427, 32
        %v1110 = vpop.permute.xlu0 %1109
        %1111 = vrot.lane.b32.xlu0 %v426, 32
        %v1112 = vpop.permute.xlu0 %1111
        %1113 = vrot.lane.b32.xlu0 %v430, 32
        %v1114 = vpop.permute.xlu0 %1113
        %1115 = vrot.lane.b32.xlu0 %v432, 32
        %v1116 = vpop.permute.xlu0 %1115
        %1117 = vrot.lane.b32.xlu0 %v431, 32
        %v1118 = vpop.permute.xlu0 %1117
        %1119 = vrot.lane.b32.xlu0 %v435, 32
        %v1120 = vpop.permute.xlu0 %1119
        %1121 = vrot.lane.b32.xlu0 %v437, 32
        %v1122 = vpop.permute.xlu0 %1121
        %1123 = vrot.lane.b32.xlu0 %v436, 32
        %v1124 = vpop.permute.xlu0 %1123
        %1125 = vrot.lane.b32.xlu0 %v1020, 32
        %v1126 = vpop.permute.xlu0 %1125
        %1127 = vrot.lane.b32.xlu0 %v1022, 32
        %v1128 = vpop.permute.xlu0 %1127
        %1129 = vrot.lane.b32.xlu0 %v1021, 32
        %v1130 = vpop.permute.xlu0 %1129
        %v1185 = vrot.slane %v271, 2
        %v1186 = vrot.slane %v272, 2
        %v1187 = vsel %vm600, %v1185, %v1186
        %v1188 = vrot.slane %v273, 2
        %v1189 = vsel %vm600, %v1186, %v1188
        %1190 = vrot.lane.b32.xlu0 %v608, 40
        %v1191 = vpop.permute.xlu0 %1190
        %1192 = vrot.lane.b32.xlu0 %v610, 40
        %v1193 = vpop.permute.xlu0 %1192
        %1194 = vrot.lane.b32.xlu0 %v609, 40
        %v1195 = vpop.permute.xlu0 %1194
        %1196 = vrot.lane.b32.xlu0 %v613, 40
        %v1197 = vpop.permute.xlu0 %1196
        %1198 = vrot.lane.b32.xlu0 %v615, 40
        %v1199 = vpop.permute.xlu0 %1198
        %1200 = vrot.lane.b32.xlu0 %v614, 40
        %v1201 = vpop.permute.xlu0 %1200
        %1202 = vrot.lane.b32.xlu0 %v618, 40
        %v1203 = vpop.permute.xlu0 %1202
        %1204 = vrot.lane.b32.xlu0 %v620, 40
        %v1205 = vpop.permute.xlu0 %1204
        %1206 = vrot.lane.b32.xlu0 %v619, 40
        %v1207 = vpop.permute.xlu0 %1206
        %1208 = vrot.lane.b32.xlu0 %v623, 40
        %v1209 = vpop.permute.xlu0 %1208
        %1210 = vrot.lane.b32.xlu0 %v625, 40
        %v1211 = vpop.permute.xlu0 %1210
        %1212 = vrot.lane.b32.xlu0 %v624, 40
        %v1213 = vpop.permute.xlu0 %1212
        %1214 = vrot.lane.b32.xlu0 %v628, 40
        %v1215 = vpop.permute.xlu0 %1214
        %1216 = vrot.lane.b32.xlu0 %v630, 40
        %v1217 = vpop.permute.xlu0 %1216
        %1218 = vrot.lane.b32.xlu0 %v629, 40
        %v1219 = vpop.permute.xlu0 %1218
        %1220 = vrot.lane.b32.xlu0 %v633, 40
        %v1221 = vpop.permute.xlu0 %1220
        %1222 = vrot.lane.b32.xlu0 %v635, 40
        %v1223 = vpop.permute.xlu0 %1222
        %1224 = vrot.lane.b32.xlu0 %v634, 40
        %v1225 = vpop.permute.xlu0 %1224
        %1226 = vrot.lane.b32.xlu0 %v638, 40
        %v1227 = vpop.permute.xlu0 %1226
        %1228 = vrot.lane.b32.xlu0 %v640, 40
        %v1229 = vpop.permute.xlu0 %1228
        %1230 = vrot.lane.b32.xlu0 %v639, 40
        %v1231 = vpop.permute.xlu0 %1230
        %1232 = vrot.lane.b32.xlu0 %v643, 40
        %v1233 = vpop.permute.xlu0 %1232
        %1234 = vrot.lane.b32.xlu0 %v645, 40
        %v1235 = vpop.permute.xlu0 %1234
        %1236 = vrot.lane.b32.xlu0 %v644, 40
        %v1237 = vpop.permute.xlu0 %1236
        %1238 = vrot.lane.b32.xlu0 %v648, 40
        %v1239 = vpop.permute.xlu0 %1238
        %1240 = vrot.lane.b32.xlu0 %v650, 40
        %v1241 = vpop.permute.xlu0 %1240
        %1242 = vrot.lane.b32.xlu0 %v649, 40
        %v1243 = vpop.permute.xlu0 %1242
        %1244 = vrot.lane.b32.xlu0 %v653, 40
        %v1245 = vpop.permute.xlu0 %1244
        %1246 = vrot.lane.b32.xlu0 %v655, 40
        %v1247 = vpop.permute.xlu0 %1246
        %1248 = vrot.lane.b32.xlu0 %v654, 40
        %v1249 = vpop.permute.xlu0 %1248
        %1250 = vrot.lane.b32.xlu0 %v658, 40
        %v1251 = vpop.permute.xlu0 %1250
        %1252 = vrot.lane.b32.xlu0 %v660, 40
        %v1253 = vpop.permute.xlu0 %1252
        %1254 = vrot.lane.b32.xlu0 %v659, 40
        %v1255 = vpop.permute.xlu0 %1254
        %1256 = vrot.lane.b32.xlu0 %v663, 40
        %v1257 = vpop.permute.xlu0 %1256
        %1258 = vrot.lane.b32.xlu0 %v665, 40
        %v1259 = vpop.permute.xlu0 %1258
        %1260 = vrot.lane.b32.xlu0 %v664, 40
        %v1261 = vpop.permute.xlu0 %1260
        %1262 = vrot.lane.b32.xlu0 %v668, 40
        %v1263 = vpop.permute.xlu0 %1262
        %1264 = vrot.lane.b32.xlu0 %v670, 40
        %v1265 = vpop.permute.xlu0 %1264
        %1266 = vrot.lane.b32.xlu0 %v669, 40
        %v1267 = vpop.permute.xlu0 %1266
        %1268 = vrot.lane.b32.xlu0 %v673, 40
        %v1269 = vpop.permute.xlu0 %1268
        %1270 = vrot.lane.b32.xlu0 %v675, 40
        %v1271 = vpop.permute.xlu0 %1270
        %1272 = vrot.lane.b32.xlu0 %v674, 40
        %v1273 = vpop.permute.xlu0 %1272
        %1274 = vrot.lane.b32.xlu0 %v678, 40
        %v1275 = vpop.permute.xlu0 %1274
        %1276 = vrot.lane.b32.xlu0 %v680, 40
        %v1277 = vpop.permute.xlu0 %1276
        %1278 = vrot.lane.b32.xlu0 %v679, 40
        %v1279 = vpop.permute.xlu0 %1278
        %1280 = vrot.lane.b32.xlu0 %v683, 40
        %v1281 = vpop.permute.xlu0 %1280
        %1282 = vrot.lane.b32.xlu0 %v685, 40
        %v1283 = vpop.permute.xlu0 %1282
        %1284 = vrot.lane.b32.xlu0 %v684, 40
        %v1285 = vpop.permute.xlu0 %1284
        %1286 = vrot.lane.b32.xlu0 %v688, 40
        %v1287 = vpop.permute.xlu0 %1286
        %1288 = vrot.lane.b32.xlu0 %v690, 40
        %v1289 = vpop.permute.xlu0 %1288
        %1290 = vrot.lane.b32.xlu0 %v689, 40
        %v1291 = vpop.permute.xlu0 %1290
        %1292 = vrot.lane.b32.xlu0 %v1187, 40
        %v1293 = vpop.permute.xlu0 %1292
        %1294 = vrot.lane.b32.xlu0 %v1189, 40
        %v1295 = vpop.permute.xlu0 %1294
        %1296 = vrot.lane.b32.xlu0 %v1188, 40
        %v1297 = vpop.permute.xlu0 %1296
        %1355 = vrot.lane.b32.xlu0 %v223, 48
        %v1356 = vpop.permute.xlu0 %1355
        %1357 = vrot.lane.b32.xlu0 %v224, 48
        %v1358 = vpop.permute.xlu0 %1357
        %1359 = vrot.lane.b32.xlu0 %v225, 48
        %v1360 = vpop.permute.xlu0 %1359
        %1361 = vrot.lane.b32.xlu0 %v226, 48
        %v1362 = vpop.permute.xlu0 %1361
        %1363 = vrot.lane.b32.xlu0 %v227, 48
        %v1364 = vpop.permute.xlu0 %1363
        %1365 = vrot.lane.b32.xlu0 %v228, 48
        %v1366 = vpop.permute.xlu0 %1365
        %1367 = vrot.lane.b32.xlu0 %v229, 48
        %v1368 = vpop.permute.xlu0 %1367
        %1369 = vrot.lane.b32.xlu0 %v230, 48
        %v1370 = vpop.permute.xlu0 %1369
        %1371 = vrot.lane.b32.xlu0 %v231, 48
        %v1372 = vpop.permute.xlu0 %1371
        %1373 = vrot.lane.b32.xlu0 %v232, 48
        %v1374 = vpop.permute.xlu0 %1373
        %1375 = vrot.lane.b32.xlu0 %v233, 48
        %v1376 = vpop.permute.xlu0 %1375
        %1377 = vrot.lane.b32.xlu0 %v234, 48
        %v1378 = vpop.permute.xlu0 %1377
        %1379 = vrot.lane.b32.xlu0 %v235, 48
        %v1380 = vpop.permute.xlu0 %1379
        %1381 = vrot.lane.b32.xlu0 %v236, 48
        %v1382 = vpop.permute.xlu0 %1381
        %1383 = vrot.lane.b32.xlu0 %v237, 48
        %v1384 = vpop.permute.xlu0 %1383
        %1385 = vrot.lane.b32.xlu0 %v238, 48
        %v1386 = vpop.permute.xlu0 %1385
        %1387 = vrot.lane.b32.xlu0 %v239, 48
        %v1388 = vpop.permute.xlu0 %1387
        %1389 = vrot.lane.b32.xlu0 %v240, 48
        %v1390 = vpop.permute.xlu0 %1389
        %1391 = vrot.lane.b32.xlu0 %v241, 48
        %v1392 = vpop.permute.xlu0 %1391
        %1393 = vrot.lane.b32.xlu0 %v242, 48
        %v1394 = vpop.permute.xlu0 %1393
        %1395 = vrot.lane.b32.xlu0 %v243, 48
        %v1396 = vpop.permute.xlu0 %1395
        %1397 = vrot.lane.b32.xlu0 %v244, 48
        %v1398 = vpop.permute.xlu0 %1397
        %1399 = vrot.lane.b32.xlu0 %v245, 48
        %v1400 = vpop.permute.xlu0 %1399
        %1401 = vrot.lane.b32.xlu0 %v246, 48
        %v1402 = vpop.permute.xlu0 %1401
        %1403 = vrot.lane.b32.xlu0 %v247, 48
        %v1404 = vpop.permute.xlu0 %1403
        %1405 = vrot.lane.b32.xlu0 %v248, 48
        %v1406 = vpop.permute.xlu0 %1405
        %1407 = vrot.lane.b32.xlu0 %v249, 48
        %v1408 = vpop.permute.xlu0 %1407
        %1409 = vrot.lane.b32.xlu0 %v250, 48
        %v1410 = vpop.permute.xlu0 %1409
        %1411 = vrot.lane.b32.xlu0 %v251, 48
        %v1412 = vpop.permute.xlu0 %1411
        %1413 = vrot.lane.b32.xlu0 %v252, 48
        %v1414 = vpop.permute.xlu0 %1413
        %1415 = vrot.lane.b32.xlu0 %v253, 48
        %v1416 = vpop.permute.xlu0 %1415
        %1417 = vrot.lane.b32.xlu0 %v254, 48
        %v1418 = vpop.permute.xlu0 %1417
        %1419 = vrot.lane.b32.xlu0 %v255, 48
        %v1420 = vpop.permute.xlu0 %1419
        %1421 = vrot.lane.b32.xlu0 %v256, 48
        %v1422 = vpop.permute.xlu0 %1421
        %1423 = vrot.lane.b32.xlu0 %v257, 48
        %v1424 = vpop.permute.xlu0 %1423
        %1425 = vrot.lane.b32.xlu0 %v258, 48
        %v1426 = vpop.permute.xlu0 %1425
        %1427 = vrot.lane.b32.xlu0 %v259, 48
        %v1428 = vpop.permute.xlu0 %1427
        %1429 = vrot.lane.b32.xlu0 %v260, 48
        %v1430 = vpop.permute.xlu0 %1429
        %1431 = vrot.lane.b32.xlu0 %v261, 48
        %v1432 = vpop.permute.xlu0 %1431
        %1433 = vrot.lane.b32.xlu0 %v262, 48
        %v1434 = vpop.permute.xlu0 %1433
        %1435 = vrot.lane.b32.xlu0 %v263, 48
        %v1436 = vpop.permute.xlu0 %1435
        %1437 = vrot.lane.b32.xlu0 %v264, 48
        %v1438 = vpop.permute.xlu0 %1437
        %1439 = vrot.lane.b32.xlu0 %v265, 48
        %v1440 = vpop.permute.xlu0 %1439
        %1441 = vrot.lane.b32.xlu0 %v266, 48
        %v1442 = vpop.permute.xlu0 %1441
        %1443 = vrot.lane.b32.xlu0 %v267, 48
        %v1444 = vpop.permute.xlu0 %1443
        %1445 = vrot.lane.b32.xlu0 %v268, 48
        %v1446 = vpop.permute.xlu0 %1445
        %1447 = vrot.lane.b32.xlu0 %v269, 48
        %v1448 = vpop.permute.xlu0 %1447
        %1449 = vrot.lane.b32.xlu0 %v270, 48
        %v1450 = vpop.permute.xlu0 %1449
        %1451 = vrot.lane.b32.xlu0 %v271, 48
        %v1452 = vpop.permute.xlu0 %1451
        %1453 = vrot.lane.b32.xlu0 %v272, 48
        %v1454 = vpop.permute.xlu0 %1453
        %1455 = vrot.lane.b32.xlu0 %v273, 48
        %v1456 = vpop.permute.xlu0 %1455
        %1457 = vrot.lane.b32.xlu0 %v274, 48
        %v1458 = vpop.permute.xlu0 %1457
        %1459 = vrot.lane.b32.xlu0 %v275, 48
        %v1460 = vpop.permute.xlu0 %1459
        %1461 = vrot.lane.b32.xlu0 %v276, 48
        %v1462 = vpop.permute.xlu0 %1461
        %v1517 = vrot.slane %v274, 1
        %v1518 = vrot.slane %v275, 1
        %v1519 = vsel %vm347, %v1517, %v1518
        %v1520 = vrot.slane %v276, 1
        %v1521 = vsel %vm347, %v1518, %v1520
        %1522 = vrot.lane.b32.xlu0 %v360, 56
        %v1523 = vpop.permute.xlu0 %1522
        %1524 = vrot.lane.b32.xlu0 %v362, 56
        %v1525 = vpop.permute.xlu0 %1524
        %1526 = vrot.lane.b32.xlu0 %v361, 56
        %v1527 = vpop.permute.xlu0 %1526
        %1528 = vrot.lane.b32.xlu0 %v365, 56
        %v1529 = vpop.permute.xlu0 %1528
        %1530 = vrot.lane.b32.xlu0 %v367, 56
        %v1531 = vpop.permute.xlu0 %1530
        %1532 = vrot.lane.b32.xlu0 %v366, 56
        %v1533 = vpop.permute.xlu0 %1532
        %1534 = vrot.lane.b32.xlu0 %v370, 56
        %v1535 = vpop.permute.xlu0 %1534
        %1536 = vrot.lane.b32.xlu0 %v372, 56
        %v1537 = vpop.permute.xlu0 %1536
        %1538 = vrot.lane.b32.xlu0 %v371, 56
        %v1539 = vpop.permute.xlu0 %1538
        %1540 = vrot.lane.b32.xlu0 %v375, 56
        %v1541 = vpop.permute.xlu0 %1540
        %1542 = vrot.lane.b32.xlu0 %v377, 56
        %v1543 = vpop.permute.xlu0 %1542
        %1544 = vrot.lane.b32.xlu0 %v376, 56
        %v1545 = vpop.permute.xlu0 %1544
        %1546 = vrot.lane.b32.xlu0 %v380, 56
        %v1547 = vpop.permute.xlu0 %1546
        %1548 = vrot.lane.b32.xlu0 %v382, 56
        %v1549 = vpop.permute.xlu0 %1548
        %1550 = vrot.lane.b32.xlu0 %v381, 56
        %v1551 = vpop.permute.xlu0 %1550
        %1552 = vrot.lane.b32.xlu0 %v385, 56
        %v1553 = vpop.permute.xlu0 %1552
        %1554 = vrot.lane.b32.xlu0 %v387, 56
        %v1555 = vpop.permute.xlu0 %1554
        %1556 = vrot.lane.b32.xlu0 %v386, 56
        %v1557 = vpop.permute.xlu0 %1556
        %1558 = vrot.lane.b32.xlu0 %v390, 56
        %v1559 = vpop.permute.xlu0 %1558
        %1560 = vrot.lane.b32.xlu0 %v392, 56
        %v1561 = vpop.permute.xlu0 %1560
        %1562 = vrot.lane.b32.xlu0 %v391, 56
        %v1563 = vpop.permute.xlu0 %1562
        %1564 = vrot.lane.b32.xlu0 %v395, 56
        %v1565 = vpop.permute.xlu0 %1564
        %1566 = vrot.lane.b32.xlu0 %v397, 56
        %v1567 = vpop.permute.xlu0 %1566
        %1568 = vrot.lane.b32.xlu0 %v396, 56
        %v1569 = vpop.permute.xlu0 %1568
        %1570 = vrot.lane.b32.xlu0 %v400, 56
        %v1571 = vpop.permute.xlu0 %1570
        %1572 = vrot.lane.b32.xlu0 %v402, 56
        %v1573 = vpop.permute.xlu0 %1572
        %1574 = vrot.lane.b32.xlu0 %v401, 56
        %v1575 = vpop.permute.xlu0 %1574
        %1576 = vrot.lane.b32.xlu0 %v405, 56
        %v1577 = vpop.permute.xlu0 %1576
        %1578 = vrot.lane.b32.xlu0 %v407, 56
        %v1579 = vpop.permute.xlu0 %1578
        %1580 = vrot.lane.b32.xlu0 %v406, 56
        %v1581 = vpop.permute.xlu0 %1580
        %1582 = vrot.lane.b32.xlu0 %v410, 56
        %v1583 = vpop.permute.xlu0 %1582
        %1584 = vrot.lane.b32.xlu0 %v412, 56
        %v1585 = vpop.permute.xlu0 %1584
        %1586 = vrot.lane.b32.xlu0 %v411, 56
        %v1587 = vpop.permute.xlu0 %1586
        %1588 = vrot.lane.b32.xlu0 %v415, 56
        %v1589 = vpop.permute.xlu0 %1588
        %1590 = vrot.lane.b32.xlu0 %v417, 56
        %v1591 = vpop.permute.xlu0 %1590
        %1592 = vrot.lane.b32.xlu0 %v416, 56
        %v1593 = vpop.permute.xlu0 %1592
        %1594 = vrot.lane.b32.xlu0 %v420, 56
        %v1595 = vpop.permute.xlu0 %1594
        %1596 = vrot.lane.b32.xlu0 %v422, 56
        %v1597 = vpop.permute.xlu0 %1596
        %1598 = vrot.lane.b32.xlu0 %v421, 56
        %v1599 = vpop.permute.xlu0 %1598
        %1600 = vrot.lane.b32.xlu0 %v425, 56
        %v1601 = vpop.permute.xlu0 %1600
        %1602 = vrot.lane.b32.xlu0 %v427, 56
        %v1603 = vpop.permute.xlu0 %1602
        %1604 = vrot.lane.b32.xlu0 %v426, 56
        %v1605 = vpop.permute.xlu0 %1604
        %1606 = vrot.lane.b32.xlu0 %v430, 56
        %v1607 = vpop.permute.xlu0 %1606
        %1608 = vrot.lane.b32.xlu0 %v432, 56
        %v1609 = vpop.permute.xlu0 %1608
        %1610 = vrot.lane.b32.xlu0 %v431, 56
        %v1611 = vpop.permute.xlu0 %1610
        %1612 = vrot.lane.b32.xlu0 %v435, 56
        %v1613 = vpop.permute.xlu0 %1612
        %1614 = vrot.lane.b32.xlu0 %v437, 56
        %v1615 = vpop.permute.xlu0 %1614
        %1616 = vrot.lane.b32.xlu0 %v436, 56
        %v1617 = vpop.permute.xlu0 %1616
        %1618 = vrot.lane.b32.xlu0 %v1020, 56
        %v1619 = vpop.permute.xlu0 %1618
        %1620 = vrot.lane.b32.xlu0 %v1022, 56
        %v1621 = vpop.permute.xlu0 %1620
        %1622 = vrot.lane.b32.xlu0 %v1021, 56
        %v1623 = vpop.permute.xlu0 %1622
        %1624 = vrot.lane.b32.xlu0 %v1519, 56
        %v1625 = vpop.permute.xlu0 %1624
        %1626 = vrot.lane.b32.xlu0 %v1521, 56
        %v1627 = vpop.permute.xlu0 %1626
        %1628 = vrot.lane.b32.xlu0 %v1520, 56
        %v1629 = vpop.permute.xlu0 %1628
        %v1684 = vrot.slane %v274, 2
        %v1685 = vrot.slane %v275, 2
        %v1686 = vsel %vm600, %v1684, %v1685
        %v1687 = vrot.slane %v276, 2
        %v1688 = vsel %vm600, %v1685, %v1687
        %1689 = vrot.lane.b32.xlu0 %v613, 64
        %v1690 = vpop.permute.xlu0 %1689
        %1691 = vrot.lane.b32.xlu0 %v615, 64
        %v1692 = vpop.permute.xlu0 %1691
        %1693 = vrot.lane.b32.xlu0 %v614, 64
        %v1694 = vpop.permute.xlu0 %1693
        %1695 = vrot.lane.b32.xlu0 %v618, 64
        %v1696 = vpop.permute.xlu0 %1695
        %1697 = vrot.lane.b32.xlu0 %v620, 64
        %v1698 = vpop.permute.xlu0 %1697
        %1699 = vrot.lane.b32.xlu0 %v619, 64
        %v1700 = vpop.permute.xlu0 %1699
        %1701 = vrot.lane.b32.xlu0 %v623, 64
        %v1702 = vpop.permute.xlu0 %1701
        %1703 = vrot.lane.b32.xlu0 %v625, 64
        %v1704 = vpop.permute.xlu0 %1703
        %1705 = vrot.lane.b32.xlu0 %v624, 64
        %v1706 = vpop.permute.xlu0 %1705
        %1707 = vrot.lane.b32.xlu0 %v628, 64
        %v1708 = vpop.permute.xlu0 %1707
        %1709 = vrot.lane.b32.xlu0 %v630, 64
        %v1710 = vpop.permute.xlu0 %1709
        %1711 = vrot.lane.b32.xlu0 %v629, 64
        %v1712 = vpop.permute.xlu0 %1711
        %1713 = vrot.lane.b32.xlu0 %v633, 64
        %v1714 = vpop.permute.xlu0 %1713
        %1715 = vrot.lane.b32.xlu0 %v635, 64
        %v1716 = vpop.permute.xlu0 %1715
        %1717 = vrot.lane.b32.xlu0 %v634, 64
        %v1718 = vpop.permute.xlu0 %1717
        %1719 = vrot.lane.b32.xlu0 %v638, 64
        %v1720 = vpop.permute.xlu0 %1719
        %1721 = vrot.lane.b32.xlu0 %v640, 64
        %v1722 = vpop.permute.xlu0 %1721
        %1723 = vrot.lane.b32.xlu0 %v639, 64
        %v1724 = vpop.permute.xlu0 %1723
        %1725 = vrot.lane.b32.xlu0 %v643, 64
        %v1726 = vpop.permute.xlu0 %1725
        %1727 = vrot.lane.b32.xlu0 %v645, 64
        %v1728 = vpop.permute.xlu0 %1727
        %1729 = vrot.lane.b32.xlu0 %v644, 64
        %v1730 = vpop.permute.xlu0 %1729
        %1731 = vrot.lane.b32.xlu0 %v648, 64
        %v1732 = vpop.permute.xlu0 %1731
        %1733 = vrot.lane.b32.xlu0 %v650, 64
        %v1734 = vpop.permute.xlu0 %1733
        %1735 = vrot.lane.b32.xlu0 %v649, 64
        %v1736 = vpop.permute.xlu0 %1735
        %1737 = vrot.lane.b32.xlu0 %v653, 64
        %v1738 = vpop.permute.xlu0 %1737
        %1739 = vrot.lane.b32.xlu0 %v655, 64
        %v1740 = vpop.permute.xlu0 %1739
        %1741 = vrot.lane.b32.xlu0 %v654, 64
        %v1742 = vpop.permute.xlu0 %1741
        %1743 = vrot.lane.b32.xlu0 %v658, 64
        %v1744 = vpop.permute.xlu0 %1743
        %1745 = vrot.lane.b32.xlu0 %v660, 64
        %v1746 = vpop.permute.xlu0 %1745
        %1747 = vrot.lane.b32.xlu0 %v659, 64
        %v1748 = vpop.permute.xlu0 %1747
        %1749 = vrot.lane.b32.xlu0 %v663, 64
        %v1750 = vpop.permute.xlu0 %1749
        %1751 = vrot.lane.b32.xlu0 %v665, 64
        %v1752 = vpop.permute.xlu0 %1751
        %1753 = vrot.lane.b32.xlu0 %v664, 64
        %v1754 = vpop.permute.xlu0 %1753
        %1755 = vrot.lane.b32.xlu0 %v668, 64
        %v1756 = vpop.permute.xlu0 %1755
        %1757 = vrot.lane.b32.xlu0 %v670, 64
        %v1758 = vpop.permute.xlu0 %1757
        %1759 = vrot.lane.b32.xlu0 %v669, 64
        %v1760 = vpop.permute.xlu0 %1759
        %1761 = vrot.lane.b32.xlu0 %v673, 64
        %v1762 = vpop.permute.xlu0 %1761
        %1763 = vrot.lane.b32.xlu0 %v675, 64
        %v1764 = vpop.permute.xlu0 %1763
        %1765 = vrot.lane.b32.xlu0 %v674, 64
        %v1766 = vpop.permute.xlu0 %1765
        %1767 = vrot.lane.b32.xlu0 %v678, 64
        %v1768 = vpop.permute.xlu0 %1767
        %1769 = vrot.lane.b32.xlu0 %v680, 64
        %v1770 = vpop.permute.xlu0 %1769
        %1771 = vrot.lane.b32.xlu0 %v679, 64
        %v1772 = vpop.permute.xlu0 %1771
        %1773 = vrot.lane.b32.xlu0 %v683, 64
        %v1774 = vpop.permute.xlu0 %1773
        %1775 = vrot.lane.b32.xlu0 %v685, 64
        %v1776 = vpop.permute.xlu0 %1775
        %1777 = vrot.lane.b32.xlu0 %v684, 64
        %v1778 = vpop.permute.xlu0 %1777
        %1779 = vrot.lane.b32.xlu0 %v688, 64
        %v1780 = vpop.permute.xlu0 %1779
        %1781 = vrot.lane.b32.xlu0 %v690, 64
        %v1782 = vpop.permute.xlu0 %1781
        %1783 = vrot.lane.b32.xlu0 %v689, 64
        %v1784 = vpop.permute.xlu0 %1783
        %1785 = vrot.lane.b32.xlu0 %v1187, 64
        %v1786 = vpop.permute.xlu0 %1785
        %1787 = vrot.lane.b32.xlu0 %v1189, 64
        %v1788 = vpop.permute.xlu0 %1787
        %1789 = vrot.lane.b32.xlu0 %v1188, 64
        %v1790 = vpop.permute.xlu0 %1789
        %1791 = vrot.lane.b32.xlu0 %v1686, 64
        %v1792 = vpop.permute.xlu0 %1791
        %1793 = vrot.lane.b32.xlu0 %v1688, 64
        %v1794 = vpop.permute.xlu0 %1793
        %1795 = vrot.lane.b32.xlu0 %v1687, 64
        %v1796 = vpop.permute.xlu0 %1795
        %vm1851 = vcmask 64512
        %v1852 = vsel %vm1851, %v217, %v439
        %v1853 = vsel %vm1851, %v218, %v441
        %v1854 = vsel %vm1851, %v219, %v443
        %v1855 = vsel %vm1851, %v220, %v445
        %v1856 = vsel %vm1851, %v221, %v447
        %v1857 = vsel %vm1851, %v222, %v449
        %v1858 = vsel %vm1851, %v223, %v451
        %v1859 = vsel %vm1851, %v224, %v453
        %v1860 = vsel %vm1851, %v225, %v455
        %v1861 = vsel %vm1851, %v226, %v457
        %v1862 = vsel %vm1851, %v227, %v459
        %v1863 = vsel %vm1851, %v228, %v461
        %v1864 = vsel %vm1851, %v229, %v463
        %v1865 = vsel %vm1851, %v230, %v465
        %v1866 = vsel %vm1851, %v231, %v467
        %v1867 = vsel %vm1851, %v232, %v469
        %v1868 = vsel %vm1851, %v233, %v471
        %v1869 = vsel %vm1851, %v234, %v473
        %v1870 = vsel %vm1851, %v235, %v475
        %v1871 = vsel %vm1851, %v236, %v477
        %v1872 = vsel %vm1851, %v237, %v479
        %v1873 = vsel %vm1851, %v238, %v481
        %v1874 = vsel %vm1851, %v239, %v483
        %v1875 = vsel %vm1851, %v240, %v485
        %v1876 = vsel %vm1851, %v241, %v487
        %v1877 = vsel %vm1851, %v242, %v489
        %v1878 = vsel %vm1851, %v243, %v491
        %v1879 = vsel %vm1851, %v244, %v493
        %v1880 = vsel %vm1851, %v245, %v495
        %v1881 = vsel %vm1851, %v246, %v497
        %v1882 = vsel %vm1851, %v247, %v499
        %v1883 = vsel %vm1851, %v248, %v501
        %v1884 = vsel %vm1851, %v249, %v503
        %v1885 = vsel %vm1851, %v250, %v505
        %v1886 = vsel %vm1851, %v251, %v507
        %v1887 = vsel %vm1851, %v252, %v509
        %v1888 = vsel %vm1851, %v253, %v511
        %v1889 = vsel %vm1851, %v254, %v513
        %v1890 = vsel %vm1851, %v255, %v515
        %v1891 = vsel %vm1851, %v256, %v517
        %v1892 = vsel %vm1851, %v257, %v519
        %v1893 = vsel %vm1851, %v258, %v521
        %v1894 = vsel %vm1851, %v259, %v523
        %v1895 = vsel %vm1851, %v260, %v525
        %v1896 = vsel %vm1851, %v261, %v527
        %v1897 = vsel %vm1851, %v262, %v529
        %v1898 = vsel %vm1851, %v263, %v531
        %v1899 = vsel %vm1851, %v264, %v533
        %v1900 = vsel %vm1851, %v265, %v535
        %v1901 = vsel %vm1851, %v266, %v537
        %v1902 = vsel %vm1851, %v267, %v539
        %v1903 = vsel %vm1851, %v268, %v541
        %v1904 = vsel %vm1851, %v269, %v543
        %v1905 = vsel %vm1851, %v270, %v545
        %vm1906 = vcmask 130048
        %v1907 = vsel %vm1906, %v1852, %v692
        %v1908 = vsel %vm1906, %v1853, %v694
        %v1909 = vsel %vm1906, %v1854, %v696
        %v1910 = vsel %vm1906, %v1855, %v698
        %v1911 = vsel %vm1906, %v1856, %v700
        %v1912 = vsel %vm1906, %v1857, %v702
        %v1913 = vsel %vm1906, %v1858, %v704
        %v1914 = vsel %vm1906, %v1859, %v706
        %v1915 = vsel %vm1906, %v1860, %v708
        %v1916 = vsel %vm1906, %v1861, %v710
        %v1917 = vsel %vm1906, %v1862, %v712
        %v1918 = vsel %vm1906, %v1863, %v714
        %v1919 = vsel %vm1906, %v1864, %v716
        %v1920 = vsel %vm1906, %v1865, %v718
        %v1921 = vsel %vm1906, %v1866, %v720
        %v1922 = vsel %vm1906, %v1867, %v722
        %v1923 = vsel %vm1906, %v1868, %v724
        %v1924 = vsel %vm1906, %v1869, %v726
        %v1925 = vsel %vm1906, %v1870, %v728
        %v1926 = vsel %vm1906, %v1871, %v730
        %v1927 = vsel %vm1906, %v1872, %v732
        %v1928 = vsel %vm1906, %v1873, %v734
        %v1929 = vsel %vm1906, %v1874, %v736
        %v1930 = vsel %vm1906, %v1875, %v738
        %v1931 = vsel %vm1906, %v1876, %v740
        %v1932 = vsel %vm1906, %v1877, %v742
        %v1933 = vsel %vm1906, %v1878, %v744
        %v1934 = vsel %vm1906, %v1879, %v746
        %v1935 = vsel %vm1906, %v1880, %v748
        %v1936 = vsel %vm1906, %v1881, %v750
        %v1937 = vsel %vm1906, %v1882, %v752
        %v1938 = vsel %vm1906, %v1883, %v754
        %v1939 = vsel %vm1906, %v1884, %v756
        %v1940 = vsel %vm1906, %v1885, %v758
        %v1941 = vsel %vm1906, %v1886, %v760
        %v1942 = vsel %vm1906, %v1887, %v762
        %v1943 = vsel %vm1906, %v1888, %v764
        %v1944 = vsel %vm1906, %v1889, %v766
        %v1945 = vsel %vm1906, %v1890, %v768
        %v1946 = vsel %vm1906, %v1891, %v770
        %v1947 = vsel %vm1906, %v1892, %v772
        %v1948 = vsel %vm1906, %v1893, %v774
        %v1949 = vsel %vm1906, %v1894, %v776
        %v1950 = vsel %vm1906, %v1895, %v778
        %v1951 = vsel %vm1906, %v1896, %v780
        %v1952 = vsel %vm1906, %v1897, %v782
        %v1953 = vsel %vm1906, %v1898, %v784
        %v1954 = vsel %vm1906, %v1899, %v786
        %v1955 = vsel %vm1906, %v1900, %v788
        %v1956 = vsel %vm1906, %v1901, %v790
        %v1957 = vsel %vm1906, %v1902, %v792
        %v1958 = vsel %vm1906, %v1903, %v794
        %v1959 = vsel %vm1906, %v1904, %v796
        %v1960 = vsel %vm1906, %v1905, %v798
        %vm1961 = vcmask 195584
        %v1962 = vsel %vm1961, %v1907, %v857
        %v1963 = vsel %vm1961, %v1908, %v859
        %v1964 = vsel %vm1961, %v1909, %v861
        %v1965 = vsel %vm1961, %v1910, %v863
        %v1966 = vsel %vm1961, %v1911, %v865
        %v1967 = vsel %vm1961, %v1912, %v867
        %v1968 = vsel %vm1961, %v1913, %v869
        %v1969 = vsel %vm1961, %v1914, %v871
        %v1970 = vsel %vm1961, %v1915, %v873
        %v1971 = vsel %vm1961, %v1916, %v875
        %v1972 = vsel %vm1961, %v1917, %v877
        %v1973 = vsel %vm1961, %v1918, %v879
        %v1974 = vsel %vm1961, %v1919, %v881
        %v1975 = vsel %vm1961, %v1920, %v883
        %v1976 = vsel %vm1961, %v1921, %v885
        %v1977 = vsel %vm1961, %v1922, %v887
        %v1978 = vsel %vm1961, %v1923, %v889
        %v1979 = vsel %vm1961, %v1924, %v891
        %v1980 = vsel %vm1961, %v1925, %v893
        %v1981 = vsel %vm1961, %v1926, %v895
        %v1982 = vsel %vm1961, %v1927, %v897
        %v1983 = vsel %vm1961, %v1928, %v899
        %v1984 = vsel %vm1961, %v1929, %v901
        %v1985 = vsel %vm1961, %v1930, %v903
        %v1986 = vsel %vm1961, %v1931, %v905
        %v1987 = vsel %vm1961, %v1932, %v907
        %v1988 = vsel %vm1961, %v1933, %v909
        %v1989 = vsel %vm1961, %v1934, %v911
        %v1990 = vsel %vm1961, %v1935, %v913
        %v1991 = vsel %vm1961, %v1936, %v915
        %v1992 = vsel %vm1961, %v1937, %v917
        %v1993 = vsel %vm1961, %v1938, %v919
        %v1994 = vsel %vm1961, %v1939, %v921
        %v1995 = vsel %vm1961, %v1940, %v923
        %v1996 = vsel %vm1961, %v1941, %v925
        %v1997 = vsel %vm1961, %v1942, %v927
        %v1998 = vsel %vm1961, %v1943, %v929
        %v1999 = vsel %vm1961, %v1944, %v931
        %v2000 = vsel %vm1961, %v1945, %v933
        %v2001 = vsel %vm1961, %v1946, %v935
        %v2002 = vsel %vm1961, %v1947, %v937
        %v2003 = vsel %vm1961, %v1948, %v939
        %v2004 = vsel %vm1961, %v1949, %v941
        %v2005 = vsel %vm1961, %v1950, %v943
        %v2006 = vsel %vm1961, %v1951, %v945
        %v2007 = vsel %vm1961, %v1952, %v947
        %v2008 = vsel %vm1961, %v1953, %v949
        %v2009 = vsel %vm1961, %v1954, %v951
        %v2010 = vsel %vm1961, %v1955, %v953
        %v2011 = vsel %vm1961, %v1956, %v955
        %v2012 = vsel %vm1961, %v1957, %v957
        %v2013 = vsel %vm1961, %v1958, %v959
        %v2014 = vsel %vm1961, %v1959, %v961
        %v2015 = vsel %vm1961, %v1960, %v963
        %vm2016 = vcmask 261120
        %v2017 = vsel %vm2016, %v1962, %v1024
        %v2018 = vsel %vm2016, %v1963, %v1026
        %v2019 = vsel %vm2016, %v1964, %v1028
        %v2020 = vsel %vm2016, %v1965, %v1030
        %v2021 = vsel %vm2016, %v1966, %v1032
        %v2022 = vsel %vm2016, %v1967, %v1034
        %v2023 = vsel %vm2016, %v1968, %v1036
        %v2024 = vsel %vm2016, %v1969, %v1038
        %v2025 = vsel %vm2016, %v1970, %v1040
        %v2026 = vsel %vm2016, %v1971, %v1042
        %v2027 = vsel %vm2016, %v1972, %v1044
        %v2028 = vsel %vm2016, %v1973, %v1046
        %v2029 = vsel %vm2016, %v1974, %v1048
        %v2030 = vsel %vm2016, %v1975, %v1050
        %v2031 = vsel %vm2016, %v1976, %v1052
        %v2032 = vsel %vm2016, %v1977, %v1054
        %v2033 = vsel %vm2016, %v1978, %v1056
        %v2034 = vsel %vm2016, %v1979, %v1058
        %v2035 = vsel %vm2016, %v1980, %v1060
        %v2036 = vsel %vm2016, %v1981, %v1062
        %v2037 = vsel %vm2016, %v1982, %v1064
        %v2038 = vsel %vm2016, %v1983, %v1066
        %v2039 = vsel %vm2016, %v1984, %v1068
        %v2040 = vsel %vm2016, %v1985, %v1070
        %v2041 = vsel %vm2016, %v1986, %v1072
        %v2042 = vsel %vm2016, %v1987, %v1074
        %v2043 = vsel %vm2016, %v1988, %v1076
        %v2044 = vsel %vm2016, %v1989, %v1078
        %v2045 = vsel %vm2016, %v1990, %v1080
        %v2046 = vsel %vm2016, %v1991, %v1082
        %v2047 = vsel %vm2016, %v1992, %v1084
        %v2048 = vsel %vm2016, %v1993, %v1086
        %v2049 = vsel %vm2016, %v1994, %v1088
        %v2050 = vsel %vm2016, %v1995, %v1090
        %v2051 = vsel %vm2016, %v1996, %v1092
        %v2052 = vsel %vm2016, %v1997, %v1094
        %v2053 = vsel %vm2016, %v1998, %v1096
        %v2054 = vsel %vm2016, %v1999, %v1098
        %v2055 = vsel %vm2016, %v2000, %v1100
        %v2056 = vsel %vm2016, %v2001, %v1102
        %v2057 = vsel %vm2016, %v2002, %v1104
        %v2058 = vsel %vm2016, %v2003, %v1106
        %v2059 = vsel %vm2016, %v2004, %v1108
        %v2060 = vsel %vm2016, %v2005, %v1110
        %v2061 = vsel %vm2016, %v2006, %v1112
        %v2062 = vsel %vm2016, %v2007, %v1114
        %v2063 = vsel %vm2016, %v2008, %v1116
        %v2064 = vsel %vm2016, %v2009, %v1118
        %v2065 = vsel %vm2016, %v2010, %v1120
        %v2066 = vsel %vm2016, %v2011, %v1122
        %v2067 = vsel %vm2016, %v2012, %v1124
        %v2068 = vsel %vm2016, %v2013, %v1126
        %v2069 = vsel %vm2016, %v2014, %v1128
        %v2070 = vsel %vm2016, %v2015, %v1130
        %vm2071 = vcmask 326656
        %v2072 = vsel %vm2071, %v2017, %v1191
        %v2073 = vsel %vm2071, %v2018, %v1193
        %v2074 = vsel %vm2071, %v2019, %v1195
        %v2075 = vsel %vm2071, %v2020, %v1197
        %v2076 = vsel %vm2071, %v2021, %v1199
        %v2077 = vsel %vm2071, %v2022, %v1201
        %v2078 = vsel %vm2071, %v2023, %v1203
        %v2079 = vsel %vm2071, %v2024, %v1205
        %v2080 = vsel %vm2071, %v2025, %v1207
        %v2081 = vsel %vm2071, %v2026, %v1209
        %v2082 = vsel %vm2071, %v2027, %v1211
        %v2083 = vsel %vm2071, %v2028, %v1213
        %v2084 = vsel %vm2071, %v2029, %v1215
        %v2085 = vsel %vm2071, %v2030, %v1217
        %v2086 = vsel %vm2071, %v2031, %v1219
        %v2087 = vsel %vm2071, %v2032, %v1221
        %v2088 = vsel %vm2071, %v2033, %v1223
        %v2089 = vsel %vm2071, %v2034, %v1225
        %v2090 = vsel %vm2071, %v2035, %v1227
        %v2091 = vsel %vm2071, %v2036, %v1229
        %v2092 = vsel %vm2071, %v2037, %v1231
        %v2093 = vsel %vm2071, %v2038, %v1233
        %v2094 = vsel %vm2071, %v2039, %v1235
        %v2095 = vsel %vm2071, %v2040, %v1237
        %v2096 = vsel %vm2071, %v2041, %v1239
        %v2097 = vsel %vm2071, %v2042, %v1241
        %v2098 = vsel %vm2071, %v2043, %v1243
        %v2099 = vsel %vm2071, %v2044, %v1245
        %v2100 = vsel %vm2071, %v2045, %v1247
        %v2101 = vsel %vm2071, %v2046, %v1249
        %v2102 = vsel %vm2071, %v2047, %v1251
        %v2103 = vsel %vm2071, %v2048, %v1253
        %v2104 = vsel %vm2071, %v2049, %v1255
        %v2105 = vsel %vm2071, %v2050, %v1257
        %v2106 = vsel %vm2071, %v2051, %v1259
        %v2107 = vsel %vm2071, %v2052, %v1261
        %v2108 = vsel %vm2071, %v2053, %v1263
        %v2109 = vsel %vm2071, %v2054, %v1265
        %v2110 = vsel %vm2071, %v2055, %v1267
        %v2111 = vsel %vm2071, %v2056, %v1269
        %v2112 = vsel %vm2071, %v2057, %v1271
        %v2113 = vsel %vm2071, %v2058, %v1273
        %v2114 = vsel %vm2071, %v2059, %v1275
        %v2115 = vsel %vm2071, %v2060, %v1277
        %v2116 = vsel %vm2071, %v2061, %v1279
        %v2117 = vsel %vm2071, %v2062, %v1281
        %v2118 = vsel %vm2071, %v2063, %v1283
        %v2119 = vsel %vm2071, %v2064, %v1285
        %v2120 = vsel %vm2071, %v2065, %v1287
        %v2121 = vsel %vm2071, %v2066, %v1289
        %v2122 = vsel %vm2071, %v2067, %v1291
        %v2123 = vsel %vm2071, %v2068, %v1293
        %v2124 = vsel %vm2071, %v2069, %v1295
        %v2125 = vsel %vm2071, %v2070, %v1297
        %vm2126 = vcmask 392192
        %v2127 = vsel %vm2126, %v2072, %v1356
        %v2128 = vsel %vm2126, %v2073, %v1358
        %v2129 = vsel %vm2126, %v2074, %v1360
        %v2130 = vsel %vm2126, %v2075, %v1362
        %v2131 = vsel %vm2126, %v2076, %v1364
        %v2132 = vsel %vm2126, %v2077, %v1366
        %v2133 = vsel %vm2126, %v2078, %v1368
        %v2134 = vsel %vm2126, %v2079, %v1370
        %v2135 = vsel %vm2126, %v2080, %v1372
        %v2136 = vsel %vm2126, %v2081, %v1374
        %v2137 = vsel %vm2126, %v2082, %v1376
        %v2138 = vsel %vm2126, %v2083, %v1378
        %v2139 = vsel %vm2126, %v2084, %v1380
        %v2140 = vsel %vm2126, %v2085, %v1382
        %v2141 = vsel %vm2126, %v2086, %v1384
        %v2142 = vsel %vm2126, %v2087, %v1386
        %v2143 = vsel %vm2126, %v2088, %v1388
        %v2144 = vsel %vm2126, %v2089, %v1390
        %v2145 = vsel %vm2126, %v2090, %v1392
        %v2146 = vsel %vm2126, %v2091, %v1394
        %v2147 = vsel %vm2126, %v2092, %v1396
        %v2148 = vsel %vm2126, %v2093, %v1398
        %v2149 = vsel %vm2126, %v2094, %v1400
        %v2150 = vsel %vm2126, %v2095, %v1402
        %v2151 = vsel %vm2126, %v2096, %v1404
        %v2152 = vsel %vm2126, %v2097, %v1406
        %v2153 = vsel %vm2126, %v2098, %v1408
        %v2154 = vsel %vm2126, %v2099, %v1410
        %v2155 = vsel %vm2126, %v2100, %v1412
        %v2156 = vsel %vm2126, %v2101, %v1414
        %v2157 = vsel %vm2126, %v2102, %v1416
        %v2158 = vsel %vm2126, %v2103, %v1418
        %v2159 = vsel %vm2126, %v2104, %v1420
        %v2160 = vsel %vm2126, %v2105, %v1422
        %v2161 = vsel %vm2126, %v2106, %v1424
        %v2162 = vsel %vm2126, %v2107, %v1426
        %v2163 = vsel %vm2126, %v2108, %v1428
        %v2164 = vsel %vm2126, %v2109, %v1430
        %v2165 = vsel %vm2126, %v2110, %v1432
        %v2166 = vsel %vm2126, %v2111, %v1434
        %v2167 = vsel %vm2126, %v2112, %v1436
        %v2168 = vsel %vm2126, %v2113, %v1438
        %v2169 = vsel %vm2126, %v2114, %v1440
        %v2170 = vsel %vm2126, %v2115, %v1442
        %v2171 = vsel %vm2126, %v2116, %v1444
        %v2172 = vsel %vm2126, %v2117, %v1446
        %v2173 = vsel %vm2126, %v2118, %v1448
        %v2174 = vsel %vm2126, %v2119, %v1450
        %v2175 = vsel %vm2126, %v2120, %v1452
        %v2176 = vsel %vm2126, %v2121, %v1454
        %v2177 = vsel %vm2126, %v2122, %v1456
        %v2178 = vsel %vm2126, %v2123, %v1458
        %v2179 = vsel %vm2126, %v2124, %v1460
        %v2180 = vsel %vm2126, %v2125, %v1462
        %vm2181 = vcmask 457728
        %v2182 = vsel %vm2181, %v2127, %v1523
        %v2183 = vsel %vm2181, %v2128, %v1525
        %v2184 = vsel %vm2181, %v2129, %v1527
        %v2185 = vsel %vm2181, %v2130, %v1529
        %v2186 = vsel %vm2181, %v2131, %v1531
        %v2187 = vsel %vm2181, %v2132, %v1533
        %v2188 = vsel %vm2181, %v2133, %v1535
        %v2189 = vsel %vm2181, %v2134, %v1537
        %v2190 = vsel %vm2181, %v2135, %v1539
        %v2191 = vsel %vm2181, %v2136, %v1541
        %v2192 = vsel %vm2181, %v2137, %v1543
        %v2193 = vsel %vm2181, %v2138, %v1545
        %v2194 = vsel %vm2181, %v2139, %v1547
        %v2195 = vsel %vm2181, %v2140, %v1549
        %v2196 = vsel %vm2181, %v2141, %v1551
        %v2197 = vsel %vm2181, %v2142, %v1553
        %v2198 = vsel %vm2181, %v2143, %v1555
        %v2199 = vsel %vm2181, %v2144, %v1557
        %v2200 = vsel %vm2181, %v2145, %v1559
        %v2201 = vsel %vm2181, %v2146, %v1561
        %v2202 = vsel %vm2181, %v2147, %v1563
        %v2203 = vsel %vm2181, %v2148, %v1565
        %v2204 = vsel %vm2181, %v2149, %v1567
        %v2205 = vsel %vm2181, %v2150, %v1569
        %v2206 = vsel %vm2181, %v2151, %v1571
        %v2207 = vsel %vm2181, %v2152, %v1573
        %v2208 = vsel %vm2181, %v2153, %v1575
        %v2209 = vsel %vm2181, %v2154, %v1577
        %v2210 = vsel %vm2181, %v2155, %v1579
        %v2211 = vsel %vm2181, %v2156, %v1581
        %v2212 = vsel %vm2181, %v2157, %v1583
        %v2213 = vsel %vm2181, %v2158, %v1585
        %v2214 = vsel %vm2181, %v2159, %v1587
        %v2215 = vsel %vm2181, %v2160, %v1589
        %v2216 = vsel %vm2181, %v2161, %v1591
        %v2217 = vsel %vm2181, %v2162, %v1593
        %v2218 = vsel %vm2181, %v2163, %v1595
        %v2219 = vsel %vm2181, %v2164, %v1597
        %v2220 = vsel %vm2181, %v2165, %v1599
        %v2221 = vsel %vm2181, %v2166, %v1601
        %v2222 = vsel %vm2181, %v2167, %v1603
        %v2223 = vsel %vm2181, %v2168, %v1605
        %v2224 = vsel %vm2181, %v2169, %v1607
        %v2225 = vsel %vm2181, %v2170, %v1609
        %v2226 = vsel %vm2181, %v2171, %v1611
        %v2227 = vsel %vm2181, %v2172, %v1613
        %v2228 = vsel %vm2181, %v2173, %v1615
        %v2229 = vsel %vm2181, %v2174, %v1617
        %v2230 = vsel %vm2181, %v2175, %v1619
        %v2231 = vsel %vm2181, %v2176, %v1621
        %v2232 = vsel %vm2181, %v2177, %v1623
        %v2233 = vsel %vm2181, %v2178, %v1625
        %v2234 = vsel %vm2181, %v2179, %v1627
        %v2235 = vsel %vm2181, %v2180, %v1629
        %vm2236 = vcmask 523264
        %v2237 = vsel %vm2236, %v2182, %v1690
        %v2238 = vsel %vm2236, %v2183, %v1692
        %v2239 = vsel %vm2236, %v2184, %v1694
        %v2240 = vsel %vm2236, %v2185, %v1696
        %v2241 = vsel %vm2236, %v2186, %v1698
        %v2242 = vsel %vm2236, %v2187, %v1700
        %v2243 = vsel %vm2236, %v2188, %v1702
        %v2244 = vsel %vm2236, %v2189, %v1704
        %v2245 = vsel %vm2236, %v2190, %v1706
        %v2246 = vsel %vm2236, %v2191, %v1708
        %v2247 = vsel %vm2236, %v2192, %v1710
        %v2248 = vsel %vm2236, %v2193, %v1712
        %v2249 = vsel %vm2236, %v2194, %v1714
        %v2250 = vsel %vm2236, %v2195, %v1716
        %v2251 = vsel %vm2236, %v2196, %v1718
        %v2252 = vsel %vm2236, %v2197, %v1720
        %v2253 = vsel %vm2236, %v2198, %v1722
        %v2254 = vsel %vm2236, %v2199, %v1724
        %v2255 = vsel %vm2236, %v2200, %v1726
        %v2256 = vsel %vm2236, %v2201, %v1728
        %v2257 = vsel %vm2236, %v2202, %v1730
        %v2258 = vsel %vm2236, %v2203, %v1732
        %v2259 = vsel %vm2236, %v2204, %v1734
        %v2260 = vsel %vm2236, %v2205, %v1736
        %v2261 = vsel %vm2236, %v2206, %v1738
        %v2262 = vsel %vm2236, %v2207, %v1740
        %v2263 = vsel %vm2236, %v2208, %v1742
        %v2264 = vsel %vm2236, %v2209, %v1744
        %v2265 = vsel %vm2236, %v2210, %v1746
        %v2266 = vsel %vm2236, %v2211, %v1748
        %v2267 = vsel %vm2236, %v2212, %v1750
        %v2268 = vsel %vm2236, %v2213, %v1752
        %v2269 = vsel %vm2236, %v2214, %v1754
        %v2270 = vsel %vm2236, %v2215, %v1756
        %v2271 = vsel %vm2236, %v2216, %v1758
        %v2272 = vsel %vm2236, %v2217, %v1760
        %v2273 = vsel %vm2236, %v2218, %v1762
        %v2274 = vsel %vm2236, %v2219, %v1764
        %v2275 = vsel %vm2236, %v2220, %v1766
        %v2276 = vsel %vm2236, %v2221, %v1768
        %v2277 = vsel %vm2236, %v2222, %v1770
        %v2278 = vsel %vm2236, %v2223, %v1772
        %v2279 = vsel %vm2236, %v2224, %v1774
        %v2280 = vsel %vm2236, %v2225, %v1776
        %v2281 = vsel %vm2236, %v2226, %v1778
        %v2282 = vsel %vm2236, %v2227, %v1780
        %v2283 = vsel %vm2236, %v2228, %v1782
        %v2284 = vsel %vm2236, %v2229, %v1784
        %v2285 = vsel %vm2236, %v2230, %v1786
        %v2286 = vsel %vm2236, %v2231, %v1788
        %v2287 = vsel %vm2236, %v2232, %v1790
        %v2288 = vsel %vm2236, %v2233, %v1792
        %v2289 = vsel %vm2236, %v2234, %v1794
        %v2290 = vsel %vm2236, %v2235, %v1796
        %vm2291 = vcmask 588800
        %v2292 = vsel %vm2291, %v2237, 0.0
        %v2293 = vsel %vm2291, %v2238, 0.0
        %v2294 = vsel %vm2291, %v2239, 0.0
        %v2295 = vsel %vm2291, %v2240, 0.0
        %v2296 = vsel %vm2291, %v2241, 0.0
        %v2297 = vsel %vm2291, %v2242, 0.0
        %v2298 = vsel %vm2291, %v2243, 0.0
        %v2299 = vsel %vm2291, %v2244, 0.0
        %v2300 = vsel %vm2291, %v2245, 0.0
        %v2301 = vsel %vm2291, %v2246, 0.0
        %v2302 = vsel %vm2291, %v2247, 0.0
        %v2303 = vsel %vm2291, %v2248, 0.0
        %v2304 = vsel %vm2291, %v2249, 0.0
        %v2305 = vsel %vm2291, %v2250, 0.0
        %v2306 = vsel %vm2291, %v2251, 0.0
        %v2307 = vsel %vm2291, %v2252, 0.0
        %v2308 = vsel %vm2291, %v2253, 0.0
        %v2309 = vsel %vm2291, %v2254, 0.0
        %v2310 = vsel %vm2291, %v2255, 0.0
        %v2311 = vsel %vm2291, %v2256, 0.0
        %v2312 = vsel %vm2291, %v2257, 0.0
        %v2313 = vsel %vm2291, %v2258, 0.0
        %v2314 = vsel %vm2291, %v2259, 0.0
        %v2315 = vsel %vm2291, %v2260, 0.0
        %v2316 = vsel %vm2291, %v2261, 0.0
        %v2317 = vsel %vm2291, %v2262, 0.0
        %v2318 = vsel %vm2291, %v2263, 0.0
        %v2319 = vsel %vm2291, %v2264, 0.0
        %v2320 = vsel %vm2291, %v2265, 0.0
        %v2321 = vsel %vm2291, %v2266, 0.0
        %v2322 = vsel %vm2291, %v2267, 0.0
        %v2323 = vsel %vm2291, %v2268, 0.0
        %v2324 = vsel %vm2291, %v2269, 0.0
        %v2325 = vsel %vm2291, %v2270, 0.0
        %v2326 = vsel %vm2291, %v2271, 0.0
        %v2327 = vsel %vm2291, %v2272, 0.0
        %v2328 = vsel %vm2291, %v2273, 0.0
        %v2329 = vsel %vm2291, %v2274, 0.0
        %v2330 = vsel %vm2291, %v2275, 0.0
        %v2331 = vsel %vm2291, %v2276, 0.0
        %v2332 = vsel %vm2291, %v2277, 0.0
        %v2333 = vsel %vm2291, %v2278, 0.0
        %v2334 = vsel %vm2291, %v2279, 0.0
        %v2335 = vsel %vm2291, %v2280, 0.0
        %v2336 = vsel %vm2291, %v2281, 0.0
        %v2337 = vsel %vm2291, %v2282, 0.0
        %v2338 = vsel %vm2291, %v2283, 0.0
        %v2339 = vsel %vm2291, %v2284, 0.0
        %v2340 = vsel %vm2291, %v2285, 0.0
        %v2341 = vsel %vm2291, %v2286, 0.0
        %v2342 = vsel %vm2291, %v2287, 0.0
        %v2343 = vsel %vm2291, %v2288, 0.0
        %v2344 = vsel %vm2291, %v2289, 0.0
        %v2345 = vsel %vm2291, %v2290, 0.0
        %v2400 = vrot.slane %v2292, 2
        %v2401 = vrot.slane %v2292, 4
        %v2402 = vrot.slane %v2292, 6
        %v2403 = vrot.slane %v2293, 2
        %v2404 = vrot.slane %v2293, 4
        %v2405 = vrot.slane %v2293, 6
        %v2406 = vrot.slane %v2295, 2
        %v2407 = vrot.slane %v2295, 4
        %v2408 = vrot.slane %v2295, 6
        %v2409 = vrot.slane %v2296, 2
        %v2410 = vrot.slane %v2296, 4
        %v2411 = vrot.slane %v2296, 6
        %v2412 = vrot.slane %v2298, 2
        %v2413 = vrot.slane %v2298, 4
        %v2414 = vrot.slane %v2298, 6
        %v2415 = vrot.slane %v2299, 2
        %v2416 = vrot.slane %v2299, 4
        %v2417 = vrot.slane %v2299, 6
        %v2418 = vrot.slane %v2301, 2
        %v2419 = vrot.slane %v2301, 4
        %v2420 = vrot.slane %v2301, 6
        %v2421 = vrot.slane %v2302, 2
        %v2422 = vrot.slane %v2302, 4
        %v2423 = vrot.slane %v2302, 6
        %v2424 = vrot.slane %v2304, 2
        %v2425 = vrot.slane %v2304, 4
        %v2426 = vrot.slane %v2304, 6
        %v2427 = vrot.slane %v2305, 2
        %v2428 = vrot.slane %v2305, 4
        %v2429 = vrot.slane %v2305, 6
        %v2430 = vrot.slane %v2307, 2
        %v2431 = vrot.slane %v2307, 4
        %v2432 = vrot.slane %v2307, 6
        %v2433 = vrot.slane %v2308, 2
        %v2434 = vrot.slane %v2308, 4
        %v2435 = vrot.slane %v2308, 6
        %v2436 = vrot.slane %v2310, 2
        %v2437 = vrot.slane %v2310, 4
        %v2438 = vrot.slane %v2310, 6
        %v2439 = vrot.slane %v2311, 2
        %v2440 = vrot.slane %v2311, 4
        %v2441 = vrot.slane %v2311, 6
        %v2442 = vrot.slane %v2313, 2
        %v2443 = vrot.slane %v2313, 4
        %v2444 = vrot.slane %v2313, 6
        %v2445 = vrot.slane %v2314, 2
        %v2446 = vrot.slane %v2314, 4
        %v2447 = vrot.slane %v2314, 6
        %v2448 = vrot.slane %v2316, 2
        %v2449 = vrot.slane %v2316, 4
        %v2450 = vrot.slane %v2316, 6
        %v2451 = vrot.slane %v2317, 2
        %v2452 = vrot.slane %v2317, 4
        %v2453 = vrot.slane %v2317, 6
        %v2454 = vrot.slane %v2319, 2
        %v2455 = vrot.slane %v2319, 4
        %v2456 = vrot.slane %v2319, 6
        %v2457 = vrot.slane %v2320, 2
        %v2458 = vrot.slane %v2320, 4
        %v2459 = vrot.slane %v2320, 6
        %v2460 = vrot.slane %v2322, 2
        %v2461 = vrot.slane %v2322, 4
        %v2462 = vrot.slane %v2322, 6
        %v2463 = vrot.slane %v2323, 2
        %v2464 = vrot.slane %v2323, 4
        %v2465 = vrot.slane %v2323, 6
        %v2466 = vrot.slane %v2325, 2
        %v2467 = vrot.slane %v2325, 4
        %v2468 = vrot.slane %v2325, 6
        %v2469 = vrot.slane %v2326, 2
        %v2470 = vrot.slane %v2326, 4
        %v2471 = vrot.slane %v2326, 6
        %v2472 = vrot.slane %v2328, 2
        %v2473 = vrot.slane %v2328, 4
        %v2474 = vrot.slane %v2328, 6
        %v2475 = vrot.slane %v2329, 2
        %v2476 = vrot.slane %v2329, 4
        %v2477 = vrot.slane %v2329, 6
        %v2478 = vrot.slane %v2331, 2
        %v2479 = vrot.slane %v2331, 4
        %v2480 = vrot.slane %v2331, 6
        %v2481 = vrot.slane %v2332, 2
        %v2482 = vrot.slane %v2332, 4
        %v2483 = vrot.slane %v2332, 6
        %v2484 = vrot.slane %v2334, 2
        %v2485 = vrot.slane %v2334, 4
        %v2486 = vrot.slane %v2334, 6
        %v2487 = vrot.slane %v2335, 2
        %v2488 = vrot.slane %v2335, 4
        %v2489 = vrot.slane %v2335, 6
        %v2490 = vrot.slane %v2337, 2
        %v2491 = vrot.slane %v2337, 4
        %v2492 = vrot.slane %v2337, 6
        %v2493 = vrot.slane %v2338, 2
        %v2494 = vrot.slane %v2338, 4
        %v2495 = vrot.slane %v2338, 6
        %v2496 = vrot.slane %v2340, 2
        %v2497 = vrot.slane %v2340, 4
        %v2498 = vrot.slane %v2340, 6
        %v2499 = vrot.slane %v2341, 2
        %v2500 = vrot.slane %v2341, 4
        %v2501 = vrot.slane %v2341, 6
        %v2502 = vrot.slane %v2343, 2
        %v2503 = vrot.slane %v2343, 4
        %v2504 = vrot.slane %v2343, 6
        %v2505 = vrot.slane %v2344, 2
        %v2506 = vrot.slane %v2344, 4
        %v2507 = vrot.slane %v2344, 6
        %2508 = vst [vmem:[#allocation1] ss:$4 sm:$0xff] %v2292
        %s2509 = scalar_lea.vmem [#allocation1], 1
        %2510 = vst [vmem:[%s2509] ss:$4 sm:$0xff] %v2400
        %s2511 = scalar_lea.vmem [#allocation1], 2
        %2512 = vst [vmem:[%s2511] ss:$4 sm:$0xff] %v2401
        %s2513 = scalar_lea.vmem [#allocation1], 3
        %2514 = vst [vmem:[%s2513] ss:$4 sm:$0xff] %v2402
        %s2515 = scalar_lea.vmem [#allocation1], 32
        %2516 = vst [vmem:[%s2515] ss:$4 sm:$0xff] %v2293
        %s2517 = scalar_lea.vmem [#allocation1], 33
        %2518 = vst [vmem:[%s2517] ss:$4 sm:$0xff] %v2403
        %s2519 = scalar_lea.vmem [#allocation1], 34
        %2520 = vst [vmem:[%s2519] ss:$4 sm:$0xff] %v2404
        %s2521 = scalar_lea.vmem [#allocation1], 35
        %2522 = vst [vmem:[%s2521] ss:$4 sm:$0xff] %v2405
        %v2523 = vld.sshfl [vmem:[#allocation1] sm:$0xff pattern:$0x73625140]
        %v2524 = vld.sshfl [vmem:[#allocation1 + $0x20] sm:$0xff pattern:$0x73625140]
        %2525 = vst [vmem:[#allocation1] ss:$4 sm:$0xff] %v2294
        %2526 = vst [vmem:[%s2509] ss:$4 sm:$0xff] %v2295
        %2527 = vst [vmem:[%s2511] ss:$4 sm:$0xff] %v2406
        %2528 = vst [vmem:[%s2513] ss:$4 sm:$0xff] %v2407
        %2529 = vst [vmem:[%s2515] ss:$4 sm:$0xff] %v2408
        %2530 = vst [vmem:[%s2517] ss:$4 sm:$0xff] %v2296
        %2531 = vst [vmem:[%s2519] ss:$4 sm:$0xff] %v2409
        %2532 = vst [vmem:[%s2521] ss:$4 sm:$0xff] %v2410
        %v2533 = vld.sshfl [vmem:[#allocation1] sm:$0xff pattern:$0x73625140]
        %v2534 = vld.sshfl [vmem:[#allocation1 + $0x20] sm:$0xff pattern:$0x73625140]
        %2535 = vst [vmem:[#allocation1] ss:$4 sm:$0xff] %v2411
        %2536 = vst [vmem:[%s2509] ss:$4 sm:$0xff] %v2297
        %2537 = vst [vmem:[%s2511] ss:$4 sm:$0xff] %v2298
        %2538 = vst [vmem:[%s2513] ss:$4 sm:$0xff] %v2412
        %2539 = vst [vmem:[%s2515] ss:$4 sm:$0xff] %v2413
        %2540 = vst [vmem:[%s2517] ss:$4 sm:$0xff] %v2414
        %2541 = vst [vmem:[%s2519] ss:$4 sm:$0xff] %v2299
        %2542 = vst [vmem:[%s2521] ss:$4 sm:$0xff] %v2415
        %v2543 = vld.sshfl [vmem:[#allocation1] sm:$0xff pattern:$0x73625140]
        %v2544 = vld.sshfl [vmem:[#allocation1 + $0x20] sm:$0xff pattern:$0x73625140]
        %2545 = vst [vmem:[#allocation1] ss:$4 sm:$0xff] %v2416
        %2546 = vst [vmem:[%s2509] ss:$4 sm:$0xff] %v2417
        %2547 = vst [vmem:[%s2511] ss:$4 sm:$0xff] %v2300
        %2548 = vst [vmem:[%s2513] ss:$4 sm:$0xff] %v2301
        %2549 = vst [vmem:[%s2515] ss:$4 sm:$0xff] %v2418
        %2550 = vst [vmem:[%s2517] ss:$4 sm:$0xff] %v2419
        %2551 = vst [vmem:[%s2519] ss:$4 sm:$0xff] %v2420
        %2552 = vst [vmem:[%s2521] ss:$4 sm:$0xff] %v2302
        %v2553 = vld.sshfl [vmem:[#allocation1] sm:$0xff pattern:$0x73625140]
        %v2554 = vld.sshfl [vmem:[#allocation1 + $0x20] sm:$0xff pattern:$0x73625140]
        %2555 = vst [vmem:[#allocation1] ss:$4 sm:$0xff] %v2421
        %2556 = vst [vmem:[%s2509] ss:$4 sm:$0xff] %v2422
        %2557 = vst [vmem:[%s2511] ss:$4 sm:$0xff] %v2423
        %2558 = vst [vmem:[%s2513] ss:$4 sm:$0xff] %v2303
        %2559 = vst [vmem:[%s2515] ss:$4 sm:$0xff] %v2304
        %2560 = vst [vmem:[%s2517] ss:$4 sm:$0xff] %v2424
        %2561 = vst [vmem:[%s2519] ss:$4 sm:$0xff] %v2425
        %2562 = vst [vmem:[%s2521] ss:$4 sm:$0xff] %v2426
        %v2563 = vld.sshfl [vmem:[#allocation1] sm:$0xff pattern:$0x73625140]
        %v2564 = vld.sshfl [vmem:[#allocation1 + $0x20] sm:$0xff pattern:$0x73625140]
        %2565 = vst [vmem:[#allocation1] ss:$4 sm:$0xff] %v2305
        %2566 = vst [vmem:[%s2509] ss:$4 sm:$0xff] %v2427
        %2567 = vst [vmem:[%s2511] ss:$4 sm:$0xff] %v2428
        %2568 = vst [vmem:[%s2513] ss:$4 sm:$0xff] %v2429
        %2569 = vst [vmem:[%s2515] ss:$4 sm:$0xff] %v2306
        %2570 = vst [vmem:[%s2517] ss:$4 sm:$0xff] %v2307
        %2571 = vst [vmem:[%s2519] ss:$4 sm:$0xff] %v2430
        %2572 = vst [vmem:[%s2521] ss:$4 sm:$0xff] %v2431
        %v2573 = vld.sshfl [vmem:[#allocation1] sm:$0xff pattern:$0x73625140]
        %v2574 = vld.sshfl [vmem:[#allocation1 + $0x20] sm:$0xff pattern:$0x73625140]
        %2575 = vst [vmem:[#allocation1] ss:$4 sm:$0xff] %v2432
        %2576 = vst [vmem:[%s2509] ss:$4 sm:$0xff] %v2308
        %2577 = vst [vmem:[%s2511] ss:$4 sm:$0xff] %v2433
        %2578 = vst [vmem:[%s2513] ss:$4 sm:$0xff] %v2434
        %2579 = vst [vmem:[%s2515] ss:$4 sm:$0xff] %v2435
        %2580 = vst [vmem:[%s2517] ss:$4 sm:$0xff] %v2309
        %2581 = vst [vmem:[%s2519] ss:$4 sm:$0xff] %v2310
        %2582 = vst [vmem:[%s2521] ss:$4 sm:$0xff] %v2436
        %v2583 = vld.sshfl [vmem:[#allocation1] sm:$0xff pattern:$0x73625140]
        %v2584 = vld.sshfl [vmem:[#allocation1 + $0x20] sm:$0xff pattern:$0x73625140]
        %2585 = vst [vmem:[#allocation1] ss:$4 sm:$0xff] %v2437
        %2586 = vst [vmem:[%s2509] ss:$4 sm:$0xff] %v2438
        %2587 = vst [vmem:[%s2511] ss:$4 sm:$0xff] %v2311
        %2588 = vst [vmem:[%s2513] ss:$4 sm:$0xff] %v2439
        %2589 = vst [vmem:[%s2515] ss:$4 sm:$0xff] %v2440
        %2590 = vst [vmem:[%s2517] ss:$4 sm:$0xff] %v2441
        %2591 = vst [vmem:[%s2519] ss:$4 sm:$0xff] %v2312
        %2592 = vst [vmem:[%s2521] ss:$4 sm:$0xff] %v2313
        %v2593 = vld.sshfl [vmem:[#allocation1] sm:$0xff pattern:$0x73625140]
        %v2594 = vld.sshfl [vmem:[#allocation1 + $0x20] sm:$0xff pattern:$0x73625140]
        %2595 = vst [vmem:[#allocation1] ss:$4 sm:$0xff] %v2442
        %2596 = vst [vmem:[%s2509] ss:$4 sm:$0xff] %v2443
        %2597 = vst [vmem:[%s2511] ss:$4 sm:$0xff] %v2444
        %2598 = vst [vmem:[%s2513] ss:$4 sm:$0xff] %v2314
        %2599 = vst [vmem:[%s2515] ss:$4 sm:$0xff] %v2445
        %2600 = vst [vmem:[%s2517] ss:$4 sm:$0xff] %v2446
        %2601 = vst [vmem:[%s2519] ss:$4 sm:$0xff] %v2447
        %2602 = vst [vmem:[%s2521] ss:$4 sm:$0xff] %v2315
        %v2603 = vld.sshfl [vmem:[#allocation1] sm:$0xff pattern:$0x73625140]
        %v2604 = vld.sshfl [vmem:[#allocation1 + $0x20] sm:$0xff pattern:$0x73625140]
        %2605 = vst [vmem:[#allocation1] ss:$4 sm:$0xff] %v2316
        %2606 = vst [vmem:[%s2509] ss:$4 sm:$0xff] %v2448
        %2607 = vst [vmem:[%s2511] ss:$4 sm:$0xff] %v2449
        %2608 = vst [vmem:[%s2513] ss:$4 sm:$0xff] %v2450
        %2609 = vst [vmem:[%s2515] ss:$4 sm:$0xff] %v2317
        %2610 = vst [vmem:[%s2517] ss:$4 sm:$0xff] %v2451
        %2611 = vst [vmem:[%s2519] ss:$4 sm:$0xff] %v2452
        %2612 = vst [vmem:[%s2521] ss:$4 sm:$0xff] %v2453
        %v2613 = vld.sshfl [vmem:[#allocation1] sm:$0xff pattern:$0x73625140]
        %v2614 = vld.sshfl [vmem:[#allocation1 + $0x20] sm:$0xff pattern:$0x73625140]
        %2615 = vst [vmem:[#allocation1] ss:$4 sm:$0xff] %v2318
        %2616 = vst [vmem:[%s2509] ss:$4 sm:$0xff] %v2319
        %2617 = vst [vmem:[%s2511] ss:$4 sm:$0xff] %v2454
        %2618 = vst [vmem:[%s2513] ss:$4 sm:$0xff] %v2455
        %2619 = vst [vmem:[%s2515] ss:$4 sm:$0xff] %v2456
        %2620 = vst [vmem:[%s2517] ss:$4 sm:$0xff] %v2320
        %2621 = vst [vmem:[%s2519] ss:$4 sm:$0xff] %v2457
        %2622 = vst [vmem:[%s2521] ss:$4 sm:$0xff] %v2458
        %v2623 = vld.sshfl [vmem:[#allocation1] sm:$0xff pattern:$0x73625140]
        %v2624 = vld.sshfl [vmem:[#allocation1 + $0x20] sm:$0xff pattern:$0x73625140]
        %2625 = vst [vmem:[#allocation1] ss:$4 sm:$0xff] %v2459
        %2626 = vst [vmem:[%s2509] ss:$4 sm:$0xff] %v2321
        %2627 = vst [vmem:[%s2511] ss:$4 sm:$0xff] %v2322
        %2628 = vst [vmem:[%s2513] ss:$4 sm:$0xff] %v2460
        %2629 = vst [vmem:[%s2515] ss:$4 sm:$0xff] %v2461
        %2630 = vst [vmem:[%s2517] ss:$4 sm:$0xff] %v2462
        %2631 = vst [vmem:[%s2519] ss:$4 sm:$0xff] %v2323
        %2632 = vst [vmem:[%s2521] ss:$4 sm:$0xff] %v2463
        %v2633 = vld.sshfl [vmem:[#allocation1] sm:$0xff pattern:$0x73625140]
        %v2634 = vld.sshfl [vmem:[#allocation1 + $0x20] sm:$0xff pattern:$0x73625140]
        %2635 = vst [vmem:[#allocation1] ss:$4 sm:$0xff] %v2464
        %2636 = vst [vmem:[%s2509] ss:$4 sm:$0xff] %v2465
        %2637 = vst [vmem:[%s2511] ss:$4 sm:$0xff] %v2324
        %2638 = vst [vmem:[%s2513] ss:$4 sm:$0xff] %v2325
        %2639 = vst [vmem:[%s2515] ss:$4 sm:$0xff] %v2466
        %2640 = vst [vmem:[%s2517] ss:$4 sm:$0xff] %v2467
        %2641 = vst [vmem:[%s2519] ss:$4 sm:$0xff] %v2468
        %2642 = vst [vmem:[%s2521] ss:$4 sm:$0xff] %v2326
        %v2643 = vld.sshfl [vmem:[#allocation1] sm:$0xff pattern:$0x73625140]
        %v2644 = vld.sshfl [vmem:[#allocation1 + $0x20] sm:$0xff pattern:$0x73625140]
        %2645 = vst [vmem:[#allocation1] ss:$4 sm:$0xff] %v2469
        %2646 = vst [vmem:[%s2509] ss:$4 sm:$0xff] %v2470
        %2647 = vst [vmem:[%s2511] ss:$4 sm:$0xff] %v2471
        %2648 = vst [vmem:[%s2513] ss:$4 sm:$0xff] %v2327
        %2649 = vst [vmem:[%s2515] ss:$4 sm:$0xff] %v2328
        %2650 = vst [vmem:[%s2517] ss:$4 sm:$0xff] %v2472
        %2651 = vst [vmem:[%s2519] ss:$4 sm:$0xff] %v2473
        %2652 = vst [vmem:[%s2521] ss:$4 sm:$0xff] %v2474
        %v2653 = vld.sshfl [vmem:[#allocation1] sm:$0xff pattern:$0x73625140]
        %v2654 = vld.sshfl [vmem:[#allocation1 + $0x20] sm:$0xff pattern:$0x73625140]
        %2655 = vst [vmem:[#allocation1] ss:$4 sm:$0xff] %v2329
        %2656 = vst [vmem:[%s2509] ss:$4 sm:$0xff] %v2475
        %2657 = vst [vmem:[%s2511] ss:$4 sm:$0xff] %v2476
        %2658 = vst [vmem:[%s2513] ss:$4 sm:$0xff] %v2477
        %2659 = vst [vmem:[%s2515] ss:$4 sm:$0xff] %v2330
        %2660 = vst [vmem:[%s2517] ss:$4 sm:$0xff] %v2331
        %2661 = vst [vmem:[%s2519] ss:$4 sm:$0xff] %v2478
        %2662 = vst [vmem:[%s2521] ss:$4 sm:$0xff] %v2479
        %v2663 = vld.sshfl [vmem:[#allocation1] sm:$0xff pattern:$0x73625140]
        %v2664 = vld.sshfl [vmem:[#allocation1 + $0x20] sm:$0xff pattern:$0x73625140]
        %2665 = vst [vmem:[#allocation1] ss:$4 sm:$0xff] %v2480
        %2666 = vst [vmem:[%s2509] ss:$4 sm:$0xff] %v2332
        %2667 = vst [vmem:[%s2511] ss:$4 sm:$0xff] %v2481
        %2668 = vst [vmem:[%s2513] ss:$4 sm:$0xff] %v2482
        %2669 = vst [vmem:[%s2515] ss:$4 sm:$0xff] %v2483
        %2670 = vst [vmem:[%s2517] ss:$4 sm:$0xff] %v2333
        %2671 = vst [vmem:[%s2519] ss:$4 sm:$0xff] %v2334
        %2672 = vst [vmem:[%s2521] ss:$4 sm:$0xff] %v2484
        %v2673 = vld.sshfl [vmem:[#allocation1] sm:$0xff pattern:$0x73625140]
        %v2674 = vld.sshfl [vmem:[#allocation1 + $0x20] sm:$0xff pattern:$0x73625140]
        %2675 = vst [vmem:[#allocation1] ss:$4 sm:$0xff] %v2485
        %2676 = vst [vmem:[%s2509] ss:$4 sm:$0xff] %v2486
        %2677 = vst [vmem:[%s2511] ss:$4 sm:$0xff] %v2335
        %2678 = vst [vmem:[%s2513] ss:$4 sm:$0xff] %v2487
        %2679 = vst [vmem:[%s2515] ss:$4 sm:$0xff] %v2488
        %2680 = vst [vmem:[%s2517] ss:$4 sm:$0xff] %v2489
        %2681 = vst [vmem:[%s2519] ss:$4 sm:$0xff] %v2336
        %2682 = vst [vmem:[%s2521] ss:$4 sm:$0xff] %v2337
        %v2683 = vld.sshfl [vmem:[#allocation1] sm:$0xff pattern:$0x73625140]
        %v2684 = vld.sshfl [vmem:[#allocation1 + $0x20] sm:$0xff pattern:$0x73625140]
        %2685 = vst [vmem:[#allocation1] ss:$4 sm:$0xff] %v2490
        %2686 = vst [vmem:[%s2509] ss:$4 sm:$0xff] %v2491
        %2687 = vst [vmem:[%s2511] ss:$4 sm:$0xff] %v2492
        %2688 = vst [vmem:[%s2513] ss:$4 sm:$0xff] %v2338
        %2689 = vst [vmem:[%s2515] ss:$4 sm:$0xff] %v2493
        %2690 = vst [vmem:[%s2517] ss:$4 sm:$0xff] %v2494
        %2691 = vst [vmem:[%s2519] ss:$4 sm:$0xff] %v2495
        %2692 = vst [vmem:[%s2521] ss:$4 sm:$0xff] %v2339
        %v2693 = vld.sshfl [vmem:[#allocation1] sm:$0xff pattern:$0x73625140]
        %v2694 = vld.sshfl [vmem:[#allocation1 + $0x20] sm:$0xff pattern:$0x73625140]
        %2695 = vst [vmem:[#allocation1] ss:$4 sm:$0xff] %v2340
        %2696 = vst [vmem:[%s2509] ss:$4 sm:$0xff] %v2496
        %2697 = vst [vmem:[%s2511] ss:$4 sm:$0xff] %v2497
        %2698 = vst [vmem:[%s2513] ss:$4 sm:$0xff] %v2498
        %2699 = vst [vmem:[%s2515] ss:$4 sm:$0xff] %v2341
        %2700 = vst [vmem:[%s2517] ss:$4 sm:$0xff] %v2499
        %2701 = vst [vmem:[%s2519] ss:$4 sm:$0xff] %v2500
        %2702 = vst [vmem:[%s2521] ss:$4 sm:$0xff] %v2501
        %v2703 = vld.sshfl [vmem:[#allocation1] sm:$0xff pattern:$0x73625140]
        %v2704 = vld.sshfl [vmem:[#allocation1 + $0x20] sm:$0xff pattern:$0x73625140]
        %2705 = vst [vmem:[#allocation1] ss:$4 sm:$0xff] %v2342
        %2706 = vst [vmem:[%s2509] ss:$4 sm:$0xff] %v2343
        %2707 = vst [vmem:[%s2511] ss:$4 sm:$0xff] %v2502
        %2708 = vst [vmem:[%s2513] ss:$4 sm:$0xff] %v2503
        %2709 = vst [vmem:[%s2515] ss:$4 sm:$0xff] %v2504
        %2710 = vst [vmem:[%s2517] ss:$4 sm:$0xff] %v2344
        %2711 = vst [vmem:[%s2519] ss:$4 sm:$0xff] %v2505
        %2712 = vst [vmem:[%s2521] ss:$4 sm:$0xff] %v2506
        %v2713 = vld.sshfl [vmem:[#allocation1] sm:$0xff pattern:$0x73625140]
        %v2714 = vld.sshfl [vmem:[#allocation1 + $0x20] sm:$0xff pattern:$0x73625140]
        %2715 = vst [vmem:[#allocation1] ss:$4 sm:$0xff] %v2507
        %2716 = vst [vmem:[%s2509] ss:$4 sm:$0xff] %v2345
        %v2717 = vld.sshfl [vmem:[#allocation1] sm:$0xff pattern:$0x73625140]
        %v2759 = vpack.c.bf16 %v2524, %v2523
        %v2760 = vpack.c.bf16 %v2534, %v2533
        %v2761 = vpack.c.bf16 %v2544, %v2543
        %v2762 = vpack.c.bf16 %v2554, %v2553
        %v2763 = vpack.c.bf16 %v2564, %v2563
        %v2764 = vpack.c.bf16 %v2574, %v2573
        %v2765 = vpack.c.bf16 %v2584, %v2583
        %v2766 = vpack.c.bf16 %v2594, %v2593
        %v2767 = vpack.c.bf16 %v2604, %v2603
        %v2768 = vpack.c.bf16 %v2614, %v2613
        %v2769 = vpack.c.bf16 %v2624, %v2623
        %v2770 = vpack.c.bf16 %v2634, %v2633
        %v2771 = vpack.c.bf16 %v2644, %v2643
        %v2772 = vpack.c.bf16 %v2654, %v2653
        %v2773 = vpack.c.bf16 %v2664, %v2663
        %v2774 = vpack.c.bf16 %v2674, %v2673
        %v2775 = vpack.c.bf16 %v2684, %v2683
        %v2776 = vpack.c.bf16 %v2694, %v2693
        %v2777 = vpack.c.bf16 %v2704, %v2703
        %v2778 = vpack.c.bf16 %v2714, %v2713
        %v2779 = vpack.c.bf16 %v2717, %v2717
        %v2796 = vunpack.c.l.b16 %v277
        %v2797 = vunpack.c.l.b16 %v278
        %v2798 = vunpack.c.l.b16 %v279
        %v2799 = vunpack.c.l.b16 %v280
        %v2800 = vunpack.c.l.b16 %v281
        %v2801 = vunpack.c.l.b16 %v282
        %v2802 = vunpack.c.l.b16 %v283
        %v2803 = vunpack.c.l.b16 %v284
        %v2804 = vunpack.c.l.b16 %v285
        %v2805 = vunpack.c.l.b16 %v286
        %v2806 = vunpack.c.l.b16 %v287
        %v2807 = vunpack.c.l.b16 %v288
        %v2808 = vunpack.c.l.b16 %v289
        %v2809 = vunpack.c.l.b16 %v290
        %v2810 = vunpack.c.l.b16 %v291
        %v2811 = vunpack.c.l.b16 %v292
        %v2812 = vpack.c.b16 %v2797, %v2796
        %v2813 = vpack.c.b16 %v2799, %v2798
        %v2814 = vpack.c.b16 %v2801, %v2800
        %v2815 = vpack.c.b16 %v2803, %v2802
        %v2816 = vpack.c.b16 %v2805, %v2804
        %v2817 = vpack.c.b16 %v2807, %v2806
        %v2818 = vpack.c.b16 %v2809, %v2808
        %v2819 = vpack.c.b16 %v2811, %v2810
        %2828 = vmatpush.bf16.msra.mxu0 %v2819
        %2829 = vmatpush.bf16.msra.mxu0 %v2818
        %2830 = vmatpush.bf16.msra.mxu0 %v2817
        %2831 = vmatpush.bf16.msra.mxu0 %v2816
        %2832 = vmatpush.bf16.msra.mxu0 %v2815
        %2833 = vmatpush.bf16.msra.mxu0 %v2814
        %2834 = vmatpush.bf16.msra.mxu0 %v2813
        %2835 = vmatpush.bf16.msra.mxu0 %v2812
        %2836 = vmatmul.bf16.gmra.mxu0 %v2759
        %v2837 = vpop.f32.mrf.mxu0
        %v2838 = vadd.f32 0.0, %v2837
        %v2839 = vpop.f32.mrf.mxu0
        %v2840 = vadd.f32 0.0, %v2839
        %2841 = vmatmul.bf16.gmra.mxu0 %v2760
        %v2842 = vpop.f32.mrf.mxu0
        %v2843 = vadd.f32 0.0, %v2842
        %v2844 = vpop.f32.mrf.mxu0
        %v2845 = vadd.f32 0.0, %v2844
        %2846 = vmatmul.bf16.gmra.mxu0 %v2761
        %v2847 = vpop.f32.mrf.mxu0
        %v2848 = vadd.f32 0.0, %v2847
        %v2849 = vpop.f32.mrf.mxu0
        %v2850 = vadd.f32 0.0, %v2849
        %2851 = vmatmul.bf16.gmra.mxu0 %v2762
        %v2852 = vpop.f32.mrf.mxu0
        %v2853 = vadd.f32 0.0, %v2852
        %v2854 = vpop.f32.mrf.mxu0
        %v2855 = vadd.f32 0.0, %v2854
        %2856 = vmatmul.bf16.gmra.mxu0 %v2763
        %v2857 = vpop.f32.mrf.mxu0
        %v2858 = vadd.f32 0.0, %v2857
        %v2859 = vpop.f32.mrf.mxu0
        %v2860 = vadd.f32 0.0, %v2859
        %2861 = vmatmul.bf16.gmra.mxu0 %v2764
        %v2862 = vpop.f32.mrf.mxu0
        %v2863 = vadd.f32 0.0, %v2862
        %v2864 = vpop.f32.mrf.mxu0
        %v2865 = vadd.f32 0.0, %v2864
        %2866 = vmatmul.bf16.gmra.mxu0 %v2765
        %v2867 = vpop.f32.mrf.mxu0
        %v2868 = vadd.f32 0.0, %v2867
        %v2869 = vpop.f32.mrf.mxu0
        %v2870 = vadd.f32 0.0, %v2869
        %2871 = vmatmul.bf16.gmra.mxu0 %v2766
        %v2872 = vpop.f32.mrf.mxu0
        %v2873 = vadd.f32 0.0, %v2872
        %v2874 = vpop.f32.mrf.mxu0
        %v2875 = vadd.f32 0.0, %v2874
        %2876 = vmatmul.bf16.gmra.mxu0 %v2767
        %v2877 = vpop.f32.mrf.mxu0
        %v2878 = vadd.f32 0.0, %v2877
        %v2879 = vpop.f32.mrf.mxu0
        %v2880 = vadd.f32 0.0, %v2879
        %2881 = vmatmul.bf16.gmra.mxu0 %v2768
        %v2882 = vpop.f32.mrf.mxu0
        %v2883 = vadd.f32 0.0, %v2882
        %v2884 = vpop.f32.mrf.mxu0
        %v2885 = vadd.f32 0.0, %v2884
        %2886 = vmatmul.bf16.gmra.mxu0 %v2769
        %v2887 = vpop.f32.mrf.mxu0
        %v2888 = vadd.f32 0.0, %v2887
        %v2889 = vpop.f32.mrf.mxu0
        %v2890 = vadd.f32 0.0, %v2889
        %2891 = vmatmul.bf16.gmra.mxu0 %v2770
        %v2892 = vpop.f32.mrf.mxu0
        %v2893 = vadd.f32 0.0, %v2892
        %v2894 = vpop.f32.mrf.mxu0
        %v2895 = vadd.f32 0.0, %v2894
        %2896 = vmatmul.bf16.gmra.mxu0 %v2771
        %v2897 = vpop.f32.mrf.mxu0
        %v2898 = vadd.f32 0.0, %v2897
        %v2899 = vpop.f32.mrf.mxu0
        %v2900 = vadd.f32 0.0, %v2899
        %2901 = vmatmul.bf16.gmra.mxu0 %v2772
        %v2902 = vpop.f32.mrf.mxu0
        %v2903 = vadd.f32 0.0, %v2902
        %v2904 = vpop.f32.mrf.mxu0
        %v2905 = vadd.f32 0.0, %v2904
        %2906 = vmatmul.bf16.gmra.mxu0 %v2773
        %v2907 = vpop.f32.mrf.mxu0
        %v2908 = vadd.f32 0.0, %v2907
        %v2909 = vpop.f32.mrf.mxu0
        %v2910 = vadd.f32 0.0, %v2909
        %2911 = vmatmul.bf16.gmra.mxu0 %v2774
        %v2912 = vpop.f32.mrf.mxu0
        %v2913 = vadd.f32 0.0, %v2912
        %v2914 = vpop.f32.mrf.mxu0
        %v2915 = vadd.f32 0.0, %v2914
        %2916 = vmatmul.bf16.gmra.mxu0 %v2775
        %v2917 = vpop.f32.mrf.mxu0
        %v2918 = vadd.f32 0.0, %v2917
        %v2919 = vpop.f32.mrf.mxu0
        %v2920 = vadd.f32 0.0, %v2919
        %2921 = vmatmul.bf16.gmra.mxu0 %v2776
        %v2922 = vpop.f32.mrf.mxu0
        %v2923 = vadd.f32 0.0, %v2922
        %v2924 = vpop.f32.mrf.mxu0
        %v2925 = vadd.f32 0.0, %v2924
        %2926 = vmatmul.bf16.gmra.mxu0 %v2777
        %v2927 = vpop.f32.mrf.mxu0
        %v2928 = vadd.f32 0.0, %v2927
        %v2929 = vpop.f32.mrf.mxu0
        %v2930 = vadd.f32 0.0, %v2929
        %2931 = vmatmul.bf16.gmra.mxu0 %v2778
        %v2932 = vpop.f32.mrf.mxu0
        %v2933 = vadd.f32 0.0, %v2932
        %v2934 = vpop.f32.mrf.mxu0
        %v2935 = vadd.f32 0.0, %v2934
        %2936 = vmatmul.bf16.gmra.mxu0 %v2779
        %v2937 = vpop.f32.mrf.mxu0
        %v2938 = vadd.f32 0.0, %v2937
        %v2939 = vpop.f32.mrf.mxu0
        %2940 = vdwg.mxu0
        %v2982 = vrot.slane %v2838, 2
        %v2983 = vrot.slane %v2838, 4
        %v2984 = vrot.slane %v2838, 6
        %v2985 = vrot.slane %v2840, 2
        %v2986 = vrot.slane %v2840, 4
        %v2987 = vrot.slane %v2840, 6
        %v2988 = vrot.slane %v2843, 2
        %v2989 = vrot.slane %v2843, 4
        %v2990 = vrot.slane %v2843, 6
        %v2991 = vrot.slane %v2845, 2
        %v2992 = vrot.slane %v2845, 4
        %v2993 = vrot.slane %v2845, 6
        %v2994 = vrot.slane %v2848, 2
        %v2995 = vrot.slane %v2848, 4
        %v2996 = vrot.slane %v2848, 6
        %v2997 = vrot.slane %v2850, 2
        %v2998 = vrot.slane %v2850, 4
        %v2999 = vrot.slane %v2850, 6
        %v3000 = vrot.slane %v2853, 2
        %v3001 = vrot.slane %v2853, 4
        %v3002 = vrot.slane %v2853, 6
        %v3003 = vrot.slane %v2855, 2
        %v3004 = vrot.slane %v2855, 4
        %v3005 = vrot.slane %v2855, 6
        %v3006 = vrot.slane %v2858, 2
        %v3007 = vrot.slane %v2858, 4
        %v3008 = vrot.slane %v2858, 6
        %v3009 = vrot.slane %v2860, 2
        %v3010 = vrot.slane %v2860, 4
        %v3011 = vrot.slane %v2860, 6
        %v3012 = vrot.slane %v2863, 2
        %v3013 = vrot.slane %v2863, 4
        %v3014 = vrot.slane %v2863, 6
        %v3015 = vrot.slane %v2865, 2
        %v3016 = vrot.slane %v2865, 4
        %v3017 = vrot.slane %v2865, 6
        %v3018 = vrot.slane %v2868, 2
        %v3019 = vrot.slane %v2868, 4
        %v3020 = vrot.slane %v2868, 6
        %v3021 = vrot.slane %v2870, 2
        %v3022 = vrot.slane %v2870, 4
        %v3023 = vrot.slane %v2870, 6
        %v3024 = vrot.slane %v2873, 2
        %v3025 = vrot.slane %v2873, 4
        %v3026 = vrot.slane %v2873, 6
        %v3027 = vrot.slane %v2875, 2
        %v3028 = vrot.slane %v2875, 4
        %v3029 = vrot.slane %v2875, 6
        %v3030 = vrot.slane %v2878, 2
        %v3031 = vrot.slane %v2878, 4
        %v3032 = vrot.slane %v2878, 6
        %v3033 = vrot.slane %v2880, 2
        %v3034 = vrot.slane %v2880, 4
        %v3035 = vrot.slane %v2880, 6
        %v3036 = vrot.slane %v2883, 2
        %v3037 = vrot.slane %v2883, 4
        %v3038 = vrot.slane %v2883, 6
        %v3039 = vrot.slane %v2885, 2
        %v3040 = vrot.slane %v2885, 4
        %v3041 = vrot.slane %v2885, 6
        %v3042 = vrot.slane %v2888, 2
        %v3043 = vrot.slane %v2888, 4
        %v3044 = vrot.slane %v2888, 6
        %v3045 = vrot.slane %v2890, 2
        %v3046 = vrot.slane %v2890, 4
        %v3047 = vrot.slane %v2890, 6
        %v3048 = vrot.slane %v2893, 2
        %v3049 = vrot.slane %v2893, 4
        %v3050 = vrot.slane %v2893, 6
        %v3051 = vrot.slane %v2895, 2
        %v3052 = vrot.slane %v2895, 4
        %v3053 = vrot.slane %v2895, 6
        %v3054 = vrot.slane %v2898, 2
        %v3055 = vrot.slane %v2898, 4
        %v3056 = vrot.slane %v2898, 6
        %v3057 = vrot.slane %v2900, 2
        %v3058 = vrot.slane %v2900, 4
        %v3059 = vrot.slane %v2900, 6
        %v3060 = vrot.slane %v2903, 2
        %v3061 = vrot.slane %v2903, 4
        %v3062 = vrot.slane %v2903, 6
        %v3063 = vrot.slane %v2905, 2
        %v3064 = vrot.slane %v2905, 4
        %v3065 = vrot.slane %v2905, 6
        %v3066 = vrot.slane %v2908, 2
        %v3067 = vrot.slane %v2908, 4
        %v3068 = vrot.slane %v2908, 6
        %v3069 = vrot.slane %v2910, 2
        %v3070 = vrot.slane %v2910, 4
        %v3071 = vrot.slane %v2910, 6
        %v3072 = vrot.slane %v2913, 2
        %v3073 = vrot.slane %v2913, 4
        %v3074 = vrot.slane %v2913, 6
        %v3075 = vrot.slane %v2915, 2
        %v3076 = vrot.slane %v2915, 4
        %v3077 = vrot.slane %v2915, 6
        %v3078 = vrot.slane %v2918, 2
        %v3079 = vrot.slane %v2918, 4
        %v3080 = vrot.slane %v2918, 6
        %v3081 = vrot.slane %v2920, 2
        %v3082 = vrot.slane %v2920, 4
        %v3083 = vrot.slane %v2920, 6
        %v3084 = vrot.slane %v2923, 2
        %v3085 = vrot.slane %v2923, 4
        %v3086 = vrot.slane %v2923, 6
        %v3087 = vrot.slane %v2925, 2
        %v3088 = vrot.slane %v2925, 4
        %v3089 = vrot.slane %v2925, 6
        %v3090 = vrot.slane %v2928, 2
        %v3091 = vrot.slane %v2928, 4
        %v3092 = vrot.slane %v2928, 6
        %v3093 = vrot.slane %v2930, 2
        %v3094 = vrot.slane %v2930, 4
        %v3095 = vrot.slane %v2930, 6
        %v3096 = vrot.slane %v2933, 2
        %v3097 = vrot.slane %v2933, 4
        %v3098 = vrot.slane %v2933, 6
        %v3099 = vrot.slane %v2935, 2
        %v3100 = vrot.slane %v2935, 4
        %v3101 = vrot.slane %v2935, 6
        %v3102 = vrot.slane %v2938, 2
        %3211 = vst [vmem:[#allocation1] ss:$4 sm:$0xff] %v2838
        %s3212 = scalar_lea.vmem [#allocation1], 1
        %3213 = vst [vmem:[%s3212] ss:$4 sm:$0xff] %v2982
        %s3214 = scalar_lea.vmem [#allocation1], 2
        %3215 = vst [vmem:[%s3214] ss:$4 sm:$0xff] %v2983
        %s3216 = scalar_lea.vmem [#allocation1], 3
        %3217 = vst [vmem:[%s3216] ss:$4 sm:$0xff] %v2984
        %s3218 = scalar_lea.vmem [#allocation1], 32
        %3219 = vst [vmem:[%s3218] ss:$4 sm:$0xff] %v2840
        %s3220 = scalar_lea.vmem [#allocation1], 33
        %3221 = vst [vmem:[%s3220] ss:$4 sm:$0xff] %v2985
        %s3222 = scalar_lea.vmem [#allocation1], 34
        %3223 = vst [vmem:[%s3222] ss:$4 sm:$0xff] %v2986
        %s3224 = scalar_lea.vmem [#allocation1], 35
        %3225 = vst [vmem:[%s3224] ss:$4 sm:$0xff] %v2987
        %v3226 = vld.sshfl [vmem:[#allocation1] sm:$0xff pattern:$0x73625140]
        %v3227 = vld.sshfl [vmem:[#allocation1 + $0x20] sm:$0xff pattern:$0x73625140]
        %3228 = vst [vmem:[#allocation1] ss:$4 sm:$0xff] %v2843
        %v3229 = vld.sshfl [vmem:[#allocation1] sm:$0xff pattern:$0x73625140]
        %3230 = vst [vmem:[%s3218] ss:$4 sm:$0xff] %v2988
        %3231 = vst [vmem:[%s3220] ss:$4 sm:$0xff] %v2989
        %3232 = vst [vmem:[%s3222] ss:$4 sm:$0xff] %v2990
        %3233 = vst [vmem:[%s3224] ss:$4 sm:$0xff] %v2845
        %v3234 = vld.sshfl [vmem:[#allocation1 + $0x20] sm:$0xff pattern:$0x73625140]
        %3235 = vst [vmem:[#allocation1] ss:$4 sm:$0xff] %v2991
        %3236 = vst [vmem:[%s3212] ss:$4 sm:$0xff] %v2992
        %3237 = vst [vmem:[%s3214] ss:$4 sm:$0xff] %v2993
        %3238 = vst [vmem:[%s3216] ss:$4 sm:$0xff] %v2848
        %3239 = vst [vmem:[%s3218] ss:$4 sm:$0xff] %v2994
        %v3240 = vld.sshfl [vmem:[#allocation1] sm:$0xff pattern:$0x73625140]
        %v3241 = vld.sshfl [vmem:[#allocation1 + $0x20] sm:$0xff pattern:$0x73625140]
        %3242 = vst [vmem:[#allocation1] ss:$4 sm:$0xff] %v2995
        %3243 = vst [vmem:[%s3212] ss:$4 sm:$0xff] %v2996
        %3244 = vst [vmem:[%s3214] ss:$4 sm:$0xff] %v2850
        %3245 = vst [vmem:[%s3216] ss:$4 sm:$0xff] %v2997
        %3246 = vst [vmem:[%s3218] ss:$4 sm:$0xff] %v2998
        %3247 = vst [vmem:[%s3220] ss:$4 sm:$0xff] %v2999
        %3248 = vst [vmem:[%s3222] ss:$4 sm:$0xff] %v2853
        %3249 = vst [vmem:[%s3224] ss:$4 sm:$0xff] %v3000
        %v3250 = vld.sshfl [vmem:[#allocation1] sm:$0xff pattern:$0x73625140]
        %v3251 = vld.sshfl [vmem:[#allocation1 + $0x20] sm:$0xff pattern:$0x73625140]
        %3252 = vst [vmem:[#allocation1] ss:$4 sm:$0xff] %v3001
        %v3253 = vld.sshfl [vmem:[#allocation1] sm:$0xff pattern:$0x73625140]
        %3254 = vst [vmem:[%s3218] ss:$4 sm:$0xff] %v3002
        %3255 = vst [vmem:[%s3220] ss:$4 sm:$0xff] %v2855
        %3256 = vst [vmem:[%s3222] ss:$4 sm:$0xff] %v3003
        %3257 = vst [vmem:[%s3224] ss:$4 sm:$0xff] %v3004
        %v3258 = vld.sshfl [vmem:[#allocation1 + $0x20] sm:$0xff pattern:$0x73625140]
        %3259 = vst [vmem:[#allocation1] ss:$4 sm:$0xff] %v3005
        %3260 = vst [vmem:[%s3212] ss:$4 sm:$0xff] %v2858
        %3261 = vst [vmem:[%s3214] ss:$4 sm:$0xff] %v3006
        %3262 = vst [vmem:[%s3216] ss:$4 sm:$0xff] %v3007
        %3263 = vst [vmem:[%s3218] ss:$4 sm:$0xff] %v3008
        %v3264 = vld.sshfl [vmem:[#allocation1] sm:$0xff pattern:$0x73625140]
        %v3265 = vld.sshfl [vmem:[#allocation1 + $0x20] sm:$0xff pattern:$0x73625140]
        %3266 = vst [vmem:[#allocation1] ss:$4 sm:$0xff] %v2860
        %3267 = vst [vmem:[%s3212] ss:$4 sm:$0xff] %v3009
        %3268 = vst [vmem:[%s3214] ss:$4 sm:$0xff] %v3010
        %3269 = vst [vmem:[%s3216] ss:$4 sm:$0xff] %v3011
        %3270 = vst [vmem:[%s3218] ss:$4 sm:$0xff] %v2863
        %3271 = vst [vmem:[%s3220] ss:$4 sm:$0xff] %v3012
        %3272 = vst [vmem:[%s3222] ss:$4 sm:$0xff] %v3013
        %3273 = vst [vmem:[%s3224] ss:$4 sm:$0xff] %v3014
        %v3274 = vld.sshfl [vmem:[#allocation1] sm:$0xff pattern:$0x73625140]
        %v3275 = vld.sshfl [vmem:[#allocation1 + $0x20] sm:$0xff pattern:$0x73625140]
        %3276 = vst [vmem:[#allocation1] ss:$4 sm:$0xff] %v2865
        %v3277 = vld.sshfl [vmem:[#allocation1] sm:$0xff pattern:$0x73625140]
        %3278 = vst [vmem:[%s3218] ss:$4 sm:$0xff] %v3015
        %3279 = vst [vmem:[%s3220] ss:$4 sm:$0xff] %v3016
        %3280 = vst [vmem:[%s3222] ss:$4 sm:$0xff] %v3017
        %3281 = vst [vmem:[%s3224] ss:$4 sm:$0xff] %v2868
        %v3282 = vld.sshfl [vmem:[#allocation1 + $0x20] sm:$0xff pattern:$0x73625140]
        %3283 = vst [vmem:[#allocation1] ss:$4 sm:$0xff] %v3018
        %3284 = vst [vmem:[%s3212] ss:$4 sm:$0xff] %v3019
        %3285 = vst [vmem:[%s3214] ss:$4 sm:$0xff] %v3020
        %3286 = vst [vmem:[%s3216] ss:$4 sm:$0xff] %v2870
        %3287 = vst [vmem:[%s3218] ss:$4 sm:$0xff] %v3021
        %v3288 = vld.sshfl [vmem:[#allocation1] sm:$0xff pattern:$0x73625140]
        %v3289 = vld.sshfl [vmem:[#allocation1 + $0x20] sm:$0xff pattern:$0x73625140]
        %3290 = vst [vmem:[#allocation1] ss:$4 sm:$0xff] %v3022
        %3291 = vst [vmem:[%s3212] ss:$4 sm:$0xff] %v3023
        %3292 = vst [vmem:[%s3214] ss:$4 sm:$0xff] %v2873
        %3293 = vst [vmem:[%s3216] ss:$4 sm:$0xff] %v3024
        %3294 = vst [vmem:[%s3218] ss:$4 sm:$0xff] %v3025
        %3295 = vst [vmem:[%s3220] ss:$4 sm:$0xff] %v3026
        %3296 = vst [vmem:[%s3222] ss:$4 sm:$0xff] %v2875
        %3297 = vst [vmem:[%s3224] ss:$4 sm:$0xff] %v3027
        %v3298 = vld.sshfl [vmem:[#allocation1] sm:$0xff pattern:$0x73625140]
        %v3299 = vld.sshfl [vmem:[#allocation1 + $0x20] sm:$0xff pattern:$0x73625140]
        %3300 = vst [vmem:[#allocation1] ss:$4 sm:$0xff] %v3028
        %v3301 = vld.sshfl [vmem:[#allocation1] sm:$0xff pattern:$0x73625140]
        %3302 = vst [vmem:[%s3218] ss:$4 sm:$0xff] %v3029
        %3303 = vst [vmem:[%s3220] ss:$4 sm:$0xff] %v2878
        %3304 = vst [vmem:[%s3222] ss:$4 sm:$0xff] %v3030
        %3305 = vst [vmem:[%s3224] ss:$4 sm:$0xff] %v3031
        %v3306 = vld.sshfl [vmem:[#allocation1 + $0x20] sm:$0xff pattern:$0x73625140]
        %3307 = vst [vmem:[#allocation1] ss:$4 sm:$0xff] %v3032
        %3308 = vst [vmem:[%s3212] ss:$4 sm:$0xff] %v2880
        %3309 = vst [vmem:[%s3214] ss:$4 sm:$0xff] %v3033
        %3310 = vst [vmem:[%s3216] ss:$4 sm:$0xff] %v3034
        %3311 = vst [vmem:[%s3218] ss:$4 sm:$0xff] %v3035
        %v3312 = vld.sshfl [vmem:[#allocation1] sm:$0xff pattern:$0x73625140]
        %v3313 = vld.sshfl [vmem:[#allocation1 + $0x20] sm:$0xff pattern:$0x73625140]
        %3314 = vst [vmem:[#allocation1] ss:$4 sm:$0xff] %v2883
        %3315 = vst [vmem:[%s3212] ss:$4 sm:$0xff] %v3036
        %3316 = vst [vmem:[%s3214] ss:$4 sm:$0xff] %v3037
        %3317 = vst [vmem:[%s3216] ss:$4 sm:$0xff] %v3038
        %3318 = vst [vmem:[%s3218] ss:$4 sm:$0xff] %v2885
        %3319 = vst [vmem:[%s3220] ss:$4 sm:$0xff] %v3039
        %3320 = vst [vmem:[%s3222] ss:$4 sm:$0xff] %v3040
        %3321 = vst [vmem:[%s3224] ss:$4 sm:$0xff] %v3041
        %v3322 = vld.sshfl [vmem:[#allocation1] sm:$0xff pattern:$0x73625140]
        %v3323 = vld.sshfl [vmem:[#allocation1 + $0x20] sm:$0xff pattern:$0x73625140]
        %3324 = vst [vmem:[#allocation1] ss:$4 sm:$0xff] %v2888
        %v3325 = vld.sshfl [vmem:[#allocation1] sm:$0xff pattern:$0x73625140]
        %3326 = vst [vmem:[%s3218] ss:$4 sm:$0xff] %v3042
        %3327 = vst [vmem:[%s3220] ss:$4 sm:$0xff] %v3043
        %3328 = vst [vmem:[%s3222] ss:$4 sm:$0xff] %v3044
        %3329 = vst [vmem:[%s3224] ss:$4 sm:$0xff] %v2890
        %v3330 = vld.sshfl [vmem:[#allocation1 + $0x20] sm:$0xff pattern:$0x73625140]
        %3331 = vst [vmem:[#allocation1] ss:$4 sm:$0xff] %v3045
        %3332 = vst [vmem:[%s3212] ss:$4 sm:$0xff] %v3046
        %3333 = vst [vmem:[%s3214] ss:$4 sm:$0xff] %v3047
        %3334 = vst [vmem:[%s3216] ss:$4 sm:$0xff] %v2893
        %3335 = vst [vmem:[%s3218] ss:$4 sm:$0xff] %v3048
        %v3336 = vld.sshfl [vmem:[#allocation1] sm:$0xff pattern:$0x73625140]
        %v3337 = vld.sshfl [vmem:[#allocation1 + $0x20] sm:$0xff pattern:$0x73625140]
        %3338 = vst [vmem:[#allocation1] ss:$4 sm:$0xff] %v3049
        %3339 = vst [vmem:[%s3212] ss:$4 sm:$0xff] %v3050
        %3340 = vst [vmem:[%s3214] ss:$4 sm:$0xff] %v2895
        %3341 = vst [vmem:[%s3216] ss:$4 sm:$0xff] %v3051
        %3342 = vst [vmem:[%s3218] ss:$4 sm:$0xff] %v3052
        %3343 = vst [vmem:[%s3220] ss:$4 sm:$0xff] %v3053
        %3344 = vst [vmem:[%s3222] ss:$4 sm:$0xff] %v2898
        %3345 = vst [vmem:[%s3224] ss:$4 sm:$0xff] %v3054
        %v3346 = vld.sshfl [vmem:[#allocation1] sm:$0xff pattern:$0x73625140]
        %v3347 = vld.sshfl [vmem:[#allocation1 + $0x20] sm:$0xff pattern:$0x73625140]
        %3348 = vst [vmem:[#allocation1] ss:$4 sm:$0xff] %v3055
        %v3349 = vld.sshfl [vmem:[#allocation1] sm:$0xff pattern:$0x73625140]
        %3350 = vst [vmem:[%s3218] ss:$4 sm:$0xff] %v3056
        %3351 = vst [vmem:[%s3220] ss:$4 sm:$0xff] %v2900
        %3352 = vst [vmem:[%s3222] ss:$4 sm:$0xff] %v3057
        %3353 = vst [vmem:[%s3224] ss:$4 sm:$0xff] %v3058
        %v3354 = vld.sshfl [vmem:[#allocation1 + $0x20] sm:$0xff pattern:$0x73625140]
        %3355 = vst [vmem:[#allocation1] ss:$4 sm:$0xff] %v3059
        %3356 = vst [vmem:[%s3212] ss:$4 sm:$0xff] %v2903
        %3357 = vst [vmem:[%s3214] ss:$4 sm:$0xff] %v3060
        %3358 = vst [vmem:[%s3216] ss:$4 sm:$0xff] %v3061
        %3359 = vst [vmem:[%s3218] ss:$4 sm:$0xff] %v3062
        %v3360 = vld.sshfl [vmem:[#allocation1] sm:$0xff pattern:$0x73625140]
        %v3361 = vld.sshfl [vmem:[#allocation1 + $0x20] sm:$0xff pattern:$0x73625140]
        %3362 = vst [vmem:[#allocation1] ss:$4 sm:$0xff] %v2905
        %3363 = vst [vmem:[%s3212] ss:$4 sm:$0xff] %v3063
        %3364 = vst [vmem:[%s3214] ss:$4 sm:$0xff] %v3064
        %3365 = vst [vmem:[%s3216] ss:$4 sm:$0xff] %v3065
        %3366 = vst [vmem:[%s3218] ss:$4 sm:$0xff] %v2908
        %3367 = vst [vmem:[%s3220] ss:$4 sm:$0xff] %v3066
        %3368 = vst [vmem:[%s3222] ss:$4 sm:$0xff] %v3067
        %3369 = vst [vmem:[%s3224] ss:$4 sm:$0xff] %v3068
        %v3370 = vld.sshfl [vmem:[#allocation1] sm:$0xff pattern:$0x73625140]
        %v3371 = vld.sshfl [vmem:[#allocation1 + $0x20] sm:$0xff pattern:$0x73625140]
        %3372 = vst [vmem:[#allocation1] ss:$4 sm:$0xff] %v2910
        %v3373 = vld.sshfl [vmem:[#allocation1] sm:$0xff pattern:$0x73625140]
        %3374 = vst [vmem:[%s3218] ss:$4 sm:$0xff] %v3069
        %3375 = vst [vmem:[%s3220] ss:$4 sm:$0xff] %v3070
        %3376 = vst [vmem:[%s3222] ss:$4 sm:$0xff] %v3071
        %3377 = vst [vmem:[%s3224] ss:$4 sm:$0xff] %v2913
        %v3378 = vld.sshfl [vmem:[#allocation1 + $0x20] sm:$0xff pattern:$0x73625140]
        %3379 = vst [vmem:[#allocation1] ss:$4 sm:$0xff] %v3072
        %3380 = vst [vmem:[%s3212] ss:$4 sm:$0xff] %v3073
        %3381 = vst [vmem:[%s3214] ss:$4 sm:$0xff] %v3074
        %3382 = vst [vmem:[%s3216] ss:$4 sm:$0xff] %v2915
        %3383 = vst [vmem:[%s3218] ss:$4 sm:$0xff] %v3075
        %v3384 = vld.sshfl [vmem:[#allocation1] sm:$0xff pattern:$0x73625140]
        %v3385 = vld.sshfl [vmem:[#allocation1 + $0x20] sm:$0xff pattern:$0x73625140]
        %3386 = vst [vmem:[#allocation1] ss:$4 sm:$0xff] %v3076
        %3387 = vst [vmem:[%s3212] ss:$4 sm:$0xff] %v3077
        %3388 = vst [vmem:[%s3214] ss:$4 sm:$0xff] %v2918
        %3389 = vst [vmem:[%s3216] ss:$4 sm:$0xff] %v3078
        %3390 = vst [vmem:[%s3218] ss:$4 sm:$0xff] %v3079
        %3391 = vst [vmem:[%s3220] ss:$4 sm:$0xff] %v3080
        %3392 = vst [vmem:[%s3222] ss:$4 sm:$0xff] %v2920
        %3393 = vst [vmem:[%s3224] ss:$4 sm:$0xff] %v3081
        %v3394 = vld.sshfl [vmem:[#allocation1] sm:$0xff pattern:$0x73625140]
        %v3395 = vld.sshfl [vmem:[#allocation1 + $0x20] sm:$0xff pattern:$0x73625140]
        %3396 = vst [vmem:[#allocation1] ss:$4 sm:$0xff] %v3082
        %v3397 = vld.sshfl [vmem:[#allocation1] sm:$0xff pattern:$0x73625140]
        %3398 = vst [vmem:[%s3218] ss:$4 sm:$0xff] %v3083
        %3399 = vst [vmem:[%s3220] ss:$4 sm:$0xff] %v2923
        %3400 = vst [vmem:[%s3222] ss:$4 sm:$0xff] %v3084
        %3401 = vst [vmem:[%s3224] ss:$4 sm:$0xff] %v3085
        %v3402 = vld.sshfl [vmem:[#allocation1 + $0x20] sm:$0xff pattern:$0x73625140]
        %3403 = vst [vmem:[#allocation1] ss:$4 sm:$0xff] %v3086
        %3404 = vst [vmem:[%s3212] ss:$4 sm:$0xff] %v2925
        %3405 = vst [vmem:[%s3214] ss:$4 sm:$0xff] %v3087
        %3406 = vst [vmem:[%s3216] ss:$4 sm:$0xff] %v3088
        %3407 = vst [vmem:[%s3218] ss:$4 sm:$0xff] %v3089
        %v3408 = vld.sshfl [vmem:[#allocation1] sm:$0xff pattern:$0x73625140]
        %v3409 = vld.sshfl [vmem:[#allocation1 + $0x20] sm:$0xff pattern:$0x73625140]
        %3410 = vst [vmem:[#allocation1] ss:$4 sm:$0xff] %v2928
        %3411 = vst [vmem:[%s3212] ss:$4 sm:$0xff] %v3090
        %3412 = vst [vmem:[%s3214] ss:$4 sm:$0xff] %v3091
        %3413 = vst [vmem:[%s3216] ss:$4 sm:$0xff] %v3092
        %3414 = vst [vmem:[%s3218] ss:$4 sm:$0xff] %v2930
        %3415 = vst [vmem:[%s3220] ss:$4 sm:$0xff] %v3093
        %3416 = vst [vmem:[%s3222] ss:$4 sm:$0xff] %v3094
        %3417 = vst [vmem:[%s3224] ss:$4 sm:$0xff] %v3095
        %v3418 = vld.sshfl [vmem:[#allocation1] sm:$0xff pattern:$0x73625140]
        %v3419 = vld.sshfl [vmem:[#allocation1 + $0x20] sm:$0xff pattern:$0x73625140]
        %3420 = vst [vmem:[#allocation1] ss:$4 sm:$0xff] %v2933
        %v3421 = vld.sshfl [vmem:[#allocation1] sm:$0xff pattern:$0x73625140]
        %3422 = vst [vmem:[%s3218] ss:$4 sm:$0xff] %v3096
        %3423 = vst [vmem:[%s3220] ss:$4 sm:$0xff] %v3097
        %3424 = vst [vmem:[%s3222] ss:$4 sm:$0xff] %v3098
        %3425 = vst [vmem:[%s3224] ss:$4 sm:$0xff] %v2935
        %v3426 = vld.sshfl [vmem:[#allocation1 + $0x20] sm:$0xff pattern:$0x73625140]
        %3427 = vst [vmem:[#allocation1] ss:$4 sm:$0xff] %v3099
        %3428 = vst [vmem:[%s3212] ss:$4 sm:$0xff] %v3100
        %3429 = vst [vmem:[%s3214] ss:$4 sm:$0xff] %v3101
        %3430 = vst [vmem:[%s3216] ss:$4 sm:$0xff] %v2938
        %3431 = vst [vmem:[%s3218] ss:$4 sm:$0xff] %v3102
        %v3432 = vld.sshfl [vmem:[#allocation1] sm:$0xff pattern:$0x73625140]
        %v3433 = vld.sshfl [vmem:[#allocation1 + $0x20] sm:$0xff pattern:$0x73625140]
        %3488 = vst.msk [vmem:[%s216] sm:$0xff] %vm1851, %v3226
        %3489 = vst.msk [vmem:[%s216 + $0x8] sm:$0xff] %vm1851, %v3227
        %vm3490 = vcmask 58368
        %3491 = vst.msk [vmem:[%s216 + $0x10] sm:$0x3] %vm3490, %v3229
        %3492 = vst.msk [vmem:[%s216 + $0x18] sm:$0xff] %vm1851, %v3234
        %3493 = vst.msk [vmem:[%s216 + $0x20] sm:$0xff] %vm1851, %v3240
        %3494 = vst.msk [vmem:[%s216 + $0x28] sm:$0x3] %vm3490, %v3241
        %3495 = vst.msk [vmem:[%s216 + $0x30] sm:$0xff] %vm1851, %v3250
        %3496 = vst.msk [vmem:[%s216 + $0x38] sm:$0xff] %vm1851, %v3251
        %3497 = vst.msk [vmem:[%s216 + $0x40] sm:$0x3] %vm3490, %v3253
        %3498 = vst.msk [vmem:[%s216 + $0x48] sm:$0xff] %vm1851, %v3258
        %3499 = vst.msk [vmem:[%s216 + $0x50] sm:$0xff] %vm1851, %v3264
        %3500 = vst.msk [vmem:[%s216 + $0x58] sm:$0x3] %vm3490, %v3265
        %3501 = vst.msk [vmem:[%s216 + $0x60] sm:$0xff] %vm1851, %v3274
        %3502 = vst.msk [vmem:[%s216 + $0x68] sm:$0xff] %vm1851, %v3275
        %3503 = vst.msk [vmem:[%s216 + $0x70] sm:$0x3] %vm3490, %v3277
        %3504 = vst.msk [vmem:[%s216 + $0x78] sm:$0xff] %vm1851, %v3282
        %3505 = vst.msk [vmem:[%s216 + $0x80] sm:$0xff] %vm1851, %v3288
        %3506 = vst.msk [vmem:[%s216 + $0x88] sm:$0x3] %vm3490, %v3289
        %3507 = vst.msk [vmem:[%s216 + $0x90] sm:$0xff] %vm1851, %v3298
        %3508 = vst.msk [vmem:[%s216 + $0x98] sm:$0xff] %vm1851, %v3299
        %3509 = vst.msk [vmem:[%s216 + $0xa0] sm:$0x3] %vm3490, %v3301
        %3510 = vst.msk [vmem:[%s216 + $0xa8] sm:$0xff] %vm1851, %v3306
        %3511 = vst.msk [vmem:[%s216 + $0xb0] sm:$0xff] %vm1851, %v3312
        %3512 = vst.msk [vmem:[%s216 + $0xb8] sm:$0x3] %vm3490, %v3313
        %3513 = vst.msk [vmem:[%s216 + $0xc0] sm:$0xff] %vm1851, %v3322
        %3514 = vst.msk [vmem:[%s216 + $0xc8] sm:$0xff] %vm1851, %v3323
        %3515 = vst.msk [vmem:[%s216 + $0xd0] sm:$0x3] %vm3490, %v3325
        %3516 = vst.msk [vmem:[%s216 + $0xd8] sm:$0xff] %vm1851, %v3330
        %3517 = vst.msk [vmem:[%s216 + $0xe0] sm:$0xff] %vm1851, %v3336
        %3518 = vst.msk [vmem:[%s216 + $0xe8] sm:$0x3] %vm3490, %v3337
        %3519 = vst.msk [vmem:[%s216 + $0xf0] sm:$0xff] %vm1851, %v3346
        %3520 = vst.msk [vmem:[%s216 + $0xf8] sm:$0xff] %vm1851, %v3347
        %3521 = vst.msk [vmem:[%s216 + $0x100] sm:$0x3] %vm3490, %v3349
        %3522 = vst.msk [vmem:[%s216 + $0x108] sm:$0xff] %vm1851, %v3354
        %3523 = vst.msk [vmem:[%s216 + $0x110] sm:$0xff] %vm1851, %v3360
        %3524 = vst.msk [vmem:[%s216 + $0x118] sm:$0x3] %vm3490, %v3361
        %3525 = vst.msk [vmem:[%s216 + $0x120] sm:$0xff] %vm1851, %v3370
        %3526 = vst.msk [vmem:[%s216 + $0x128] sm:$0xff] %vm1851, %v3371
        %3527 = vst.msk [vmem:[%s216 + $0x130] sm:$0x3] %vm3490, %v3373
        %3528 = vst.msk [vmem:[%s216 + $0x138] sm:$0xff] %vm1851, %v3378
        %3529 = vst.msk [vmem:[%s216 + $0x140] sm:$0xff] %vm1851, %v3384
        %3530 = vst.msk [vmem:[%s216 + $0x148] sm:$0x3] %vm3490, %v3385
        %3531 = vst.msk [vmem:[%s216 + $0x150] sm:$0xff] %vm1851, %v3394
        %3532 = vst.msk [vmem:[%s216 + $0x158] sm:$0xff] %vm1851, %v3395
        %3533 = vst.msk [vmem:[%s216 + $0x160] sm:$0x3] %vm3490, %v3397
        %3534 = vst.msk [vmem:[%s216 + $0x168] sm:$0xff] %vm1851, %v3402
        %3535 = vst.msk [vmem:[%s216 + $0x170] sm:$0xff] %vm1851, %v3408
        %3536 = vst.msk [vmem:[%s216 + $0x178] sm:$0x3] %vm3490, %v3409
        %3537 = vst.msk [vmem:[%s216 + $0x180] sm:$0xff] %vm1851, %v3418
        %3538 = vst.msk [vmem:[%s216 + $0x188] sm:$0xff] %vm1851, %v3419
        %3539 = vst.msk [vmem:[%s216 + $0x190] sm:$0x3] %vm3490, %v3421
        %3540 = vst.msk [vmem:[%s216 + $0x198] sm:$0xff] %vm1851, %v3426
        %3541 = vst.msk [vmem:[%s216 + $0x1a0] sm:$0xff] %vm1851, %v3432
        %3542 = vst.msk [vmem:[%s216 + $0x1a8] sm:$0x3] %vm3490, %v3433
        %3543 = vst [vmem:[#allocation1] ss:$4 sm:$0xff] %v2988
        %s3544 = scalar_lea.vmem [#allocation1], 1
        %3545 = vst [vmem:[%s3544] ss:$4 sm:$0xff] %v2989
        %s3546 = scalar_lea.vmem [#allocation1], 2
        %3547 = vst [vmem:[%s3546] ss:$4 sm:$0xff] %v2990
        %s3548 = scalar_lea.vmem [#allocation1], 3
        %3549 = vst [vmem:[%s3548] ss:$4 sm:$0xff] %v2845
        %s3550 = scalar_lea.vmem [#allocation1], 32
        %3551 = vst [vmem:[%s3550] ss:$4 sm:$0xff] %v2991
        %s3552 = scalar_lea.vmem [#allocation1], 33
        %3553 = vst [vmem:[%s3552] ss:$4 sm:$0xff] %v2992
        %s3554 = scalar_lea.vmem [#allocation1], 34
        %3555 = vst [vmem:[%s3554] ss:$4 sm:$0xff] %v2993
        %s3556 = scalar_lea.vmem [#allocation1], 35
        %3557 = vst [vmem:[%s3556] ss:$4 sm:$0xff] %v2848
        %v3558 = vld.sshfl [vmem:[#allocation1] sm:$0xff pattern:$0x73625140]
        %v3559 = vld.sshfl [vmem:[#allocation1 + $0x20] sm:$0xff pattern:$0x73625140]
        %3560 = vst [vmem:[#allocation1] ss:$4 sm:$0xff] %v2994
        %v3561 = vld.sshfl [vmem:[#allocation1] sm:$0xff pattern:$0x73625140]
        %3562 = vst [vmem:[%s3550] ss:$4 sm:$0xff] %v2995
        %3563 = vst [vmem:[%s3552] ss:$4 sm:$0xff] %v2996
        %3564 = vst [vmem:[%s3554] ss:$4 sm:$0xff] %v2850
        %3565 = vst [vmem:[%s3556] ss:$4 sm:$0xff] %v2997
        %v3566 = vld.sshfl [vmem:[#allocation1 + $0x20] sm:$0xff pattern:$0x73625140]
        %3567 = vst [vmem:[#allocation1] ss:$4 sm:$0xff] %v2998
        %3568 = vst [vmem:[%s3544] ss:$4 sm:$0xff] %v2999
        %3569 = vst [vmem:[%s3546] ss:$4 sm:$0xff] %v2853
        %3570 = vst [vmem:[%s3548] ss:$4 sm:$0xff] %v3000
        %3571 = vst [vmem:[%s3550] ss:$4 sm:$0xff] %v3001
        %v3572 = vld.sshfl [vmem:[#allocation1] sm:$0xff pattern:$0x73625140]
        %v3573 = vld.sshfl [vmem:[#allocation1 + $0x20] sm:$0xff pattern:$0x73625140]
        %3574 = vst [vmem:[#allocation1] ss:$4 sm:$0xff] %v3002
        %3575 = vst [vmem:[%s3544] ss:$4 sm:$0xff] %v2855
        %3576 = vst [vmem:[%s3546] ss:$4 sm:$0xff] %v3003
        %3577 = vst [vmem:[%s3548] ss:$4 sm:$0xff] %v3004
        %3578 = vst [vmem:[%s3550] ss:$4 sm:$0xff] %v3005
        %3579 = vst [vmem:[%s3552] ss:$4 sm:$0xff] %v2858
        %3580 = vst [vmem:[%s3554] ss:$4 sm:$0xff] %v3006
        %3581 = vst [vmem:[%s3556] ss:$4 sm:$0xff] %v3007
        %v3582 = vld.sshfl [vmem:[#allocation1] sm:$0xff pattern:$0x73625140]
        %v3583 = vld.sshfl [vmem:[#allocation1 + $0x20] sm:$0xff pattern:$0x73625140]
        %3584 = vst [vmem:[#allocation1] ss:$4 sm:$0xff] %v3008
        %v3585 = vld.sshfl [vmem:[#allocation1] sm:$0xff pattern:$0x73625140]
        %3586 = vst [vmem:[%s3550] ss:$4 sm:$0xff] %v2860
        %3587 = vst [vmem:[%s3552] ss:$4 sm:$0xff] %v3009
        %3588 = vst [vmem:[%s3554] ss:$4 sm:$0xff] %v3010
        %3589 = vst [vmem:[%s3556] ss:$4 sm:$0xff] %v3011
        %v3590 = vld.sshfl [vmem:[#allocation1 + $0x20] sm:$0xff pattern:$0x73625140]
        %3591 = vst [vmem:[#allocation1] ss:$4 sm:$0xff] %v2863
        %3592 = vst [vmem:[%s3544] ss:$4 sm:$0xff] %v3012
        %3593 = vst [vmem:[%s3546] ss:$4 sm:$0xff] %v3013
        %3594 = vst [vmem:[%s3548] ss:$4 sm:$0xff] %v3014
        %3595 = vst [vmem:[%s3550] ss:$4 sm:$0xff] %v2865
        %v3596 = vld.sshfl [vmem:[#allocation1] sm:$0xff pattern:$0x73625140]
        %v3597 = vld.sshfl [vmem:[#allocation1 + $0x20] sm:$0xff pattern:$0x73625140]
        %3598 = vst [vmem:[#allocation1] ss:$4 sm:$0xff] %v3015
        %3599 = vst [vmem:[%s3544] ss:$4 sm:$0xff] %v3016
        %3600 = vst [vmem:[%s3546] ss:$4 sm:$0xff] %v3017
        %3601 = vst [vmem:[%s3548] ss:$4 sm:$0xff] %v2868
        %3602 = vst [vmem:[%s3550] ss:$4 sm:$0xff] %v3018
        %3603 = vst [vmem:[%s3552] ss:$4 sm:$0xff] %v3019
        %3604 = vst [vmem:[%s3554] ss:$4 sm:$0xff] %v3020
        %3605 = vst [vmem:[%s3556] ss:$4 sm:$0xff] %v2870
        %v3606 = vld.sshfl [vmem:[#allocation1] sm:$0xff pattern:$0x73625140]
        %v3607 = vld.sshfl [vmem:[#allocation1 + $0x20] sm:$0xff pattern:$0x73625140]
        %3608 = vst [vmem:[#allocation1] ss:$4 sm:$0xff] %v3021
        %v3609 = vld.sshfl [vmem:[#allocation1] sm:$0xff pattern:$0x73625140]
        %3610 = vst [vmem:[%s3550] ss:$4 sm:$0xff] %v3022
        %3611 = vst [vmem:[%s3552] ss:$4 sm:$0xff] %v3023
        %3612 = vst [vmem:[%s3554] ss:$4 sm:$0xff] %v2873
        %3613 = vst [vmem:[%s3556] ss:$4 sm:$0xff] %v3024
        %v3614 = vld.sshfl [vmem:[#allocation1 + $0x20] sm:$0xff pattern:$0x73625140]
        %3615 = vst [vmem:[#allocation1] ss:$4 sm:$0xff] %v3025
        %3616 = vst [vmem:[%s3544] ss:$4 sm:$0xff] %v3026
        %3617 = vst [vmem:[%s3546] ss:$4 sm:$0xff] %v2875
        %3618 = vst [vmem:[%s3548] ss:$4 sm:$0xff] %v3027
        %3619 = vst [vmem:[%s3550] ss:$4 sm:$0xff] %v3028
        %v3620 = vld.sshfl [vmem:[#allocation1] sm:$0xff pattern:$0x73625140]
        %v3621 = vld.sshfl [vmem:[#allocation1 + $0x20] sm:$0xff pattern:$0x73625140]
        %3622 = vst [vmem:[#allocation1] ss:$4 sm:$0xff] %v3029
        %3623 = vst [vmem:[%s3544] ss:$4 sm:$0xff] %v2878
        %3624 = vst [vmem:[%s3546] ss:$4 sm:$0xff] %v3030
        %3625 = vst [vmem:[%s3548] ss:$4 sm:$0xff] %v3031
        %3626 = vst [vmem:[%s3550] ss:$4 sm:$0xff] %v3032
        %3627 = vst [vmem:[%s3552] ss:$4 sm:$0xff] %v2880
        %3628 = vst [vmem:[%s3554] ss:$4 sm:$0xff] %v3033
        %3629 = vst [vmem:[%s3556] ss:$4 sm:$0xff] %v3034
        %v3630 = vld.sshfl [vmem:[#allocation1] sm:$0xff pattern:$0x73625140]
        %v3631 = vld.sshfl [vmem:[#allocation1 + $0x20] sm:$0xff pattern:$0x73625140]
        %3632 = vst [vmem:[#allocation1] ss:$4 sm:$0xff] %v3035
        %v3633 = vld.sshfl [vmem:[#allocation1] sm:$0xff pattern:$0x73625140]
        %3634 = vst [vmem:[%s3550] ss:$4 sm:$0xff] %v2883
        %3635 = vst [vmem:[%s3552] ss:$4 sm:$0xff] %v3036
        %3636 = vst [vmem:[%s3554] ss:$4 sm:$0xff] %v3037
        %3637 = vst [vmem:[%s3556] ss:$4 sm:$0xff] %v3038
        %v3638 = vld.sshfl [vmem:[#allocation1 + $0x20] sm:$0xff pattern:$0x73625140]
        %3639 = vst [vmem:[#allocation1] ss:$4 sm:$0xff] %v2885
        %3640 = vst [vmem:[%s3544] ss:$4 sm:$0xff] %v3039
        %3641 = vst [vmem:[%s3546] ss:$4 sm:$0xff] %v3040
        %3642 = vst [vmem:[%s3548] ss:$4 sm:$0xff] %v3041
        %3643 = vst [vmem:[%s3550] ss:$4 sm:$0xff] %v2888
        %v3644 = vld.sshfl [vmem:[#allocation1] sm:$0xff pattern:$0x73625140]
        %v3645 = vld.sshfl [vmem:[#allocation1 + $0x20] sm:$0xff pattern:$0x73625140]
        %3646 = vst [vmem:[#allocation1] ss:$4 sm:$0xff] %v3042
        %3647 = vst [vmem:[%s3544] ss:$4 sm:$0xff] %v3043
        %3648 = vst [vmem:[%s3546] ss:$4 sm:$0xff] %v3044
        %3649 = vst [vmem:[%s3548] ss:$4 sm:$0xff] %v2890
        %3650 = vst [vmem:[%s3550] ss:$4 sm:$0xff] %v3045
        %3651 = vst [vmem:[%s3552] ss:$4 sm:$0xff] %v3046
        %3652 = vst [vmem:[%s3554] ss:$4 sm:$0xff] %v3047
        %3653 = vst [vmem:[%s3556] ss:$4 sm:$0xff] %v2893
        %v3654 = vld.sshfl [vmem:[#allocation1] sm:$0xff pattern:$0x73625140]
        %v3655 = vld.sshfl [vmem:[#allocation1 + $0x20] sm:$0xff pattern:$0x73625140]
        %3656 = vst [vmem:[#allocation1] ss:$4 sm:$0xff] %v3048
        %v3657 = vld.sshfl [vmem:[#allocation1] sm:$0xff pattern:$0x73625140]
        %3658 = vst [vmem:[%s3550] ss:$4 sm:$0xff] %v3049
        %3659 = vst [vmem:[%s3552] ss:$4 sm:$0xff] %v3050
        %3660 = vst [vmem:[%s3554] ss:$4 sm:$0xff] %v2895
        %3661 = vst [vmem:[%s3556] ss:$4 sm:$0xff] %v3051
        %v3662 = vld.sshfl [vmem:[#allocation1 + $0x20] sm:$0xff pattern:$0x73625140]
        %3663 = vst [vmem:[#allocation1] ss:$4 sm:$0xff] %v3052
        %3664 = vst [vmem:[%s3544] ss:$4 sm:$0xff] %v3053
        %3665 = vst [vmem:[%s3546] ss:$4 sm:$0xff] %v2898
        %3666 = vst [vmem:[%s3548] ss:$4 sm:$0xff] %v3054
        %3667 = vst [vmem:[%s3550] ss:$4 sm:$0xff] %v3055
        %v3668 = vld.sshfl [vmem:[#allocation1] sm:$0xff pattern:$0x73625140]
        %v3669 = vld.sshfl [vmem:[#allocation1 + $0x20] sm:$0xff pattern:$0x73625140]
        %3670 = vst [vmem:[#allocation1] ss:$4 sm:$0xff] %v3056
        %3671 = vst [vmem:[%s3544] ss:$4 sm:$0xff] %v2900
        %3672 = vst [vmem:[%s3546] ss:$4 sm:$0xff] %v3057
        %3673 = vst [vmem:[%s3548] ss:$4 sm:$0xff] %v3058
        %3674 = vst [vmem:[%s3550] ss:$4 sm:$0xff] %v3059
        %3675 = vst [vmem:[%s3552] ss:$4 sm:$0xff] %v2903
        %3676 = vst [vmem:[%s3554] ss:$4 sm:$0xff] %v3060
        %3677 = vst [vmem:[%s3556] ss:$4 sm:$0xff] %v3061
        %v3678 = vld.sshfl [vmem:[#allocation1] sm:$0xff pattern:$0x73625140]
        %v3679 = vld.sshfl [vmem:[#allocation1 + $0x20] sm:$0xff pattern:$0x73625140]
        %3680 = vst [vmem:[#allocation1] ss:$4 sm:$0xff] %v3062
        %v3681 = vld.sshfl [vmem:[#allocation1] sm:$0xff pattern:$0x73625140]
        %3682 = vst [vmem:[%s3550] ss:$4 sm:$0xff] %v2905
        %3683 = vst [vmem:[%s3552] ss:$4 sm:$0xff] %v3063
        %3684 = vst [vmem:[%s3554] ss:$4 sm:$0xff] %v3064
        %3685 = vst [vmem:[%s3556] ss:$4 sm:$0xff] %v3065
        %v3686 = vld.sshfl [vmem:[#allocation1 + $0x20] sm:$0xff pattern:$0x73625140]
        %3687 = vst [vmem:[#allocation1] ss:$4 sm:$0xff] %v2908
        %3688 = vst [vmem:[%s3544] ss:$4 sm:$0xff] %v3066
        %3689 = vst [vmem:[%s3546] ss:$4 sm:$0xff] %v3067
        %3690 = vst [vmem:[%s3548] ss:$4 sm:$0xff] %v3068
        %3691 = vst [vmem:[%s3550] ss:$4 sm:$0xff] %v2910
        %v3692 = vld.sshfl [vmem:[#allocation1] sm:$0xff pattern:$0x73625140]
        %v3693 = vld.sshfl [vmem:[#allocation1 + $0x20] sm:$0xff pattern:$0x73625140]
        %3694 = vst [vmem:[#allocation1] ss:$4 sm:$0xff] %v3069
        %3695 = vst [vmem:[%s3544] ss:$4 sm:$0xff] %v3070
        %3696 = vst [vmem:[%s3546] ss:$4 sm:$0xff] %v3071
        %3697 = vst [vmem:[%s3548] ss:$4 sm:$0xff] %v2913
        %3698 = vst [vmem:[%s3550] ss:$4 sm:$0xff] %v3072
        %3699 = vst [vmem:[%s3552] ss:$4 sm:$0xff] %v3073
        %3700 = vst [vmem:[%s3554] ss:$4 sm:$0xff] %v3074
        %3701 = vst [vmem:[%s3556] ss:$4 sm:$0xff] %v2915
        %v3702 = vld.sshfl [vmem:[#allocation1] sm:$0xff pattern:$0x73625140]
        %v3703 = vld.sshfl [vmem:[#allocation1 + $0x20] sm:$0xff pattern:$0x73625140]
        %3704 = vst [vmem:[#allocation1] ss:$4 sm:$0xff] %v3075
        %v3705 = vld.sshfl [vmem:[#allocation1] sm:$0xff pattern:$0x73625140]
        %3706 = vst [vmem:[%s3550] ss:$4 sm:$0xff] %v3076
        %3707 = vst [vmem:[%s3552] ss:$4 sm:$0xff] %v3077
        %3708 = vst [vmem:[%s3554] ss:$4 sm:$0xff] %v2918
        %3709 = vst [vmem:[%s3556] ss:$4 sm:$0xff] %v3078
        %v3710 = vld.sshfl [vmem:[#allocation1 + $0x20] sm:$0xff pattern:$0x73625140]
        %3711 = vst [vmem:[#allocation1] ss:$4 sm:$0xff] %v3079
        %3712 = vst [vmem:[%s3544] ss:$4 sm:$0xff] %v3080
        %3713 = vst [vmem:[%s3546] ss:$4 sm:$0xff] %v2920
        %3714 = vst [vmem:[%s3548] ss:$4 sm:$0xff] %v3081
        %3715 = vst [vmem:[%s3550] ss:$4 sm:$0xff] %v3082
        %v3716 = vld.sshfl [vmem:[#allocation1] sm:$0xff pattern:$0x73625140]
        %v3717 = vld.sshfl [vmem:[#allocation1 + $0x20] sm:$0xff pattern:$0x73625140]
        %3718 = vst [vmem:[#allocation1] ss:$4 sm:$0xff] %v3083
        %3719 = vst [vmem:[%s3544] ss:$4 sm:$0xff] %v2923
        %3720 = vst [vmem:[%s3546] ss:$4 sm:$0xff] %v3084
        %3721 = vst [vmem:[%s3548] ss:$4 sm:$0xff] %v3085
        %3722 = vst [vmem:[%s3550] ss:$4 sm:$0xff] %v3086
        %3723 = vst [vmem:[%s3552] ss:$4 sm:$0xff] %v2925
        %3724 = vst [vmem:[%s3554] ss:$4 sm:$0xff] %v3087
        %3725 = vst [vmem:[%s3556] ss:$4 sm:$0xff] %v3088
        %v3726 = vld.sshfl [vmem:[#allocation1] sm:$0xff pattern:$0x73625140]
        %v3727 = vld.sshfl [vmem:[#allocation1 + $0x20] sm:$0xff pattern:$0x73625140]
        %3728 = vst [vmem:[#allocation1] ss:$4 sm:$0xff] %v3089
        %v3729 = vld.sshfl [vmem:[#allocation1] sm:$0xff pattern:$0x73625140]
        %3730 = vst [vmem:[%s3550] ss:$4 sm:$0xff] %v2928
        %3731 = vst [vmem:[%s3552] ss:$4 sm:$0xff] %v3090
        %3732 = vst [vmem:[%s3554] ss:$4 sm:$0xff] %v3091
        %3733 = vst [vmem:[%s3556] ss:$4 sm:$0xff] %v3092
        %v3734 = vld.sshfl [vmem:[#allocation1 + $0x20] sm:$0xff pattern:$0x73625140]
        %3735 = vst [vmem:[#allocation1] ss:$4 sm:$0xff] %v2930
        %3736 = vst [vmem:[%s3544] ss:$4 sm:$0xff] %v3093
        %3737 = vst [vmem:[%s3546] ss:$4 sm:$0xff] %v3094
        %3738 = vst [vmem:[%s3548] ss:$4 sm:$0xff] %v3095
        %3739 = vst [vmem:[%s3550] ss:$4 sm:$0xff] %v2933
        %v3740 = vld.sshfl [vmem:[#allocation1] sm:$0xff pattern:$0x73625140]
        %v3741 = vld.sshfl [vmem:[#allocation1 + $0x20] sm:$0xff pattern:$0x73625140]
        %v3742 = vrot.slane %v3558, 1
        %v3743 = vrot.slane %v3559, 1
        %v3744 = vsel %vm347, %v3742, %v3743
        %v3745 = vrot.slane %v3561, 1
        %v3746 = vsel %vm347, %v3743, %v3745
        %v3747 = vrot.slane %v3566, 1
        %v3748 = vrot.slane %v3572, 1
        %v3749 = vsel %vm347, %v3747, %v3748
        %v3750 = vrot.slane %v3573, 1
        %v3751 = vsel %vm347, %v3748, %v3750
        %v3752 = vrot.slane %v3582, 1
        %v3753 = vrot.slane %v3583, 1
        %v3754 = vsel %vm347, %v3752, %v3753
        %v3755 = vrot.slane %v3585, 1
        %v3756 = vsel %vm347, %v3753, %v3755
        %v3757 = vrot.slane %v3590, 1
        %v3758 = vrot.slane %v3596, 1
        %v3759 = vsel %vm347, %v3757, %v3758
        %v3760 = vrot.slane %v3597, 1
        %v3761 = vsel %vm347, %v3758, %v3760
        %v3762 = vrot.slane %v3606, 1
        %v3763 = vrot.slane %v3607, 1
        %v3764 = vsel %vm347, %v3762, %v3763
        %v3765 = vrot.slane %v3609, 1
        %v3766 = vsel %vm347, %v3763, %v3765
        %v3767 = vrot.slane %v3614, 1
        %v3768 = vrot.slane %v3620, 1
        %v3769 = vsel %vm347, %v3767, %v3768
        %v3770 = vrot.slane %v3621, 1
        %v3771 = vsel %vm347, %v3768, %v3770
        %v3772 = vrot.slane %v3630, 1
        %v3773 = vrot.slane %v3631, 1
        %v3774 = vsel %vm347, %v3772, %v3773
        %v3775 = vrot.slane %v3633, 1
        %v3776 = vsel %vm347, %v3773, %v3775
        %v3777 = vrot.slane %v3638, 1
        %v3778 = vrot.slane %v3644, 1
        %v3779 = vsel %vm347, %v3777, %v3778
        %v3780 = vrot.slane %v3645, 1
        %v3781 = vsel %vm347, %v3778, %v3780
        %v3782 = vrot.slane %v3654, 1
        %v3783 = vrot.slane %v3655, 1
        %v3784 = vsel %vm347, %v3782, %v3783
        %v3785 = vrot.slane %v3657, 1
        %v3786 = vsel %vm347, %v3783, %v3785
        %v3787 = vrot.slane %v3662, 1
        %v3788 = vrot.slane %v3668, 1
        %v3789 = vsel %vm347, %v3787, %v3788
        %v3790 = vrot.slane %v3669, 1
        %v3791 = vsel %vm347, %v3788, %v3790
        %v3792 = vrot.slane %v3678, 1
        %v3793 = vrot.slane %v3679, 1
        %v3794 = vsel %vm347, %v3792, %v3793
        %v3795 = vrot.slane %v3681, 1
        %v3796 = vsel %vm347, %v3793, %v3795
        %v3797 = vrot.slane %v3686, 1
        %v3798 = vrot.slane %v3692, 1
        %v3799 = vsel %vm347, %v3797, %v3798
        %v3800 = vrot.slane %v3693, 1
        %v3801 = vsel %vm347, %v3798, %v3800
        %v3802 = vrot.slane %v3702, 1
        %v3803 = vrot.slane %v3703, 1
        %v3804 = vsel %vm347, %v3802, %v3803
        %v3805 = vrot.slane %v3705, 1
        %v3806 = vsel %vm347, %v3803, %v3805
        %v3807 = vrot.slane %v3710, 1
        %v3808 = vrot.slane %v3716, 1
        %v3809 = vsel %vm347, %v3807, %v3808
        %v3810 = vrot.slane %v3717, 1
        %v3811 = vsel %vm347, %v3808, %v3810
        %v3812 = vrot.slane %v3726, 1
        %v3813 = vrot.slane %v3727, 1
        %v3814 = vsel %vm347, %v3812, %v3813
        %v3815 = vrot.slane %v3729, 1
        %v3816 = vsel %vm347, %v3813, %v3815
        %v3817 = vrot.slane %v3734, 1
        %v3818 = vrot.slane %v3740, 1
        %v3819 = vsel %vm347, %v3817, %v3818
        %v3820 = vrot.slane %v3741, 1
        %v3821 = vsel %vm347, %v3818, %v3820
        %v3854 = vsel %vm1851, %v3744, 0.0
        %v3855 = vsel %vm1851, %v3746, 0.0
        %v3856 = vadd.f32 %v3854, %v3855
        %v3857 = vsel %vm1851, %v3749, 0.0
        %v3858 = vadd.f32 %v3856, %v3857
        %v3859 = vsel %vm1851, %v3751, 0.0
        %v3860 = vadd.f32 %v3858, %v3859
        %v3861 = vsel %vm1851, %v3754, 0.0
        %v3862 = vadd.f32 %v3860, %v3861
        %v3863 = vsel %vm1851, %v3756, 0.0
        %v3864 = vadd.f32 %v3862, %v3863
        %v3865 = vsel %vm1851, %v3759, 0.0
        %v3866 = vadd.f32 %v3864, %v3865
        %v3867 = vsel %vm1851, %v3761, 0.0
        %v3868 = vadd.f32 %v3866, %v3867
        %v3869 = vsel %vm1851, %v3764, 0.0
        %v3870 = vadd.f32 %v3868, %v3869
        %v3871 = vsel %vm1851, %v3766, 0.0
        %v3872 = vadd.f32 %v3870, %v3871
        %v3873 = vsel %vm1851, %v3769, 0.0
        %v3874 = vadd.f32 %v3872, %v3873
        %v3875 = vsel %vm1851, %v3771, 0.0
        %v3876 = vadd.f32 %v3874, %v3875
        %v3877 = vsel %vm1851, %v3774, 0.0
        %v3878 = vadd.f32 %v3876, %v3877
        %v3879 = vsel %vm1851, %v3776, 0.0
        %v3880 = vadd.f32 %v3878, %v3879
        %v3881 = vsel %vm1851, %v3779, 0.0
        %v3882 = vadd.f32 %v3880, %v3881
        %v3883 = vsel %vm1851, %v3781, 0.0
        %v3884 = vadd.f32 %v3882, %v3883
        %v3885 = vsel %vm1851, %v3784, 0.0
        %v3886 = vadd.f32 %v3884, %v3885
        %v3887 = vsel %vm1851, %v3786, 0.0
        %v3888 = vadd.f32 %v3886, %v3887
        %v3889 = vsel %vm1851, %v3789, 0.0
        %v3890 = vadd.f32 %v3888, %v3889
        %v3891 = vsel %vm1851, %v3791, 0.0
        %v3892 = vadd.f32 %v3890, %v3891
        %v3893 = vsel %vm1851, %v3794, 0.0
        %v3894 = vadd.f32 %v3892, %v3893
        %v3895 = vsel %vm1851, %v3796, 0.0
        %v3896 = vadd.f32 %v3894, %v3895
        %v3897 = vsel %vm1851, %v3799, 0.0
        %v3898 = vadd.f32 %v3896, %v3897
        %v3899 = vsel %vm1851, %v3801, 0.0
        %v3900 = vadd.f32 %v3898, %v3899
        %v3901 = vsel %vm1851, %v3804, 0.0
        %v3902 = vadd.f32 %v3900, %v3901
        %v3903 = vsel %vm1851, %v3806, 0.0
        %v3904 = vadd.f32 %v3902, %v3903
        %v3905 = vsel %vm1851, %v3809, 0.0
        %v3906 = vadd.f32 %v3904, %v3905
        %v3907 = vsel %vm1851, %v3811, 0.0
        %v3908 = vadd.f32 %v3906, %v3907
        %v3909 = vsel %vm1851, %v3814, 0.0
        %v3910 = vadd.f32 %v3908, %v3909
        %v3911 = vsel %vm1851, %v3816, 0.0
        %v3912 = vadd.f32 %v3910, %v3911
        %v3913 = vsel %vm1851, %v3819, 0.0
        %v3914 = vadd.f32 %v3912, %v3913
        %v3915 = vsel %vm1851, %v3821, 0.0
        %v3916 = vadd.f32 %v3914, %v3915
        %v3917 = vrot.slane %v3916, 4
        %v3918 = vadd.f32 %v3916, %v3917
        %v3919 = vrot.slane %v3918, 2
        %v3920 = vadd.f32 %v3918, %v3919
        %v3921 = vrot.slane %v3920, 1
        %v3922 = vadd.f32 %v3920, %v3921
        %v3923 = vmul.f32 %v2988, %v2988
        %v3924 = vmul.f32 %v2989, %v2989
        %v3925 = vmul.f32 %v2990, %v2990
        %v3926 = vmul.f32 %v2845, %v2845
        %v3927 = vmul.f32 %v2991, %v2991
        %v3928 = vmul.f32 %v2992, %v2992
        %v3929 = vmul.f32 %v2993, %v2993
        %v3930 = vmul.f32 %v2848, %v2848
        %v3931 = vmul.f32 %v2994, %v2994
        %v3932 = vmul.f32 %v2995, %v2995
        %v3933 = vmul.f32 %v2996, %v2996
        %v3934 = vmul.f32 %v2850, %v2850
        %v3935 = vmul.f32 %v2997, %v2997
        %v3936 = vmul.f32 %v2998, %v2998
        %v3937 = vmul.f32 %v2999, %v2999
        %v3938 = vmul.f32 %v2853, %v2853
        %v3939 = vmul.f32 %v3000, %v3000
        %v3940 = vmul.f32 %v3001, %v3001
        %v3941 = vmul.f32 %v3002, %v3002
        %v3942 = vmul.f32 %v2855, %v2855
        %v3943 = vmul.f32 %v3003, %v3003
        %v3944 = vmul.f32 %v3004, %v3004
        %v3945 = vmul.f32 %v3005, %v3005
        %v3946 = vmul.f32 %v2858, %v2858
        %v3947 = vmul.f32 %v3006, %v3006
        %v3948 = vmul.f32 %v3007, %v3007
        %v3949 = vmul.f32 %v3008, %v3008
        %v3950 = vmul.f32 %v2860, %v2860
        %v3951 = vmul.f32 %v3009, %v3009
        %v3952 = vmul.f32 %v3010, %v3010
        %v3953 = vmul.f32 %v3011, %v3011
        %v3954 = vmul.f32 %v2863, %v2863
        %v3955 = vmul.f32 %v3012, %v3012
        %v3956 = vmul.f32 %v3013, %v3013
        %v3957 = vmul.f32 %v3014, %v3014
        %v3958 = vmul.f32 %v2865, %v2865
        %v3959 = vmul.f32 %v3015, %v3015
        %v3960 = vmul.f32 %v3016, %v3016
        %v3961 = vmul.f32 %v3017, %v3017
        %v3962 = vmul.f32 %v2868, %v2868
        %v3963 = vmul.f32 %v3018, %v3018
        %v3964 = vmul.f32 %v3019, %v3019
        %v3965 = vmul.f32 %v3020, %v3020
        %v3966 = vmul.f32 %v2870, %v2870
        %v3967 = vmul.f32 %v3021, %v3021
        %v3968 = vmul.f32 %v3022, %v3022
        %v3969 = vmul.f32 %v3023, %v3023
        %v3970 = vmul.f32 %v2873, %v2873
        %v3971 = vmul.f32 %v3024, %v3024
        %v3972 = vmul.f32 %v3025, %v3025
        %v3973 = vmul.f32 %v3026, %v3026
        %v3974 = vmul.f32 %v2875, %v2875
        %v3975 = vmul.f32 %v3027, %v3027
        %v3976 = vmul.f32 %v3028, %v3028
        %v3977 = vmul.f32 %v3029, %v3029
        %v3978 = vmul.f32 %v2878, %v2878
        %v3979 = vmul.f32 %v3030, %v3030
        %v3980 = vmul.f32 %v3031, %v3031
        %v3981 = vmul.f32 %v3032, %v3032
        %v3982 = vmul.f32 %v2880, %v2880
        %v3983 = vmul.f32 %v3033, %v3033
        %v3984 = vmul.f32 %v3034, %v3034
        %v3985 = vmul.f32 %v3035, %v3035
        %v3986 = vmul.f32 %v2883, %v2883
        %v3987 = vmul.f32 %v3036, %v3036
        %v3988 = vmul.f32 %v3037, %v3037
        %v3989 = vmul.f32 %v3038, %v3038
        %v3990 = vmul.f32 %v2885, %v2885
        %v3991 = vmul.f32 %v3039, %v3039
        %v3992 = vmul.f32 %v3040, %v3040
        %v3993 = vmul.f32 %v3041, %v3041
        %v3994 = vmul.f32 %v2888, %v2888
        %v3995 = vmul.f32 %v3042, %v3042
        %v3996 = vmul.f32 %v3043, %v3043
        %v3997 = vmul.f32 %v3044, %v3044
        %v3998 = vmul.f32 %v2890, %v2890
        %v3999 = vmul.f32 %v3045, %v3045
        %v4000 = vmul.f32 %v3046, %v3046
        %v4001 = vmul.f32 %v3047, %v3047
        %v4002 = vmul.f32 %v2893, %v2893
        %v4003 = vmul.f32 %v3048, %v3048
        %v4004 = vmul.f32 %v3049, %v3049
        %v4005 = vmul.f32 %v3050, %v3050
        %v4006 = vmul.f32 %v2895, %v2895
        %v4007 = vmul.f32 %v3051, %v3051
        %v4008 = vmul.f32 %v3052, %v3052
        %v4009 = vmul.f32 %v3053, %v3053
        %v4010 = vmul.f32 %v2898, %v2898
        %v4011 = vmul.f32 %v3054, %v3054
        %v4012 = vmul.f32 %v3055, %v3055
        %v4013 = vmul.f32 %v3056, %v3056
        %v4014 = vmul.f32 %v2900, %v2900
        %v4015 = vmul.f32 %v3057, %v3057
        %v4016 = vmul.f32 %v3058, %v3058
        %v4017 = vmul.f32 %v3059, %v3059
        %v4018 = vmul.f32 %v2903, %v2903
        %v4019 = vmul.f32 %v3060, %v3060
        %v4020 = vmul.f32 %v3061, %v3061
        %v4021 = vmul.f32 %v3062, %v3062
        %v4022 = vmul.f32 %v2905, %v2905
        %v4023 = vmul.f32 %v3063, %v3063
        %v4024 = vmul.f32 %v3064, %v3064
        %v4025 = vmul.f32 %v3065, %v3065
        %v4026 = vmul.f32 %v2908, %v2908
        %v4027 = vmul.f32 %v3066, %v3066
        %v4028 = vmul.f32 %v3067, %v3067
        %v4029 = vmul.f32 %v3068, %v3068
        %v4030 = vmul.f32 %v2910, %v2910
        %v4031 = vmul.f32 %v3069, %v3069
        %v4032 = vmul.f32 %v3070, %v3070
        %v4033 = vmul.f32 %v3071, %v3071
        %v4034 = vmul.f32 %v2913, %v2913
        %v4035 = vmul.f32 %v3072, %v3072
        %v4036 = vmul.f32 %v3073, %v3073
        %v4037 = vmul.f32 %v3074, %v3074
        %v4038 = vmul.f32 %v2915, %v2915
        %v4039 = vmul.f32 %v3075, %v3075
        %v4040 = vmul.f32 %v3076, %v3076
        %v4041 = vmul.f32 %v3077, %v3077
        %v4042 = vmul.f32 %v2918, %v2918
        %v4043 = vmul.f32 %v3078, %v3078
        %v4044 = vmul.f32 %v3079, %v3079
        %v4045 = vmul.f32 %v3080, %v3080
        %v4046 = vmul.f32 %v2920, %v2920
        %v4047 = vmul.f32 %v3081, %v3081
        %v4048 = vmul.f32 %v3082, %v3082
        %v4049 = vmul.f32 %v3083, %v3083
        %v4050 = vmul.f32 %v2923, %v2923
        %v4051 = vmul.f32 %v3084, %v3084
        %v4052 = vmul.f32 %v3085, %v3085
        %v4053 = vmul.f32 %v3086, %v3086
        %v4054 = vmul.f32 %v2925, %v2925
        %v4055 = vmul.f32 %v3087, %v3087
        %v4056 = vmul.f32 %v3088, %v3088
        %v4057 = vmul.f32 %v3089, %v3089
        %v4058 = vmul.f32 %v2928, %v2928
        %v4059 = vmul.f32 %v3090, %v3090
        %v4060 = vmul.f32 %v3091, %v3091
        %v4061 = vmul.f32 %v3092, %v3092
        %v4062 = vmul.f32 %v2930, %v2930
        %v4063 = vmul.f32 %v3093, %v3093
        %v4064 = vmul.f32 %v3094, %v3094
        %v4065 = vmul.f32 %v3095, %v3095
        %v4066 = vmul.f32 %v2933, %v2933
        %4211 = vst [vmem:[#allocation1] ss:$4 sm:$0xff] %v3923
        %s4212 = scalar_lea.vmem [#allocation1], 1
        %4213 = vst [vmem:[%s4212] ss:$4 sm:$0xff] %v3924
        %s4214 = scalar_lea.vmem [#allocation1], 2
        %4215 = vst [vmem:[%s4214] ss:$4 sm:$0xff] %v3925
        %s4216 = scalar_lea.vmem [#allocation1], 3
        %4217 = vst [vmem:[%s4216] ss:$4 sm:$0xff] %v3926
        %s4218 = scalar_lea.vmem [#allocation1], 32
        %4219 = vst [vmem:[%s4218] ss:$4 sm:$0xff] %v3927
        %s4220 = scalar_lea.vmem [#allocation1], 33
        %4221 = vst [vmem:[%s4220] ss:$4 sm:$0xff] %v3928
        %s4222 = scalar_lea.vmem [#allocation1], 34
        %4223 = vst [vmem:[%s4222] ss:$4 sm:$0xff] %v3929
        %s4224 = scalar_lea.vmem [#allocation1], 35
        %4225 = vst [vmem:[%s4224] ss:$4 sm:$0xff] %v3930
        %v4226 = vld.sshfl [vmem:[#allocation1] sm:$0xff pattern:$0x73625140]
        %v4227 = vld.sshfl [vmem:[#allocation1 + $0x20] sm:$0xff pattern:$0x73625140]
        %4228 = vst [vmem:[#allocation1] ss:$4 sm:$0xff] %v3931
        %v4229 = vld.sshfl [vmem:[#allocation1] sm:$0xff pattern:$0x73625140]
        %4230 = vst [vmem:[%s4218] ss:$4 sm:$0xff] %v3932
        %4231 = vst [vmem:[%s4220] ss:$4 sm:$0xff] %v3933
        %4232 = vst [vmem:[%s4222] ss:$4 sm:$0xff] %v3934
        %4233 = vst [vmem:[%s4224] ss:$4 sm:$0xff] %v3935
        %v4234 = vld.sshfl [vmem:[#allocation1 + $0x20] sm:$0xff pattern:$0x73625140]
        %4235 = vst [vmem:[#allocation1] ss:$4 sm:$0xff] %v3936
        %4236 = vst [vmem:[%s4212] ss:$4 sm:$0xff] %v3937
        %4237 = vst [vmem:[%s4214] ss:$4 sm:$0xff] %v3938
        %4238 = vst [vmem:[%s4216] ss:$4 sm:$0xff] %v3939
        %4239 = vst [vmem:[%s4218] ss:$4 sm:$0xff] %v3940
        %v4240 = vld.sshfl [vmem:[#allocation1] sm:$0xff pattern:$0x73625140]
        %v4241 = vld.sshfl [vmem:[#allocation1 + $0x20] sm:$0xff pattern:$0x73625140]
        %4242 = vst [vmem:[#allocation1] ss:$4 sm:$0xff] %v3941
        %4243 = vst [vmem:[%s4212] ss:$4 sm:$0xff] %v3942
        %4244 = vst [vmem:[%s4214] ss:$4 sm:$0xff] %v3943
        %4245 = vst [vmem:[%s4216] ss:$4 sm:$0xff] %v3944
        %4246 = vst [vmem:[%s4218] ss:$4 sm:$0xff] %v3945
        %4247 = vst [vmem:[%s4220] ss:$4 sm:$0xff] %v3946
        %4248 = vst [vmem:[%s4222] ss:$4 sm:$0xff] %v3947
        %4249 = vst [vmem:[%s4224] ss:$4 sm:$0xff] %v3948
        %v4250 = vld.sshfl [vmem:[#allocation1] sm:$0xff pattern:$0x73625140]
        %v4251 = vld.sshfl [vmem:[#allocation1 + $0x20] sm:$0xff pattern:$0x73625140]
        %4252 = vst [vmem:[#allocation1] ss:$4 sm:$0xff] %v3949
        %v4253 = vld.sshfl [vmem:[#allocation1] sm:$0xff pattern:$0x73625140]
        %4254 = vst [vmem:[%s4218] ss:$4 sm:$0xff] %v3950
        %4255 = vst [vmem:[%s4220] ss:$4 sm:$0xff] %v3951
        %4256 = vst [vmem:[%s4222] ss:$4 sm:$0xff] %v3952
        %4257 = vst [vmem:[%s4224] ss:$4 sm:$0xff] %v3953
        %v4258 = vld.sshfl [vmem:[#allocation1 + $0x20] sm:$0xff pattern:$0x73625140]
        %4259 = vst [vmem:[#allocation1] ss:$4 sm:$0xff] %v3954
        %4260 = vst [vmem:[%s4212] ss:$4 sm:$0xff] %v3955
        %4261 = vst [vmem:[%s4214] ss:$4 sm:$0xff] %v3956
        %4262 = vst [vmem:[%s4216] ss:$4 sm:$0xff] %v3957
        %4263 = vst [vmem:[%s4218] ss:$4 sm:$0xff] %v3958
        %v4264 = vld.sshfl [vmem:[#allocation1] sm:$0xff pattern:$0x73625140]
        %v4265 = vld.sshfl [vmem:[#allocation1 + $0x20] sm:$0xff pattern:$0x73625140]
        %4266 = vst [vmem:[#allocation1] ss:$4 sm:$0xff] %v3959
        %4267 = vst [vmem:[%s4212] ss:$4 sm:$0xff] %v3960
        %4268 = vst [vmem:[%s4214] ss:$4 sm:$0xff] %v3961
        %4269 = vst [vmem:[%s4216] ss:$4 sm:$0xff] %v3962
        %4270 = vst [vmem:[%s4218] ss:$4 sm:$0xff] %v3963
        %4271 = vst [vmem:[%s4220] ss:$4 sm:$0xff] %v3964
        %4272 = vst [vmem:[%s4222] ss:$4 sm:$0xff] %v3965
        %4273 = vst [vmem:[%s4224] ss:$4 sm:$0xff] %v3966
        %v4274 = vld.sshfl [vmem:[#allocation1] sm:$0xff pattern:$0x73625140]
        %v4275 = vld.sshfl [vmem:[#allocation1 + $0x20] sm:$0xff pattern:$0x73625140]
        %4276 = vst [vmem:[#allocation1] ss:$4 sm:$0xff] %v3967
        %v4277 = vld.sshfl [vmem:[#allocation1] sm:$0xff pattern:$0x73625140]
        %4278 = vst [vmem:[%s4218] ss:$4 sm:$0xff] %v3968
        %4279 = vst [vmem:[%s4220] ss:$4 sm:$0xff] %v3969
        %4280 = vst [vmem:[%s4222] ss:$4 sm:$0xff] %v3970
        %4281 = vst [vmem:[%s4224] ss:$4 sm:$0xff] %v3971
        %v4282 = vld.sshfl [vmem:[#allocation1 + $0x20] sm:$0xff pattern:$0x73625140]
        %4283 = vst [vmem:[#allocation1] ss:$4 sm:$0xff] %v3972
        %4284 = vst [vmem:[%s4212] ss:$4 sm:$0xff] %v3973
        %4285 = vst [vmem:[%s4214] ss:$4 sm:$0xff] %v3974
        %4286 = vst [vmem:[%s4216] ss:$4 sm:$0xff] %v3975
        %4287 = vst [vmem:[%s4218] ss:$4 sm:$0xff] %v3976
        %v4288 = vld.sshfl [vmem:[#allocation1] sm:$0xff pattern:$0x73625140]
        %v4289 = vld.sshfl [vmem:[#allocation1 + $0x20] sm:$0xff pattern:$0x73625140]
        %4290 = vst [vmem:[#allocation1] ss:$4 sm:$0xff] %v3977
        %4291 = vst [vmem:[%s4212] ss:$4 sm:$0xff] %v3978
        %4292 = vst [vmem:[%s4214] ss:$4 sm:$0xff] %v3979
        %4293 = vst [vmem:[%s4216] ss:$4 sm:$0xff] %v3980
        %4294 = vst [vmem:[%s4218] ss:$4 sm:$0xff] %v3981
        %4295 = vst [vmem:[%s4220] ss:$4 sm:$0xff] %v3982
        %4296 = vst [vmem:[%s4222] ss:$4 sm:$0xff] %v3983
        %4297 = vst [vmem:[%s4224] ss:$4 sm:$0xff] %v3984
        %v4298 = vld.sshfl [vmem:[#allocation1] sm:$0xff pattern:$0x73625140]
        %v4299 = vld.sshfl [vmem:[#allocation1 + $0x20] sm:$0xff pattern:$0x73625140]
        %4300 = vst [vmem:[#allocation1] ss:$4 sm:$0xff] %v3985
        %v4301 = vld.sshfl [vmem:[#allocation1] sm:$0xff pattern:$0x73625140]
        %4302 = vst [vmem:[%s4218] ss:$4 sm:$0xff] %v3986
        %4303 = vst [vmem:[%s4220] ss:$4 sm:$0xff] %v3987
        %4304 = vst [vmem:[%s4222] ss:$4 sm:$0xff] %v3988
        %4305 = vst [vmem:[%s4224] ss:$4 sm:$0xff] %v3989
        %v4306 = vld.sshfl [vmem:[#allocation1 + $0x20] sm:$0xff pattern:$0x73625140]
        %4307 = vst [vmem:[#allocation1] ss:$4 sm:$0xff] %v3990
        %4308 = vst [vmem:[%s4212] ss:$4 sm:$0xff] %v3991
        %4309 = vst [vmem:[%s4214] ss:$4 sm:$0xff] %v3992
        %4310 = vst [vmem:[%s4216] ss:$4 sm:$0xff] %v3993
        %4311 = vst [vmem:[%s4218] ss:$4 sm:$0xff] %v3994
        %v4312 = vld.sshfl [vmem:[#allocation1] sm:$0xff pattern:$0x73625140]
        %v4313 = vld.sshfl [vmem:[#allocation1 + $0x20] sm:$0xff pattern:$0x73625140]
        %4314 = vst [vmem:[#allocation1] ss:$4 sm:$0xff] %v3995
        %4315 = vst [vmem:[%s4212] ss:$4 sm:$0xff] %v3996
        %4316 = vst [vmem:[%s4214] ss:$4 sm:$0xff] %v3997
        %4317 = vst [vmem:[%s4216] ss:$4 sm:$0xff] %v3998
        %4318 = vst [vmem:[%s4218] ss:$4 sm:$0xff] %v3999
        %4319 = vst [vmem:[%s4220] ss:$4 sm:$0xff] %v4000
        %4320 = vst [vmem:[%s4222] ss:$4 sm:$0xff] %v4001
        %4321 = vst [vmem:[%s4224] ss:$4 sm:$0xff] %v4002
        %v4322 = vld.sshfl [vmem:[#allocation1] sm:$0xff pattern:$0x73625140]
        %v4323 = vld.sshfl [vmem:[#allocation1 + $0x20] sm:$0xff pattern:$0x73625140]
        %4324 = vst [vmem:[#allocation1] ss:$4 sm:$0xff] %v4003
        %v4325 = vld.sshfl [vmem:[#allocation1] sm:$0xff pattern:$0x73625140]
        %4326 = vst [vmem:[%s4218] ss:$4 sm:$0xff] %v4004
        %4327 = vst [vmem:[%s4220] ss:$4 sm:$0xff] %v4005
        %4328 = vst [vmem:[%s4222] ss:$4 sm:$0xff] %v4006
        %4329 = vst [vmem:[%s4224] ss:$4 sm:$0xff] %v4007
        %v4330 = vld.sshfl [vmem:[#allocation1 + $0x20] sm:$0xff pattern:$0x73625140]
        %4331 = vst [vmem:[#allocation1] ss:$4 sm:$0xff] %v4008
        %4332 = vst [vmem:[%s4212] ss:$4 sm:$0xff] %v4009
        %4333 = vst [vmem:[%s4214] ss:$4 sm:$0xff] %v4010
        %4334 = vst [vmem:[%s4216] ss:$4 sm:$0xff] %v4011
        %4335 = vst [vmem:[%s4218] ss:$4 sm:$0xff] %v4012
        %v4336 = vld.sshfl [vmem:[#allocation1] sm:$0xff pattern:$0x73625140]
        %v4337 = vld.sshfl [vmem:[#allocation1 + $0x20] sm:$0xff pattern:$0x73625140]
        %4338 = vst [vmem:[#allocation1] ss:$4 sm:$0xff] %v4013
        %4339 = vst [vmem:[%s4212] ss:$4 sm:$0xff] %v4014
        %4340 = vst [vmem:[%s4214] ss:$4 sm:$0xff] %v4015
        %4341 = vst [vmem:[%s4216] ss:$4 sm:$0xff] %v4016
        %4342 = vst [vmem:[%s4218] ss:$4 sm:$0xff] %v4017
        %4343 = vst [vmem:[%s4220] ss:$4 sm:$0xff] %v4018
        %4344 = vst [vmem:[%s4222] ss:$4 sm:$0xff] %v4019
        %4345 = vst [vmem:[%s4224] ss:$4 sm:$0xff] %v4020
        %v4346 = vld.sshfl [vmem:[#allocation1] sm:$0xff pattern:$0x73625140]
        %v4347 = vld.sshfl [vmem:[#allocation1 + $0x20] sm:$0xff pattern:$0x73625140]
        %4348 = vst [vmem:[#allocation1] ss:$4 sm:$0xff] %v4021
        %v4349 = vld.sshfl [vmem:[#allocation1] sm:$0xff pattern:$0x73625140]
        %4350 = vst [vmem:[%s4218] ss:$4 sm:$0xff] %v4022
        %4351 = vst [vmem:[%s4220] ss:$4 sm:$0xff] %v4023
        %4352 = vst [vmem:[%s4222] ss:$4 sm:$0xff] %v4024
        %4353 = vst [vmem:[%s4224] ss:$4 sm:$0xff] %v4025
        %v4354 = vld.sshfl [vmem:[#allocation1 + $0x20] sm:$0xff pattern:$0x73625140]
        %4355 = vst [vmem:[#allocation1] ss:$4 sm:$0xff] %v4026
        %4356 = vst [vmem:[%s4212] ss:$4 sm:$0xff] %v4027
        %4357 = vst [vmem:[%s4214] ss:$4 sm:$0xff] %v4028
        %4358 = vst [vmem:[%s4216] ss:$4 sm:$0xff] %v4029
        %4359 = vst [vmem:[%s4218] ss:$4 sm:$0xff] %v4030
        %v4360 = vld.sshfl [vmem:[#allocation1] sm:$0xff pattern:$0x73625140]
        %v4361 = vld.sshfl [vmem:[#allocation1 + $0x20] sm:$0xff pattern:$0x73625140]
        %4362 = vst [vmem:[#allocation1] ss:$4 sm:$0xff] %v4031
        %4363 = vst [vmem:[%s4212] ss:$4 sm:$0xff] %v4032
        %4364 = vst [vmem:[%s4214] ss:$4 sm:$0xff] %v4033
        %4365 = vst [vmem:[%s4216] ss:$4 sm:$0xff] %v4034
        %4366 = vst [vmem:[%s4218] ss:$4 sm:$0xff] %v4035
        %4367 = vst [vmem:[%s4220] ss:$4 sm:$0xff] %v4036
        %4368 = vst [vmem:[%s4222] ss:$4 sm:$0xff] %v4037
        %4369 = vst [vmem:[%s4224] ss:$4 sm:$0xff] %v4038
        %v4370 = vld.sshfl [vmem:[#allocation1] sm:$0xff pattern:$0x73625140]
        %v4371 = vld.sshfl [vmem:[#allocation1 + $0x20] sm:$0xff pattern:$0x73625140]
        %4372 = vst [vmem:[#allocation1] ss:$4 sm:$0xff] %v4039
        %v4373 = vld.sshfl [vmem:[#allocation1] sm:$0xff pattern:$0x73625140]
        %4374 = vst [vmem:[%s4218] ss:$4 sm:$0xff] %v4040
        %4375 = vst [vmem:[%s4220] ss:$4 sm:$0xff] %v4041
        %4376 = vst [vmem:[%s4222] ss:$4 sm:$0xff] %v4042
        %4377 = vst [vmem:[%s4224] ss:$4 sm:$0xff] %v4043
        %v4378 = vld.sshfl [vmem:[#allocation1 + $0x20] sm:$0xff pattern:$0x73625140]
        %4379 = vst [vmem:[#allocation1] ss:$4 sm:$0xff] %v4044
        %4380 = vst [vmem:[%s4212] ss:$4 sm:$0xff] %v4045
        %4381 = vst [vmem:[%s4214] ss:$4 sm:$0xff] %v4046
        %4382 = vst [vmem:[%s4216] ss:$4 sm:$0xff] %v4047
        %4383 = vst [vmem:[%s4218] ss:$4 sm:$0xff] %v4048
        %v4384 = vld.sshfl [vmem:[#allocation1] sm:$0xff pattern:$0x73625140]
        %v4385 = vld.sshfl [vmem:[#allocation1 + $0x20] sm:$0xff pattern:$0x73625140]
        %4386 = vst [vmem:[#allocation1] ss:$4 sm:$0xff] %v4049
        %4387 = vst [vmem:[%s4212] ss:$4 sm:$0xff] %v4050
        %4388 = vst [vmem:[%s4214] ss:$4 sm:$0xff] %v4051
        %4389 = vst [vmem:[%s4216] ss:$4 sm:$0xff] %v4052
        %4390 = vst [vmem:[%s4218] ss:$4 sm:$0xff] %v4053
        %4391 = vst [vmem:[%s4220] ss:$4 sm:$0xff] %v4054
        %4392 = vst [vmem:[%s4222] ss:$4 sm:$0xff] %v4055
        %4393 = vst [vmem:[%s4224] ss:$4 sm:$0xff] %v4056
        %v4394 = vld.sshfl [vmem:[#allocation1] sm:$0xff pattern:$0x73625140]
        %v4395 = vld.sshfl [vmem:[#allocation1 + $0x20] sm:$0xff pattern:$0x73625140]
        %4396 = vst [vmem:[#allocation1] ss:$4 sm:$0xff] %v4057
        %v4397 = vld.sshfl [vmem:[#allocation1] sm:$0xff pattern:$0x73625140]
        %4398 = vst [vmem:[%s4218] ss:$4 sm:$0xff] %v4058
        %4399 = vst [vmem:[%s4220] ss:$4 sm:$0xff] %v4059
        %4400 = vst [vmem:[%s4222] ss:$4 sm:$0xff] %v4060
        %4401 = vst [vmem:[%s4224] ss:$4 sm:$0xff] %v4061
        %v4402 = vld.sshfl [vmem:[#allocation1 + $0x20] sm:$0xff pattern:$0x73625140]
        %4403 = vst [vmem:[#allocation1] ss:$4 sm:$0xff] %v4062
        %4404 = vst [vmem:[%s4212] ss:$4 sm:$0xff] %v4063
        %4405 = vst [vmem:[%s4214] ss:$4 sm:$0xff] %v4064
        %4406 = vst [vmem:[%s4216] ss:$4 sm:$0xff] %v4065
        %4407 = vst [vmem:[%s4218] ss:$4 sm:$0xff] %v4066
        %v4408 = vld.sshfl [vmem:[#allocation1] sm:$0xff pattern:$0x73625140]
        %v4409 = vld.sshfl [vmem:[#allocation1 + $0x20] sm:$0xff pattern:$0x73625140]
        %v4410 = vrot.slane %v4226, 1
        %v4411 = vrot.slane %v4227, 1
        %v4412 = vsel %vm347, %v4410, %v4411
        %v4413 = vrot.slane %v4229, 1
        %v4414 = vsel %vm347, %v4411, %v4413
        %v4415 = vrot.slane %v4234, 1
        %v4416 = vrot.slane %v4240, 1
        %v4417 = vsel %vm347, %v4415, %v4416
        %v4418 = vrot.slane %v4241, 1
        %v4419 = vsel %vm347, %v4416, %v4418
        %v4420 = vrot.slane %v4250, 1
        %v4421 = vrot.slane %v4251, 1
        %v4422 = vsel %vm347, %v4420, %v4421
        %v4423 = vrot.slane %v4253, 1
        %v4424 = vsel %vm347, %v4421, %v4423
        %v4425 = vrot.slane %v4258, 1
        %v4426 = vrot.slane %v4264, 1
        %v4427 = vsel %vm347, %v4425, %v4426
        %v4428 = vrot.slane %v4265, 1
        %v4429 = vsel %vm347, %v4426, %v4428
        %v4430 = vrot.slane %v4274, 1
        %v4431 = vrot.slane %v4275, 1
        %v4432 = vsel %vm347, %v4430, %v4431
        %v4433 = vrot.slane %v4277, 1
        %v4434 = vsel %vm347, %v4431, %v4433
        %v4435 = vrot.slane %v4282, 1
        %v4436 = vrot.slane %v4288, 1
        %v4437 = vsel %vm347, %v4435, %v4436
        %v4438 = vrot.slane %v4289, 1
        %v4439 = vsel %vm347, %v4436, %v4438
        %v4440 = vrot.slane %v4298, 1
        %v4441 = vrot.slane %v4299, 1
        %v4442 = vsel %vm347, %v4440, %v4441
        %v4443 = vrot.slane %v4301, 1
        %v4444 = vsel %vm347, %v4441, %v4443
        %v4445 = vrot.slane %v4306, 1
        %v4446 = vrot.slane %v4312, 1
        %v4447 = vsel %vm347, %v4445, %v4446
        %v4448 = vrot.slane %v4313, 1
        %v4449 = vsel %vm347, %v4446, %v4448
        %v4450 = vrot.slane %v4322, 1
        %v4451 = vrot.slane %v4323, 1
        %v4452 = vsel %vm347, %v4450, %v4451
        %v4453 = vrot.slane %v4325, 1
        %v4454 = vsel %vm347, %v4451, %v4453
        %v4455 = vrot.slane %v4330, 1
        %v4456 = vrot.slane %v4336, 1
        %v4457 = vsel %vm347, %v4455, %v4456
        %v4458 = vrot.slane %v4337, 1
        %v4459 = vsel %vm347, %v4456, %v4458
        %v4460 = vrot.slane %v4346, 1
        %v4461 = vrot.slane %v4347, 1
        %v4462 = vsel %vm347, %v4460, %v4461
        %v4463 = vrot.slane %v4349, 1
        %v4464 = vsel %vm347, %v4461, %v4463
        %v4465 = vrot.slane %v4354, 1
        %v4466 = vrot.slane %v4360, 1
        %v4467 = vsel %vm347, %v4465, %v4466
        %v4468 = vrot.slane %v4361, 1
        %v4469 = vsel %vm347, %v4466, %v4468
        %v4470 = vrot.slane %v4370, 1
        %v4471 = vrot.slane %v4371, 1
        %v4472 = vsel %vm347, %v4470, %v4471
        %v4473 = vrot.slane %v4373, 1
        %v4474 = vsel %vm347, %v4471, %v4473
        %v4475 = vrot.slane %v4378, 1
        %v4476 = vrot.slane %v4384, 1
        %v4477 = vsel %vm347, %v4475, %v4476
        %v4478 = vrot.slane %v4385, 1
        %v4479 = vsel %vm347, %v4476, %v4478
        %v4480 = vrot.slane %v4394, 1
        %v4481 = vrot.slane %v4395, 1
        %v4482 = vsel %vm347, %v4480, %v4481
        %v4483 = vrot.slane %v4397, 1
        %v4484 = vsel %vm347, %v4481, %v4483
        %v4485 = vrot.slane %v4402, 1
        %v4486 = vrot.slane %v4408, 1
        %v4487 = vsel %vm347, %v4485, %v4486
        %v4488 = vrot.slane %v4409, 1
        %v4489 = vsel %vm347, %v4486, %v4488
        %v4522 = vsel %vm1851, %v4412, 0.0
        %v4523 = vsel %vm1851, %v4414, 0.0
        %v4524 = vadd.f32 %v4522, %v4523
        %v4525 = vsel %vm1851, %v4417, 0.0
        %v4526 = vadd.f32 %v4524, %v4525
        %v4527 = vsel %vm1851, %v4419, 0.0
        %v4528 = vadd.f32 %v4526, %v4527
        %v4529 = vsel %vm1851, %v4422, 0.0
        %v4530 = vadd.f32 %v4528, %v4529
        %v4531 = vsel %vm1851, %v4424, 0.0
        %v4532 = vadd.f32 %v4530, %v4531
        %v4533 = vsel %vm1851, %v4427, 0.0
        %v4534 = vadd.f32 %v4532, %v4533
        %v4535 = vsel %vm1851, %v4429, 0.0
        %v4536 = vadd.f32 %v4534, %v4535
        %v4537 = vsel %vm1851, %v4432, 0.0
        %v4538 = vadd.f32 %v4536, %v4537
        %v4539 = vsel %vm1851, %v4434, 0.0
        %v4540 = vadd.f32 %v4538, %v4539
        %v4541 = vsel %vm1851, %v4437, 0.0
        %v4542 = vadd.f32 %v4540, %v4541
        %v4543 = vsel %vm1851, %v4439, 0.0
        %v4544 = vadd.f32 %v4542, %v4543
        %v4545 = vsel %vm1851, %v4442, 0.0
        %v4546 = vadd.f32 %v4544, %v4545
        %v4547 = vsel %vm1851, %v4444, 0.0
        %v4548 = vadd.f32 %v4546, %v4547
        %v4549 = vsel %vm1851, %v4447, 0.0
        %v4550 = vadd.f32 %v4548, %v4549
        %v4551 = vsel %vm1851, %v4449, 0.0
        %v4552 = vadd.f32 %v4550, %v4551
        %v4553 = vsel %vm1851, %v4452, 0.0
        %v4554 = vadd.f32 %v4552, %v4553
        %v4555 = vsel %vm1851, %v4454, 0.0
        %v4556 = vadd.f32 %v4554, %v4555
        %v4557 = vsel %vm1851, %v4457, 0.0
        %v4558 = vadd.f32 %v4556, %v4557
        %v4559 = vsel %vm1851, %v4459, 0.0
        %v4560 = vadd.f32 %v4558, %v4559
        %v4561 = vsel %vm1851, %v4462, 0.0
        %v4562 = vadd.f32 %v4560, %v4561
        %v4563 = vsel %vm1851, %v4464, 0.0
        %v4564 = vadd.f32 %v4562, %v4563
        %v4565 = vsel %vm1851, %v4467, 0.0
        %v4566 = vadd.f32 %v4564, %v4565
        %v4567 = vsel %vm1851, %v4469, 0.0
        %v4568 = vadd.f32 %v4566, %v4567
        %v4569 = vsel %vm1851, %v4472, 0.0
        %v4570 = vadd.f32 %v4568, %v4569
        %v4571 = vsel %vm1851, %v4474, 0.0
        %v4572 = vadd.f32 %v4570, %v4571
        %v4573 = vsel %vm1851, %v4477, 0.0
        %v4574 = vadd.f32 %v4572, %v4573
        %v4575 = vsel %vm1851, %v4479, 0.0
        %v4576 = vadd.f32 %v4574, %v4575
        %v4577 = vsel %vm1851, %v4482, 0.0
        %v4578 = vadd.f32 %v4576, %v4577
        %v4579 = vsel %vm1851, %v4484, 0.0
        %v4580 = vadd.f32 %v4578, %v4579
        %v4581 = vsel %vm1851, %v4487, 0.0
        %v4582 = vadd.f32 %v4580, %v4581
        %v4583 = vsel %vm1851, %v4489, 0.0
        %v4584 = vadd.f32 %v4582, %v4583
        %v4585 = vrot.slane %v4584, 4
        %v4586 = vadd.f32 %v4584, %v4585
        %v4587 = vrot.slane %v4586, 2
        %v4588 = vadd.f32 %v4586, %v4587
        %v4589 = vrot.slane %v4588, 1
        %v4590 = vadd.f32 %v4588, %v4589
        %vm4591 = vcmask 57344
        %4592 = vst.msk [vmem:[%s200] sm:$0x1] %vm4591, %v3922
        %4593 = vst.msk [vmem:[%s206] sm:$0x1] %vm4591, %v4590
        %p4594 = scmp.lt.s32.totalorder %s22, 1
        %s4595 = scalar_select %p4594, %s22, 1
        %s4596 = smul.addr %s4595, 54
        %s4597 = smul.addr %s4596, 8
        %s4598 = scalar_lea.vmem %s2, %s4597
        %s4599 = sand.u32 %s103, 1
        %s4600 = scalar_lea.sflag [#allocation3], %s4599
        %s4601 = sand.u32 %s103, 1
        %s4602 = scalar_lea.vmem [#allocation2], %s4601
        %s4603 = sand.u32 %s129, 1
        %s4604 = scalar_lea.sflag [#allocation5], %s4603
        %s4605 = sand.u32 %s129, 1
        %s4606 = scalar_lea.vmem [#allocation4], %s4605
        // Predicated region
        $region29: #{tpu_custom_call.1} parent=27 // pred_check
          %p4607 = pneg %p87
        $region30: #{tpu_custom_call.1} parent=27 // pred_check_branch
          %4609 = sbr.rel (%p4607) target = $region32
        $region31: #{tpu_custom_call.1} parent=27 // pred_region
          _
        $region32: #{tpu_custom_call.1} parent=27 // pred_fallthru
          _
        // Predicated region
        $region33: #{tpu_custom_call.1} parent=27 // pred_check
          %p4610 = pneg %p113
        $region34: #{tpu_custom_call.1} parent=27 // pred_check_branch
          %4612 = sbr.rel (%p4610) target = $region36
        $region35: #{tpu_custom_call.1} parent=27 // pred_region
          %4614 = vsyncadd %s4600, 0
          %s4615 = scalar_lea.hbm %s3, %s22
          %s4617 = sshll.u32 %s4602, 4
          %s4618 = int_to_ptr.vmem [resolvable:$true] %s4617
          %s4619 = sshll.u32 %s4615, 4
          %s4620 = int_to_ptr.hbm [resolvable:$true] %s4619
          %4622 = dma.vmem_to_hbm [thread:$0]  %s4618, 16, %s4620, %s4600
        $region36: #{tpu_custom_call.1} parent=27 // pred_fallthru
          _
        // Predicated region
        $region37: #{tpu_custom_call.1} parent=27 // pred_check
          %p4623 = pneg %p139
        $region38: #{tpu_custom_call.1} parent=27 // pred_check_branch
          %4625 = sbr.rel (%p4623) target = $region40
        $region39: #{tpu_custom_call.1} parent=27 // pred_region
          %4627 = vsyncadd %s4604, 0
          %s4628 = scalar_lea.hbm %s4, %s22
          %s4630 = sshll.u32 %s4606, 4
          %s4631 = int_to_ptr.vmem [resolvable:$true] %s4630
          %s4632 = sshll.u32 %s4628, 4
          %s4633 = int_to_ptr.hbm [resolvable:$true] %s4632
          %4635 = dma.vmem_to_hbm [thread:$0]  %s4631, 16, %s4633, %s4604
        $region40: #{tpu_custom_call.1} parent=27 // pred_fallthru
          _
      $region28: #{tpu_custom_call.1} parent=5 // pred_fallthru
        _
      %p4636 = scmp.le.s32.totalorder 2, %s17
      // Predicated region
      $region41: #{tpu_custom_call.1} parent=5 // pred_check
        %p4637 = pneg %p4636
      $region42: #{tpu_custom_call.1} parent=5 // pred_check_branch
        %4639 = sbr.rel (%p4637) target = $region44
      $region43: #{tpu_custom_call.1} parent=5 // pred_region
        %s4640 = ssub.s32 %s17, 2
        // Predicated region
        $region45: #{tpu_custom_call.1} parent=43 // pred_check
          %p4641 = pneg %p93
        $region46: #{tpu_custom_call.1} parent=43 // pred_check_branch
          %4643 = sbr.rel (%p4641) target = $region48
        $region47: #{tpu_custom_call.1} parent=43 // pred_region
          %p4644 = scmp.lt.s32.totalorder %s23, 1
          %s4645 = scalar_select %p4644, %s23, 1
          %s4646 = smul.addr %s4645, 54
          %s4647 = smul.addr %s4646, 8
          %s4648 = scalar_lea.vmem %s2, %s4647
        $region48: #{tpu_custom_call.1} parent=43 // pred_fallthru
          _
        // Predicated region
        $region49: #{tpu_custom_call.1} parent=43 // pred_check
          %p4649 = pneg %p119
        $region50: #{tpu_custom_call.1} parent=43 // pred_check_branch
          %4651 = sbr.rel (%p4649) target = $region52
        $region51: #{tpu_custom_call.1} parent=43 // pred_region
          %s4652 = sand.u32 %s104, 1
          %s4653 = scalar_lea.sflag [#allocation3], %s4652
          %s4654 = sand.u32 %s104, 1
          %s4655 = scalar_lea.vmem [#allocation2], %s4654
          %4657 = dma.done %s4653, 16
        $region52: #{tpu_custom_call.1} parent=43 // pred_fallthru
          _
        // Predicated region
        $region53: #{tpu_custom_call.1} parent=43 // pred_check
          %p4658 = pneg %p145
        $region54: #{tpu_custom_call.1} parent=43 // pred_check_branch
          %4660 = sbr.rel (%p4658) target = $region56
        $region55: #{tpu_custom_call.1} parent=43 // pred_region
          %s4661 = sand.u32 %s130, 1
          %s4662 = scalar_lea.sflag [#allocation5], %s4661
          %s4663 = sand.u32 %s130, 1
          %s4664 = scalar_lea.vmem [#allocation4], %s4663
          %4666 = dma.done %s4662, 16
        $region56: #{tpu_custom_call.1} parent=43 // pred_fallthru
          _
      $region44: #{tpu_custom_call.1} parent=5 // pred_fallthru
        _
    $region6: #{tpu_custom_call.1} parent=1 // loop_footer
      %s21 = sadd.s32 1, %s17
    $region7: #{tpu_custom_call.1} parent=1 // loop_footer_branch
      %16 = sbr.rel target = $region3
    $region8: #{tpu_custom_call.1} parent=1 // loop_exit
      _
    %4667 = vsyncpa [#allocation3], 1
    %s4668 = scalar_lea.sflag [#allocation3], 1
    %4669 = vsyncpa %s4668, 1
    %4670 = vsyncpa [#allocation5], 1
    %s4671 = scalar_lea.sflag [#allocation5], 1
    %4672 = vsyncpa %s4671, 1

</llo_original>
